<compile_context>
chip_gen: v6e
topology: v6e:2x2x1
jax: 0.10.0
libtpu: 0.0.40
codegen_flags: <defaults>
</compile_context>

<pallas_src>
import jax
import jax.numpy as jnp
import numpy as np
from jax import lax
from jax.experimental import pallas as pl
from jax.experimental.pallas import tpu as pltpu


def _round_up(x, m):
    return ((x + m - 1) // m) * m


# ------------------------------ fused kernel ---------------------------------

def _make_reglstm_kernel(num_layers, seq_len, b_pad, h_pad):
    """Kernel ref order:
        x2d,
        [w_ih_t, w_hh_t, bias] * num_layers,
        w1_t, b1, w2_t, b2,
        out,
        act_sc  (N, h_pad)     scratch: current layer's hidden-state sequence
        gate_sc (N, 4*h_pad)   scratch: hoisted input projection X @ W_ih^T + b
    """
    unroll = True if seq_len <= 64 else 8

    def kernel(*refs):
        x_ref = refs[0]
        layer_refs = refs[1:1 + 3 * num_layers]
        w1_ref, b1_ref, w2_ref, b2_ref = refs[1 + 3 * num_layers:
                                              5 + 3 * num_layers]
        out_ref = refs[5 + 3 * num_layers]
        act_sc = refs[6 + 3 * num_layers]
        gate_sc = refs[7 + 3 * num_layers]

        cur = x_ref[...]                                    # (N, in_pad)
        for layer in range(num_layers):
            wih_ref = layer_refs[3 * layer + 0]             # (in_pad, 4*h_pad)
            whh_ref = layer_refs[3 * layer + 1]             # (h_pad, 4*h_pad)
            b_ref = layer_refs[3 * layer + 2]               # (1, 4*h_pad)

            # Hoisted input projection: one big MXU matmul over the whole
            # sequence instead of seq_len tiny per-step matmuls; bias broadcast
            # is hoisted out of the recurrence as well.
            gate_sc[...] = (
                jnp.dot(cur, wih_ref[...], preferred_element_type=jnp.float32)
                + b_ref[...])

            whh = whh_ref[...]                              # loop-invariant

            def step(t, carry, _whh=whh):
                h, c = carry
                row = pl.multiple_of(t * b_pad, b_pad)
                gates = (gate_sc[pl.ds(row, b_pad), :]
                         + jnp.dot(h, _whh,
                                   preferred_element_type=jnp.float32))
                # PyTorch gate order [i, f, g, o]; h_pad is a multiple of 128
                # so every slice is a lane-aligned vreg view.
                i_g = jax.nn.sigmoid(gates[:, 0 * h_pad:1 * h_pad])
                f_g = jax.nn.sigmoid(gates[:, 1 * h_pad:2 * h_pad])
                g_g = jnp.tanh(gates[:, 2 * h_pad:3 * h_pad])
                o_g = jax.nn.sigmoid(gates[:, 3 * h_pad:4 * h_pad])
                c_new = f_g * c + i_g * g_g
                h_new = o_g * jnp.tanh(c_new)
                act_sc[pl.ds(row, b_pad), :] = h_new
                return (h_new, c_new)

            init = (jnp.zeros((b_pad, h_pad), jnp.float32),
                    jnp.zeros((b_pad, h_pad), jnp.float32))
            lax.fori_loop(0, seq_len, step, init, unroll=unroll)
            cur = act_sc[...]                               # next layer input

        # Fused regression head: Linear -> Tanh -> Linear on the whole
        # flattened (seq*batch_pad, h_pad) slab, no intermediate HBM trip.
        hmid = jnp.tanh(
            jnp.dot(cur, w1_ref[...], preferred_element_type=jnp.float32)
            + b1_ref[...])
        out_ref[...] = (
            jnp.dot(hmid, w2_ref[...], preferred_element_type=jnp.float32)
            + b2_ref[...]).astype(out_ref.dtype)

    return kernel


# ------------------------- parameter preparation ------------------------------

def prepare_padded_params(params, inp_dim, mid_dim, out_dim):
    """Pre-transpose + zero-pad weights (per-gate padding of the 4H axis)."""
    h_pad = _round_up(mid_dim, 128)
    i_pad = _round_up(inp_dim, 128)
    o_pad = _round_up(out_dim, 128)

    padded_lstm = []
    for idx, (w_ih, w_hh, b) in enumerate(params["lstm"]):
        in_dim = inp_dim if idx == 0 else mid_dim
        in_pad = i_pad if idx == 0 else h_pad
        H = mid_dim
        # (4H, in) -> (4, H, in) -> pad -> (4*h_pad, in_pad) -> transpose
        w_ih4 = jnp.pad(w_ih.reshape(4, H, in_dim),
                        ((0, 0), (0, h_pad - H), (0, in_pad - in_dim)))
        wih_t = w_ih4.reshape(4 * h_pad, in_pad).T          # (in_pad, 4*h_pad)
        w_hh4 = jnp.pad(w_hh.reshape(4, H, H),
                        ((0, 0), (0, h_pad - H), (0, h_pad - H)))
        whh_t = w_hh4.reshape(4 * h_pad, h_pad).T           # (h_pad, 4*h_pad)
        b4 = jnp.pad(b.reshape(4, H), ((0, 0), (0, h_pad - H)))
        b_p = b4.reshape(1, 4 * h_pad)
        padded_lstm.append((wih_t, whh_t, b_p))

    w1_t = jnp.pad(params["w1"],
                   ((0, h_pad - mid_dim), (0, h_pad - mid_dim))).T
    b1_p = jnp.pad(params["b1"], ((0, 0), (0, h_pad - mid_dim)))
    w2_t = jnp.pad(params["w2"],
                   ((0, o_pad - out_dim), (0, h_pad - mid_dim))).T
    b2_p = jnp.pad(params["b2"], ((0, 0), (0, o_pad - out_dim)))

    return {"lstm": padded_lstm, "w1t": w1_t, "b1": b1_p, "w2t": w2_t,
            "b2": b2_p, "i_pad": i_pad, "h_pad": h_pad, "o_pad": o_pad,
            "out_dim": out_dim}


# ------------------------------- full forward ---------------------------------

def reg_lstm_forward(x, padded):
    seq_len, batch, inp_dim = x.shape
    out_dim = padded["out_dim"]
    i_pad, h_pad, o_pad = padded["i_pad"], padded["h_pad"], padded["o_pad"]
    num_layers = len(padded["lstm"])
    b_pad = _round_up(batch, 8)
    n_rows = seq_len * b_pad

    # Pad batch to 8 sublanes and features to 128 lanes; flatten (t, b) rows.
    x_p = jnp.pad(x, ((0, 0), (0, b_pad - batch), (0, i_pad - inp_dim)))
    x2d = x_p.reshape(n_rows, i_pad)

    kernel = _make_reglstm_kernel(num_layers, seq_len, b_pad, h_pad)

    in_specs = [pl.BlockSpec((n_rows, i_pad), lambda i: (0, 0))]
    args = [x2d]
    for (wih_t, whh_t, b_p) in padded["lstm"]:
        in_specs += [pl.BlockSpec(wih_t.shape, lambda i: (0, 0)),
                     pl.BlockSpec(whh_t.shape, lambda i: (0, 0)),
                     pl.BlockSpec(b_p.shape, lambda i: (0, 0))]
        args += [wih_t, whh_t, b_p]
    for name in ("w1t", "b1", "w2t", "b2"):
        arr = padded[name]
        in_specs.append(pl.BlockSpec(arr.shape, lambda i: (0, 0)))
        args.append(arr)

    out_p = pl.pallas_call(
        kernel,
        out_shape=jax.ShapeDtypeStruct((n_rows, o_pad), x.dtype),
        grid_spec=pltpu.PrefetchScalarGridSpec(
            num_scalar_prefetch=0,
            grid=(1,),
            in_specs=in_specs,
            out_specs=pl.BlockSpec((n_rows, o_pad), lambda i: (0, 0)),
            scratch_shapes=[
                pltpu.VMEM((n_rows, h_pad), jnp.float32),       # layer hiddens
                pltpu.VMEM((n_rows, 4 * h_pad), jnp.float32),   # input proj
            ],
        ),
        compiler_params=pltpu.CompilerParams(
            dimension_semantics=("arbitrary",)),
    )(*args)

    out = out_p.reshape(seq_len, b_pad, o_pad)
    return out[:, :batch, :out_dim]


# ------------------------- pure-JAX reference ---------------------------------

def reg_lstm_reference(x, params):
    y = x
    for (w_ih, w_hh, b) in params["lstm"]:
        seq_len, batch, _ = y.shape
        H = w_hh.shape[1]
        h = jnp.zeros((batch, H), jnp.float32)
        c = jnp.zeros((batch, H), jnp.float32)
        outs = []
        for t in range(seq_len):
            gates = y[t] @ w_ih.T + h @ w_hh.T + b
            i_g = jax.nn.sigmoid(gates[:, 0 * H:1 * H])
            f_g = jax.nn.sigmoid(gates[:, 1 * H:2 * H])
            g_g = jnp.tanh(gates[:, 2 * H:3 * H])
            o_g = jax.nn.sigmoid(gates[:, 3 * H:4 * H])
            c = f_g * c + i_g * g_g
            h = o_g * jnp.tanh(c)
            outs.append(h)
        y = jnp.stack(outs, axis=0)
    seq_len, batch, H = y.shape
    y2d = y.reshape(-1, H)
    h1 = jnp.tanh(y2d @ params["w1"].T + params["b1"])
    o = h1 @ params["w2"].T + params["b2"]
    return o.reshape(seq_len, batch, -1)


def init_params(key, inp_dim, out_dim, mid_dim, mid_layers):
    """PyTorch-style uniform(-1/sqrt(mid_dim), 1/sqrt(mid_dim)) init."""
    stdv = 1.0 / np.sqrt(mid_dim)
    keys = jax.random.split(key, 4 * mid_layers + 4)
    ki = iter(range(len(keys)))

    def u(shape):
        return jax.random.uniform(keys[next(ki)], shape, jnp.float32,
                                  minval=-stdv, maxval=stdv)

    lstm = []
    for layer in range(mid_layers):
        in_dim = inp_dim if layer == 0 else mid_dim
        w_ih = u((4 * mid_dim, in_dim))
        w_hh = u((4 * mid_dim, mid_dim))
        b_ih = u((4 * mid_dim,))
        b_hh = u((4 * mid_dim,))
        lstm.append((w_ih, w_hh, (b_ih + b_hh).reshape(1, -1)))

    w1 = u((mid_dim, mid_dim))
    b1 = u((mid_dim,)).reshape(1, -1)
    w2 = u((out_dim, mid_dim))
    b2 = u((out_dim,)).reshape(1, -1)
    return {"lstm": lstm, "w1": w1, "b1": b1, "w2": w2, "b2": b2}


if __name__ == "__main__":
    inp_dim, out_dim, mid_dim, mid_layers = 8, 4, 32, 2
    seq_len, batch = 8, 2

    key = jax.random.PRNGKey(0)
    k_x, k_p = jax.random.split(key)
    x = jax.random.normal(k_x, (seq_len, batch, inp_dim), jnp.float32)
    params = init_params(k_p, inp_dim, out_dim, mid_dim, mid_layers)
    padded = prepare_padded_params(params, inp_dim, mid_dim, out_dim)

    out = reg_lstm_forward(x, padded)
    out = jax.block_until_ready(out)

    ref = reg_lstm_reference(x, params)
    assert out.shape == (seq_len, batch, out_dim)
    np.testing.assert_allclose(np.asarray(out), np.asarray(ref),
                               rtol=1e-4, atol=1e-4)
    print("KERNEL_OK")
</pallas_src>

<mosaic_0001>
module attributes {stable_mosaic.version = 11 : i64} {
  func.func @kernel(%arg0: i32, %arg1: memref<64x128xf32, #tpu.memory_space<vmem>>, %arg2: memref<128x512xf32, #tpu.memory_space<vmem>>, %arg3: memref<128x512xf32, #tpu.memory_space<vmem>>, %arg4: memref<1x512xf32, #tpu.memory_space<vmem>>, %arg5: memref<128x512xf32, #tpu.memory_space<vmem>>, %arg6: memref<128x512xf32, #tpu.memory_space<vmem>>, %arg7: memref<1x512xf32, #tpu.memory_space<vmem>>, %arg8: memref<128x128xf32, #tpu.memory_space<vmem>>, %arg9: memref<1x128xf32, #tpu.memory_space<vmem>>, %arg10: memref<128x128xf32, #tpu.memory_space<vmem>>, %arg11: memref<1x128xf32, #tpu.memory_space<vmem>>, %arg12: memref<64x128xf32, #tpu.memory_space<vmem>>, %arg13: memref<64x128xf32, #tpu.memory_space<vmem>>, %arg14: memref<64x512xf32, #tpu.memory_space<vmem>>) attributes {dimension_semantics = [#tpu.dimension_semantics<arbitrary>], iteration_bounds = array<i64: 1>, scalar_prefetch = 0 : i64, scratch_operands = 2 : i64, tpu.core_type = #tpu.core_type<tc>, window_params = [{pipeline_mode = #tpu.pipeline_mode<synchronous>, transform_indices = @transform_0, window_bounds = array<i64: 64, 128>}, {pipeline_mode = #tpu.pipeline_mode<synchronous>, transform_indices = @transform_1, window_bounds = array<i64: 128, 512>}, {pipeline_mode = #tpu.pipeline_mode<synchronous>, transform_indices = @transform_2, window_bounds = array<i64: 128, 512>}, {pipeline_mode = #tpu.pipeline_mode<synchronous>, transform_indices = @transform_3, window_bounds = array<i64: 1, 512>}, {pipeline_mode = #tpu.pipeline_mode<synchronous>, transform_indices = @transform_4, window_bounds = array<i64: 128, 512>}, {pipeline_mode = #tpu.pipeline_mode<synchronous>, transform_indices = @transform_5, window_bounds = array<i64: 128, 512>}, {pipeline_mode = #tpu.pipeline_mode<synchronous>, transform_indices = @transform_6, window_bounds = array<i64: 1, 512>}, {pipeline_mode = #tpu.pipeline_mode<synchronous>, transform_indices = @transform_7, window_bounds = array<i64: 128, 128>}, {pipeline_mode = #tpu.pipeline_mode<synchronous>, transform_indices = @transform_8, window_bounds = array<i64: 1, 128>}, {pipeline_mode = #tpu.pipeline_mode<synchronous>, transform_indices = @transform_9, window_bounds = array<i64: 128, 128>}, {pipeline_mode = #tpu.pipeline_mode<synchronous>, transform_indices = @transform_10, window_bounds = array<i64: 1, 128>}, {pipeline_mode = #tpu.pipeline_mode<synchronous>, transform_indices = @transform_11, window_bounds = array<i64: 64, 128>}]} {
    %c0 = arith.constant 0 : index
    %c0_0 = arith.constant 0 : index
    %0 = vector.load %arg1[%c0, %c0_0] : memref<64x128xf32, #tpu.memory_space<vmem>>, vector<64x128xf32>
    %c0_1 = arith.constant 0 : index
    %c0_2 = arith.constant 0 : index
    %1 = vector.load %arg2[%c0_1, %c0_2] : memref<128x512xf32, #tpu.memory_space<vmem>>, vector<128x512xf32>
    %cst = arith.constant dense<0.000000e+00> : vector<64x512xf32>
    %2 = tpu.matmul %0, %1, %cst {dimension_numbers = #tpu.dot_dimension_numbers<[1], [0], [0], [1], [0, 0, 1, 1], [], []>} : vector<64x128xf32>, vector<128x512xf32>, vector<64x512xf32> -> vector<64x512xf32>
    %c0_3 = arith.constant 0 : index
    %c0_4 = arith.constant 0 : index
    %3 = vector.load %arg4[%c0_3, %c0_4] : memref<1x512xf32, #tpu.memory_space<vmem>>, vector<1x512xf32>
    %4 = vector.broadcast %3 : vector<1x512xf32> to vector<64x512xf32>
    %5 = arith.addf %2, %4 : vector<64x512xf32>
    %c0_5 = arith.constant 0 : index
    %c0_6 = arith.constant 0 : index
    %6 = vector.load %arg14[%c0_5, %c0_6] : memref<64x512xf32, #tpu.memory_space<vmem>>, vector<64x512xf32>
    tpu.vector_store %arg14[%c0_5, %c0_6], %5 {strides = array<i32>} : memref<64x512xf32, #tpu.memory_space<vmem>>, vector<64x512xf32>,
    %c0_7 = arith.constant 0 : index
    %c0_8 = arith.constant 0 : index
    %7 = vector.load %arg3[%c0_7, %c0_8] : memref<128x512xf32, #tpu.memory_space<vmem>>, vector<128x512xf32>
    %cst_9 = arith.constant 0.000000e+00 : f32
    %8 = vector.broadcast %cst_9 : f32 to vector<8x128xf32>
    %cst_10 = arith.constant 0.000000e+00 : f32
    %9 = vector.broadcast %cst_10 : f32 to vector<8x128xf32>
    %c0_i32 = arith.constant 0 : i32
    %c8_i32 = arith.constant 8 : i32
    %10 = arith.muli %c0_i32, %c8_i32 : i32
    %11 = tpu.assume_multiple %10, 8 : i32
    %12 = arith.index_cast %11 : i32 to index
    %c0_11 = arith.constant 0 : index
    %13 = vector.load %arg14[%12, %c0_11] : memref<64x512xf32, #tpu.memory_space<vmem>>, vector<8x512xf32>
    %cst_12 = arith.constant dense<0.000000e+00> : vector<8x512xf32>
    %14 = tpu.matmul %8, %7, %cst_12 {dimension_numbers = #tpu.dot_dimension_numbers<[1], [0], [0], [1], [0, 0, 1, 1], [], []>} : vector<8x128xf32>, vector<128x512xf32>, vector<8x512xf32> -> vector<8x512xf32>
    %15 = arith.addf %13, %14 : vector<8x512xf32>
    %16 = vector.extract_strided_slice %15 {offsets = [0, 0], sizes = [8, 128], strides = [1, 1]} : vector<8x512xf32> to vector<8x128xf32>
    %17 = arith.negf %16 : vector<8x128xf32>
    %18 = math.exp %17 : vector<8x128xf32>
    %cst_13 = arith.constant 1.000000e+00 : f32
    %19 = vector.broadcast %cst_13 : f32 to vector<8x128xf32>
    %20 = arith.addf %19, %18 : vector<8x128xf32>
    %21 = arith.divf %19, %20 : vector<8x128xf32>
    %22 = vector.extract_strided_slice %15 {offsets = [0, 128], sizes = [8, 128], strides = [1, 1]} : vector<8x512xf32> to vector<8x128xf32>
    %23 = arith.negf %22 : vector<8x128xf32>
    %24 = math.exp %23 : vector<8x128xf32>
    %cst_14 = arith.constant 1.000000e+00 : f32
    %25 = vector.broadcast %cst_14 : f32 to vector<8x128xf32>
    %26 = arith.addf %25, %24 : vector<8x128xf32>
    %27 = arith.divf %25, %26 : vector<8x128xf32>
    %28 = vector.extract_strided_slice %15 {offsets = [0, 256], sizes = [8, 128], strides = [1, 1]} : vector<8x512xf32> to vector<8x128xf32>
    %29 = math.tanh %28 : vector<8x128xf32>
    %30 = vector.extract_strided_slice %15 {offsets = [0, 384], sizes = [8, 128], strides = [1, 1]} : vector<8x512xf32> to vector<8x128xf32>
    %31 = arith.negf %30 : vector<8x128xf32>
    %32 = math.exp %31 : vector<8x128xf32>
    %cst_15 = arith.constant 1.000000e+00 : f32
    %33 = vector.broadcast %cst_15 : f32 to vector<8x128xf32>
    %34 = arith.addf %33, %32 : vector<8x128xf32>
    %35 = arith.divf %33, %34 : vector<8x128xf32>
    %36 = arith.mulf %27, %9 : vector<8x128xf32>
    %37 = arith.mulf %21, %29 : vector<8x128xf32>
    %38 = arith.addf %36, %37 : vector<8x128xf32>
    %39 = math.tanh %38 : vector<8x128xf32>
    %40 = arith.mulf %35, %39 : vector<8x128xf32>
    %41 = arith.index_cast %11 : i32 to index
    %c0_16 = arith.constant 0 : index
    %42 = vector.load %arg13[%41, %c0_16] : memref<64x128xf32, #tpu.memory_space<vmem>>, vector<8x128xf32>
    tpu.vector_store %arg13[%41, %c0_16], %40 {strides = array<i32>} : memref<64x128xf32, #tpu.memory_space<vmem>>, vector<8x128xf32>,
    %c1_i32 = arith.constant 1 : i32
    %c8_i32_17 = arith.constant 8 : i32
    %43 = arith.muli %c1_i32, %c8_i32_17 : i32
    %44 = tpu.assume_multiple %43, 8 : i32
    %45 = arith.index_cast %44 : i32 to index
    %c0_18 = arith.constant 0 : index
    %46 = vector.load %arg14[%45, %c0_18] : memref<64x512xf32, #tpu.memory_space<vmem>>, vector<8x512xf32>
    %cst_19 = arith.constant dense<0.000000e+00> : vector<8x512xf32>
    %47 = tpu.matmul %40, %7, %cst_19 {dimension_numbers = #tpu.dot_dimension_numbers<[1], [0], [0], [1], [0, 0, 1, 1], [], []>} : vector<8x128xf32>, vector<128x512xf32>, vector<8x512xf32> -> vector<8x512xf32>
    %48 = arith.addf %46, %47 : vector<8x512xf32>
    %49 = vector.extract_strided_slice %48 {offsets = [0, 0], sizes = [8, 128], strides = [1, 1]} : vector<8x512xf32> to vector<8x128xf32>
    %50 = arith.negf %49 : vector<8x128xf32>
    %51 = math.exp %50 : vector<8x128xf32>
    %cst_20 = arith.constant 1.000000e+00 : f32
    %52 = vector.broadcast %cst_20 : f32 to vector<8x128xf32>
    %53 = arith.addf %52, %51 : vector<8x128xf32>
    %54 = arith.divf %52, %53 : vector<8x128xf32>
    %55 = vector.extract_strided_slice %48 {offsets = [0, 128], sizes = [8, 128], strides = [1, 1]} : vector<8x512xf32> to vector<8x128xf32>
    %56 = arith.negf %55 : vector<8x128xf32>
    %57 = math.exp %56 : vector<8x128xf32>
    %cst_21 = arith.constant 1.000000e+00 : f32
    %58 = vector.broadcast %cst_21 : f32 to vector<8x128xf32>
    %59 = arith.addf %58, %57 : vector<8x128xf32>
    %60 = arith.divf %58, %59 : vector<8x128xf32>
    %61 = vector.extract_strided_slice %48 {offsets = [0, 256], sizes = [8, 128], strides = [1, 1]} : vector<8x512xf32> to vector<8x128xf32>
    %62 = math.tanh %61 : vector<8x128xf32>
    %63 = vector.extract_strided_slice %48 {offsets = [0, 384], sizes = [8, 128], strides = [1, 1]} : vector<8x512xf32> to vector<8x128xf32>
    %64 = arith.negf %63 : vector<8x128xf32>
    %65 = math.exp %64 : vector<8x128xf32>
    %cst_22 = arith.constant 1.000000e+00 : f32
    %66 = vector.broadcast %cst_22 : f32 to vector<8x128xf32>
    %67 = arith.addf %66, %65 : vector<8x128xf32>
    %68 = arith.divf %66, %67 : vector<8x128xf32>
    %69 = arith.mulf %60, %38 : vector<8x128xf32>
    %70 = arith.mulf %54, %62 : vector<8x128xf32>
    %71 = arith.addf %69, %70 : vector<8x128xf32>
    %72 = math.tanh %71 : vector<8x128xf32>
    %73 = arith.mulf %68, %72 : vector<8x128xf32>
    %74 = arith.index_cast %44 : i32 to index
    %c0_23 = arith.constant 0 : index
    %75 = vector.load %arg13[%74, %c0_23] : memref<64x128xf32, #tpu.memory_space<vmem>>, vector<8x128xf32>
    tpu.vector_store %arg13[%74, %c0_23], %73 {strides = array<i32>} : memref<64x128xf32, #tpu.memory_space<vmem>>, vector<8x128xf32>,
    %c2_i32 = arith.constant 2 : i32
    %c8_i32_24 = arith.constant 8 : i32
    %76 = arith.muli %c2_i32, %c8_i32_24 : i32
    %77 = tpu.assume_multiple %76, 8 : i32
    %78 = arith.index_cast %77 : i32 to index
    %c0_25 = arith.constant 0 : index
    %79 = vector.load %arg14[%78, %c0_25] : memref<64x512xf32, #tpu.memory_space<vmem>>, vector<8x512xf32>
    %cst_26 = arith.constant dense<0.000000e+00> : vector<8x512xf32>
    %80 = tpu.matmul %73, %7, %cst_26 {dimension_numbers = #tpu.dot_dimension_numbers<[1], [0], [0], [1], [0, 0, 1, 1], [], []>} : vector<8x128xf32>, vector<128x512xf32>, vector<8x512xf32> -> vector<8x512xf32>
    %81 = arith.addf %79, %80 : vector<8x512xf32>
    %82 = vector.extract_strided_slice %81 {offsets = [0, 0], sizes = [8, 128], strides = [1, 1]} : vector<8x512xf32> to vector<8x128xf32>
    %83 = arith.negf %82 : vector<8x128xf32>
    %84 = math.exp %83 : vector<8x128xf32>
    %cst_27 = arith.constant 1.000000e+00 : f32
    %85 = vector.broadcast %cst_27 : f32 to vector<8x128xf32>
    %86 = arith.addf %85, %84 : vector<8x128xf32>
    %87 = arith.divf %85, %86 : vector<8x128xf32>
    %88 = vector.extract_strided_slice %81 {offsets = [0, 128], sizes = [8, 128], strides = [1, 1]} : vector<8x512xf32> to vector<8x128xf32>
    %89 = arith.negf %88 : vector<8x128xf32>
    %90 = math.exp %89 : vector<8x128xf32>
    %cst_28 = arith.constant 1.000000e+00 : f32
    %91 = vector.broadcast %cst_28 : f32 to vector<8x128xf32>
    %92 = arith.addf %91, %90 : vector<8x128xf32>
    %93 = arith.divf %91, %92 : vector<8x128xf32>
    %94 = vector.extract_strided_slice %81 {offsets = [0, 256], sizes = [8, 128], strides = [1, 1]} : vector<8x512xf32> to vector<8x128xf32>
    %95 = math.tanh %94 : vector<8x128xf32>
    %96 = vector.extract_strided_slice %81 {offsets = [0, 384], sizes = [8, 128], strides = [1, 1]} : vector<8x512xf32> to vector<8x128xf32>
    %97 = arith.negf %96 : vector<8x128xf32>
    %98 = math.exp %97 : vector<8x128xf32>
    %cst_29 = arith.constant 1.000000e+00 : f32
    %99 = vector.broadcast %cst_29 : f32 to vector<8x128xf32>
    %100 = arith.addf %99, %98 : vector<8x128xf32>
    %101 = arith.divf %99, %100 : vector<8x128xf32>
    %102 = arith.mulf %93, %71 : vector<8x128xf32>
    %103 = arith.mulf %87, %95 : vector<8x128xf32>
    %104 = arith.addf %102, %103 : vector<8x128xf32>
    %105 = math.tanh %104 : vector<8x128xf32>
    %106 = arith.mulf %101, %105 : vector<8x128xf32>
    %107 = arith.index_cast %77 : i32 to index
    %c0_30 = arith.constant 0 : index
    %108 = vector.load %arg13[%107, %c0_30] : memref<64x128xf32, #tpu.memory_space<vmem>>, vector<8x128xf32>
    tpu.vector_store %arg13[%107, %c0_30], %106 {strides = array<i32>} : memref<64x128xf32, #tpu.memory_space<vmem>>, vector<8x128xf32>,
    %c3_i32 = arith.constant 3 : i32
    %c8_i32_31 = arith.constant 8 : i32
    %109 = arith.muli %c3_i32, %c8_i32_31 : i32
    %110 = tpu.assume_multiple %109, 8 : i32
    %111 = arith.index_cast %110 : i32 to index
    %c0_32 = arith.constant 0 : index
    %112 = vector.load %arg14[%111, %c0_32] : memref<64x512xf32, #tpu.memory_space<vmem>>, vector<8x512xf32>
    %cst_33 = arith.constant dense<0.000000e+00> : vector<8x512xf32>
    %113 = tpu.matmul %106, %7, %cst_33 {dimension_numbers = #tpu.dot_dimension_numbers<[1], [0], [0], [1], [0, 0, 1, 1], [], []>} : vector<8x128xf32>, vector<128x512xf32>, vector<8x512xf32> -> vector<8x512xf32>
    %114 = arith.addf %112, %113 : vector<8x512xf32>
    %115 = vector.extract_strided_slice %114 {offsets = [0, 0], sizes = [8, 128], strides = [1, 1]} : vector<8x512xf32> to vector<8x128xf32>
    %116 = arith.negf %115 : vector<8x128xf32>
    %117 = math.exp %116 : vector<8x128xf32>
    %cst_34 = arith.constant 1.000000e+00 : f32
    %118 = vector.broadcast %cst_34 : f32 to vector<8x128xf32>
    %119 = arith.addf %118, %117 : vector<8x128xf32>
    %120 = arith.divf %118, %119 : vector<8x128xf32>
    %121 = vector.extract_strided_slice %114 {offsets = [0, 128], sizes = [8, 128], strides = [1, 1]} : vector<8x512xf32> to vector<8x128xf32>
    %122 = arith.negf %121 : vector<8x128xf32>
    %123 = math.exp %122 : vector<8x128xf32>
    %cst_35 = arith.constant 1.000000e+00 : f32
    %124 = vector.broadcast %cst_35 : f32 to vector<8x128xf32>
    %125 = arith.addf %124, %123 : vector<8x128xf32>
    %126 = arith.divf %124, %125 : vector<8x128xf32>
    %127 = vector.extract_strided_slice %114 {offsets = [0, 256], sizes = [8, 128], strides = [1, 1]} : vector<8x512xf32> to vector<8x128xf32>
    %128 = math.tanh %127 : vector<8x128xf32>
    %129 = vector.extract_strided_slice %114 {offsets = [0, 384], sizes = [8, 128], strides = [1, 1]} : vector<8x512xf32> to vector<8x128xf32>
    %130 = arith.negf %129 : vector<8x128xf32>
    %131 = math.exp %130 : vector<8x128xf32>
    %cst_36 = arith.constant 1.000000e+00 : f32
    %132 = vector.broadcast %cst_36 : f32 to vector<8x128xf32>
    %133 = arith.addf %132, %131 : vector<8x128xf32>
    %134 = arith.divf %132, %133 : vector<8x128xf32>
    %135 = arith.mulf %126, %104 : vector<8x128xf32>
    %136 = arith.mulf %120, %128 : vector<8x128xf32>
    %137 = arith.addf %135, %136 : vector<8x128xf32>
    %138 = math.tanh %137 : vector<8x128xf32>
    %139 = arith.mulf %134, %138 : vector<8x128xf32>
    %140 = arith.index_cast %110 : i32 to index
    %c0_37 = arith.constant 0 : index
    %141 = vector.load %arg13[%140, %c0_37] : memref<64x128xf32, #tpu.memory_space<vmem>>, vector<8x128xf32>
    tpu.vector_store %arg13[%140, %c0_37], %139 {strides = array<i32>} : memref<64x128xf32, #tpu.memory_space<vmem>>, vector<8x128xf32>,
    %c4_i32 = arith.constant 4 : i32
    %c8_i32_38 = arith.constant 8 : i32
    %142 = arith.muli %c4_i32, %c8_i32_38 : i32
    %143 = tpu.assume_multiple %142, 8 : i32
    %144 = arith.index_cast %143 : i32 to index
    %c0_39 = arith.constant 0 : index
    %145 = vector.load %arg14[%144, %c0_39] : memref<64x512xf32, #tpu.memory_space<vmem>>, vector<8x512xf32>
    %cst_40 = arith.constant dense<0.000000e+00> : vector<8x512xf32>
    %146 = tpu.matmul %139, %7, %cst_40 {dimension_numbers = #tpu.dot_dimension_numbers<[1], [0], [0], [1], [0, 0, 1, 1], [], []>} : vector<8x128xf32>, vector<128x512xf32>, vector<8x512xf32> -> vector<8x512xf32>
    %147 = arith.addf %145, %146 : vector<8x512xf32>
    %148 = vector.extract_strided_slice %147 {offsets = [0, 0], sizes = [8, 128], strides = [1, 1]} : vector<8x512xf32> to vector<8x128xf32>
    %149 = arith.negf %148 : vector<8x128xf32>
    %150 = math.exp %149 : vector<8x128xf32>
    %cst_41 = arith.constant 1.000000e+00 : f32
    %151 = vector.broadcast %cst_41 : f32 to vector<8x128xf32>
    %152 = arith.addf %151, %150 : vector<8x128xf32>
    %153 = arith.divf %151, %152 : vector<8x128xf32>
    %154 = vector.extract_strided_slice %147 {offsets = [0, 128], sizes = [8, 128], strides = [1, 1]} : vector<8x512xf32> to vector<8x128xf32>
    %155 = arith.negf %154 : vector<8x128xf32>
    %156 = math.exp %155 : vector<8x128xf32>
    %cst_42 = arith.constant 1.000000e+00 : f32
    %157 = vector.broadcast %cst_42 : f32 to vector<8x128xf32>
    %158 = arith.addf %157, %156 : vector<8x128xf32>
    %159 = arith.divf %157, %158 : vector<8x128xf32>
    %160 = vector.extract_strided_slice %147 {offsets = [0, 256], sizes = [8, 128], strides = [1, 1]} : vector<8x512xf32> to vector<8x128xf32>
    %161 = math.tanh %160 : vector<8x128xf32>
    %162 = vector.extract_strided_slice %147 {offsets = [0, 384], sizes = [8, 128], strides = [1, 1]} : vector<8x512xf32> to vector<8x128xf32>
    %163 = arith.negf %162 : vector<8x128xf32>
    %164 = math.exp %163 : vector<8x128xf32>
    %cst_43 = arith.constant 1.000000e+00 : f32
    %165 = vector.broadcast %cst_43 : f32 to vector<8x128xf32>
    %166 = arith.addf %165, %164 : vector<8x128xf32>
    %167 = arith.divf %165, %166 : vector<8x128xf32>
    %168 = arith.mulf %159, %137 : vector<8x128xf32>
    %169 = arith.mulf %153, %161 : vector<8x128xf32>
    %170 = arith.addf %168, %169 : vector<8x128xf32>
    %171 = math.tanh %170 : vector<8x128xf32>
    %172 = arith.mulf %167, %171 : vector<8x128xf32>
    %173 = arith.index_cast %143 : i32 to index
    %c0_44 = arith.constant 0 : index
    %174 = vector.load %arg13[%173, %c0_44] : memref<64x128xf32, #tpu.memory_space<vmem>>, vector<8x128xf32>
    tpu.vector_store %arg13[%173, %c0_44], %172 {strides = array<i32>} : memref<64x128xf32, #tpu.memory_space<vmem>>, vector<8x128xf32>,
    %c5_i32 = arith.constant 5 : i32
    %c8_i32_45 = arith.constant 8 : i32
    %175 = arith.muli %c5_i32, %c8_i32_45 : i32
    %176 = tpu.assume_multiple %175, 8 : i32
    %177 = arith.index_cast %176 : i32 to index
    %c0_46 = arith.constant 0 : index
    %178 = vector.load %arg14[%177, %c0_46] : memref<64x512xf32, #tpu.memory_space<vmem>>, vector<8x512xf32>
    %cst_47 = arith.constant dense<0.000000e+00> : vector<8x512xf32>
    %179 = tpu.matmul %172, %7, %cst_47 {dimension_numbers = #tpu.dot_dimension_numbers<[1], [0], [0], [1], [0, 0, 1, 1], [], []>} : vector<8x128xf32>, vector<128x512xf32>, vector<8x512xf32> -> vector<8x512xf32>
    %180 = arith.addf %178, %179 : vector<8x512xf32>
    %181 = vector.extract_strided_slice %180 {offsets = [0, 0], sizes = [8, 128], strides = [1, 1]} : vector<8x512xf32> to vector<8x128xf32>
    %182 = arith.negf %181 : vector<8x128xf32>
    %183 = math.exp %182 : vector<8x128xf32>
    %cst_48 = arith.constant 1.000000e+00 : f32
    %184 = vector.broadcast %cst_48 : f32 to vector<8x128xf32>
    %185 = arith.addf %184, %183 : vector<8x128xf32>
    %186 = arith.divf %184, %185 : vector<8x128xf32>
    %187 = vector.extract_strided_slice %180 {offsets = [0, 128], sizes = [8, 128], strides = [1, 1]} : vector<8x512xf32> to vector<8x128xf32>
    %188 = arith.negf %187 : vector<8x128xf32>
    %189 = math.exp %188 : vector<8x128xf32>
    %cst_49 = arith.constant 1.000000e+00 : f32
    %190 = vector.broadcast %cst_49 : f32 to vector<8x128xf32>
    %191 = arith.addf %190, %189 : vector<8x128xf32>
    %192 = arith.divf %190, %191 : vector<8x128xf32>
    %193 = vector.extract_strided_slice %180 {offsets = [0, 256], sizes = [8, 128], strides = [1, 1]} : vector<8x512xf32> to vector<8x128xf32>
    %194 = math.tanh %193 : vector<8x128xf32>
    %195 = vector.extract_strided_slice %180 {offsets = [0, 384], sizes = [8, 128], strides = [1, 1]} : vector<8x512xf32> to vector<8x128xf32>
    %196 = arith.negf %195 : vector<8x128xf32>
    %197 = math.exp %196 : vector<8x128xf32>
    %cst_50 = arith.constant 1.000000e+00 : f32
    %198 = vector.broadcast %cst_50 : f32 to vector<8x128xf32>
    %199 = arith.addf %198, %197 : vector<8x128xf32>
    %200 = arith.divf %198, %199 : vector<8x128xf32>
    %201 = arith.mulf %192, %170 : vector<8x128xf32>
    %202 = arith.mulf %186, %194 : vector<8x128xf32>
    %203 = arith.addf %201, %202 : vector<8x128xf32>
    %204 = math.tanh %203 : vector<8x128xf32>
    %205 = arith.mulf %200, %204 : vector<8x128xf32>
    %206 = arith.index_cast %176 : i32 to index
    %c0_51 = arith.constant 0 : index
    %207 = vector.load %arg13[%206, %c0_51] : memref<64x128xf32, #tpu.memory_space<vmem>>, vector<8x128xf32>
    tpu.vector_store %arg13[%206, %c0_51], %205 {strides = array<i32>} : memref<64x128xf32, #tpu.memory_space<vmem>>, vector<8x128xf32>,
    %c6_i32 = arith.constant 6 : i32
    %c8_i32_52 = arith.constant 8 : i32
    %208 = arith.muli %c6_i32, %c8_i32_52 : i32
    %209 = tpu.assume_multiple %208, 8 : i32
    %210 = arith.index_cast %209 : i32 to index
    %c0_53 = arith.constant 0 : index
    %211 = vector.load %arg14[%210, %c0_53] : memref<64x512xf32, #tpu.memory_space<vmem>>, vector<8x512xf32>
    %cst_54 = arith.constant dense<0.000000e+00> : vector<8x512xf32>
    %212 = tpu.matmul %205, %7, %cst_54 {dimension_numbers = #tpu.dot_dimension_numbers<[1], [0], [0], [1], [0, 0, 1, 1], [], []>} : vector<8x128xf32>, vector<128x512xf32>, vector<8x512xf32> -> vector<8x512xf32>
    %213 = arith.addf %211, %212 : vector<8x512xf32>
    %214 = vector.extract_strided_slice %213 {offsets = [0, 0], sizes = [8, 128], strides = [1, 1]} : vector<8x512xf32> to vector<8x128xf32>
    %215 = arith.negf %214 : vector<8x128xf32>
    %216 = math.exp %215 : vector<8x128xf32>
    %cst_55 = arith.constant 1.000000e+00 : f32
    %217 = vector.broadcast %cst_55 : f32 to vector<8x128xf32>
    %218 = arith.addf %217, %216 : vector<8x128xf32>
    %219 = arith.divf %217, %218 : vector<8x128xf32>
    %220 = vector.extract_strided_slice %213 {offsets = [0, 128], sizes = [8, 128], strides = [1, 1]} : vector<8x512xf32> to vector<8x128xf32>
    %221 = arith.negf %220 : vector<8x128xf32>
    %222 = math.exp %221 : vector<8x128xf32>
    %cst_56 = arith.constant 1.000000e+00 : f32
    %223 = vector.broadcast %cst_56 : f32 to vector<8x128xf32>
    %224 = arith.addf %223, %222 : vector<8x128xf32>
    %225 = arith.divf %223, %224 : vector<8x128xf32>
    %226 = vector.extract_strided_slice %213 {offsets = [0, 256], sizes = [8, 128], strides = [1, 1]} : vector<8x512xf32> to vector<8x128xf32>
    %227 = math.tanh %226 : vector<8x128xf32>
    %228 = vector.extract_strided_slice %213 {offsets = [0, 384], sizes = [8, 128], strides = [1, 1]} : vector<8x512xf32> to vector<8x128xf32>
    %229 = arith.negf %228 : vector<8x128xf32>
    %230 = math.exp %229 : vector<8x128xf32>
    %cst_57 = arith.constant 1.000000e+00 : f32
    %231 = vector.broadcast %cst_57 : f32 to vector<8x128xf32>
    %232 = arith.addf %231, %230 : vector<8x128xf32>
    %233 = arith.divf %231, %232 : vector<8x128xf32>
    %234 = arith.mulf %225, %203 : vector<8x128xf32>
    %235 = arith.mulf %219, %227 : vector<8x128xf32>
    %236 = arith.addf %234, %235 : vector<8x128xf32>
    %237 = math.tanh %236 : vector<8x128xf32>
    %238 = arith.mulf %233, %237 : vector<8x128xf32>
    %239 = arith.index_cast %209 : i32 to index
    %c0_58 = arith.constant 0 : index
    %240 = vector.load %arg13[%239, %c0_58] : memref<64x128xf32, #tpu.memory_space<vmem>>, vector<8x128xf32>
    tpu.vector_store %arg13[%239, %c0_58], %238 {strides = array<i32>} : memref<64x128xf32, #tpu.memory_space<vmem>>, vector<8x128xf32>,
    %c7_i32 = arith.constant 7 : i32
    %c8_i32_59 = arith.constant 8 : i32
    %241 = arith.muli %c7_i32, %c8_i32_59 : i32
    %242 = tpu.assume_multiple %241, 8 : i32
    %243 = arith.index_cast %242 : i32 to index
    %c0_60 = arith.constant 0 : index
    %244 = vector.load %arg14[%243, %c0_60] : memref<64x512xf32, #tpu.memory_space<vmem>>, vector<8x512xf32>
    %cst_61 = arith.constant dense<0.000000e+00> : vector<8x512xf32>
    %245 = tpu.matmul %238, %7, %cst_61 {dimension_numbers = #tpu.dot_dimension_numbers<[1], [0], [0], [1], [0, 0, 1, 1], [], []>} : vector<8x128xf32>, vector<128x512xf32>, vector<8x512xf32> -> vector<8x512xf32>
    %246 = arith.addf %244, %245 : vector<8x512xf32>
    %247 = vector.extract_strided_slice %246 {offsets = [0, 0], sizes = [8, 128], strides = [1, 1]} : vector<8x512xf32> to vector<8x128xf32>
    %248 = arith.negf %247 : vector<8x128xf32>
    %249 = math.exp %248 : vector<8x128xf32>
    %cst_62 = arith.constant 1.000000e+00 : f32
    %250 = vector.broadcast %cst_62 : f32 to vector<8x128xf32>
    %251 = arith.addf %250, %249 : vector<8x128xf32>
    %252 = arith.divf %250, %251 : vector<8x128xf32>
    %253 = vector.extract_strided_slice %246 {offsets = [0, 128], sizes = [8, 128], strides = [1, 1]} : vector<8x512xf32> to vector<8x128xf32>
    %254 = arith.negf %253 : vector<8x128xf32>
    %255 = math.exp %254 : vector<8x128xf32>
    %cst_63 = arith.constant 1.000000e+00 : f32
    %256 = vector.broadcast %cst_63 : f32 to vector<8x128xf32>
    %257 = arith.addf %256, %255 : vector<8x128xf32>
    %258 = arith.divf %256, %257 : vector<8x128xf32>
    %259 = vector.extract_strided_slice %246 {offsets = [0, 256], sizes = [8, 128], strides = [1, 1]} : vector<8x512xf32> to vector<8x128xf32>
    %260 = math.tanh %259 : vector<8x128xf32>
    %261 = vector.extract_strided_slice %246 {offsets = [0, 384], sizes = [8, 128], strides = [1, 1]} : vector<8x512xf32> to vector<8x128xf32>
    %262 = arith.negf %261 : vector<8x128xf32>
    %263 = math.exp %262 : vector<8x128xf32>
    %cst_64 = arith.constant 1.000000e+00 : f32
    %264 = vector.broadcast %cst_64 : f32 to vector<8x128xf32>
    %265 = arith.addf %264, %263 : vector<8x128xf32>
    %266 = arith.divf %264, %265 : vector<8x128xf32>
    %267 = arith.mulf %258, %236 : vector<8x128xf32>
    %268 = arith.mulf %252, %260 : vector<8x128xf32>
    %269 = arith.addf %267, %268 : vector<8x128xf32>
    %270 = math.tanh %269 : vector<8x128xf32>
    %271 = arith.mulf %266, %270 : vector<8x128xf32>
    %272 = arith.index_cast %242 : i32 to index
    %c0_65 = arith.constant 0 : index
    %273 = vector.load %arg13[%272, %c0_65] : memref<64x128xf32, #tpu.memory_space<vmem>>, vector<8x128xf32>
    tpu.vector_store %arg13[%272, %c0_65], %271 {strides = array<i32>} : memref<64x128xf32, #tpu.memory_space<vmem>>, vector<8x128xf32>,
    %c8_i32_66 = arith.constant 8 : i32
    %c0_67 = arith.constant 0 : index
    %c0_68 = arith.constant 0 : index
    %274 = vector.load %arg13[%c0_67, %c0_68] : memref<64x128xf32, #tpu.memory_space<vmem>>, vector<64x128xf32>
    %c0_69 = arith.constant 0 : index
    %c0_70 = arith.constant 0 : index
    %275 = vector.load %arg5[%c0_69, %c0_70] : memref<128x512xf32, #tpu.memory_space<vmem>>, vector<128x512xf32>
    %cst_71 = arith.constant dense<0.000000e+00> : vector<64x512xf32>
    %276 = tpu.matmul %274, %275, %cst_71 {dimension_numbers = #tpu.dot_dimension_numbers<[1], [0], [0], [1], [0, 0, 1, 1], [], []>} : vector<64x128xf32>, vector<128x512xf32>, vector<64x512xf32> -> vector<64x512xf32>
    %c0_72 = arith.constant 0 : index
    %c0_73 = arith.constant 0 : index
    %277 = vector.load %arg7[%c0_72, %c0_73] : memref<1x512xf32, #tpu.memory_space<vmem>>, vector<1x512xf32>
    %278 = vector.broadcast %277 : vector<1x512xf32> to vector<64x512xf32>
    %279 = arith.addf %276, %278 : vector<64x512xf32>
    %c0_74 = arith.constant 0 : index
    %c0_75 = arith.constant 0 : index
    %280 = vector.load %arg14[%c0_74, %c0_75] : memref<64x512xf32, #tpu.memory_space<vmem>>, vector<64x512xf32>
    tpu.vector_store %arg14[%c0_74, %c0_75], %279 {strides = array<i32>} : memref<64x512xf32, #tpu.memory_space<vmem>>, vector<64x512xf32>,
    %c0_76 = arith.constant 0 : index
    %c0_77 = arith.constant 0 : index
    %281 = vector.load %arg6[%c0_76, %c0_77] : memref<128x512xf32, #tpu.memory_space<vmem>>, vector<128x512xf32>
    %cst_78 = arith.constant 0.000000e+00 : f32
    %282 = vector.broadcast %cst_78 : f32 to vector<8x128xf32>
    %cst_79 = arith.constant 0.000000e+00 : f32
    %283 = vector.broadcast %cst_79 : f32 to vector<8x128xf32>
    %c0_i32_80 = arith.constant 0 : i32
    %c8_i32_81 = arith.constant 8 : i32
    %284 = arith.muli %c0_i32_80, %c8_i32_81 : i32
    %285 = tpu.assume_multiple %284, 8 : i32
    %286 = arith.index_cast %285 : i32 to index
    %c0_82 = arith.constant 0 : index
    %287 = vector.load %arg14[%286, %c0_82] : memref<64x512xf32, #tpu.memory_space<vmem>>, vector<8x512xf32>
    %cst_83 = arith.constant dense<0.000000e+00> : vector<8x512xf32>
    %288 = tpu.matmul %282, %281, %cst_83 {dimension_numbers = #tpu.dot_dimension_numbers<[1], [0], [0], [1], [0, 0, 1, 1], [], []>} : vector<8x128xf32>, vector<128x512xf32>, vector<8x512xf32> -> vector<8x512xf32>
    %289 = arith.addf %287, %288 : vector<8x512xf32>
    %290 = vector.extract_strided_slice %289 {offsets = [0, 0], sizes = [8, 128], strides = [1, 1]} : vector<8x512xf32> to vector<8x128xf32>
    %291 = arith.negf %290 : vector<8x128xf32>
    %292 = math.exp %291 : vector<8x128xf32>
    %cst_84 = arith.constant 1.000000e+00 : f32
    %293 = vector.broadcast %cst_84 : f32 to vector<8x128xf32>
    %294 = arith.addf %293, %292 : vector<8x128xf32>
    %295 = arith.divf %293, %294 : vector<8x128xf32>
    %296 = vector.extract_strided_slice %289 {offsets = [0, 128], sizes = [8, 128], strides = [1, 1]} : vector<8x512xf32> to vector<8x128xf32>
    %297 = arith.negf %296 : vector<8x128xf32>
    %298 = math.exp %297 : vector<8x128xf32>
    %cst_85 = arith.constant 1.000000e+00 : f32
    %299 = vector.broadcast %cst_85 : f32 to vector<8x128xf32>
    %300 = arith.addf %299, %298 : vector<8x128xf32>
    %301 = arith.divf %299, %300 : vector<8x128xf32>
    %302 = vector.extract_strided_slice %289 {offsets = [0, 256], sizes = [8, 128], strides = [1, 1]} : vector<8x512xf32> to vector<8x128xf32>
    %303 = math.tanh %302 : vector<8x128xf32>
    %304 = vector.extract_strided_slice %289 {offsets = [0, 384], sizes = [8, 128], strides = [1, 1]} : vector<8x512xf32> to vector<8x128xf32>
    %305 = arith.negf %304 : vector<8x128xf32>
    %306 = math.exp %305 : vector<8x128xf32>
    %cst_86 = arith.constant 1.000000e+00 : f32
    %307 = vector.broadcast %cst_86 : f32 to vector<8x128xf32>
    %308 = arith.addf %307, %306 : vector<8x128xf32>
    %309 = arith.divf %307, %308 : vector<8x128xf32>
    %310 = arith.mulf %301, %283 : vector<8x128xf32>
    %311 = arith.mulf %295, %303 : vector<8x128xf32>
    %312 = arith.addf %310, %311 : vector<8x128xf32>
    %313 = math.tanh %312 : vector<8x128xf32>
    %314 = arith.mulf %309, %313 : vector<8x128xf32>
    %315 = arith.index_cast %285 : i32 to index
    %c0_87 = arith.constant 0 : index
    %316 = vector.load %arg13[%315, %c0_87] : memref<64x128xf32, #tpu.memory_space<vmem>>, vector<8x128xf32>
    tpu.vector_store %arg13[%315, %c0_87], %314 {strides = array<i32>} : memref<64x128xf32, #tpu.memory_space<vmem>>, vector<8x128xf32>,
    %c1_i32_88 = arith.constant 1 : i32
    %c8_i32_89 = arith.constant 8 : i32
    %317 = arith.muli %c1_i32_88, %c8_i32_89 : i32
    %318 = tpu.assume_multiple %317, 8 : i32
    %319 = arith.index_cast %318 : i32 to index
    %c0_90 = arith.constant 0 : index
    %320 = vector.load %arg14[%319, %c0_90] : memref<64x512xf32, #tpu.memory_space<vmem>>, vector<8x512xf32>
    %cst_91 = arith.constant dense<0.000000e+00> : vector<8x512xf32>
    %321 = tpu.matmul %314, %281, %cst_91 {dimension_numbers = #tpu.dot_dimension_numbers<[1], [0], [0], [1], [0, 0, 1, 1], [], []>} : vector<8x128xf32>, vector<128x512xf32>, vector<8x512xf32> -> vector<8x512xf32>
    %322 = arith.addf %320, %321 : vector<8x512xf32>
    %323 = vector.extract_strided_slice %322 {offsets = [0, 0], sizes = [8, 128], strides = [1, 1]} : vector<8x512xf32> to vector<8x128xf32>
    %324 = arith.negf %323 : vector<8x128xf32>
    %325 = math.exp %324 : vector<8x128xf32>
    %cst_92 = arith.constant 1.000000e+00 : f32
    %326 = vector.broadcast %cst_92 : f32 to vector<8x128xf32>
    %327 = arith.addf %326, %325 : vector<8x128xf32>
    %328 = arith.divf %326, %327 : vector<8x128xf32>
    %329 = vector.extract_strided_slice %322 {offsets = [0, 128], sizes = [8, 128], strides = [1, 1]} : vector<8x512xf32> to vector<8x128xf32>
    %330 = arith.negf %329 : vector<8x128xf32>
    %331 = math.exp %330 : vector<8x128xf32>
    %cst_93 = arith.constant 1.000000e+00 : f32
    %332 = vector.broadcast %cst_93 : f32 to vector<8x128xf32>
    %333 = arith.addf %332, %331 : vector<8x128xf32>
    %334 = arith.divf %332, %333 : vector<8x128xf32>
    %335 = vector.extract_strided_slice %322 {offsets = [0, 256], sizes = [8, 128], strides = [1, 1]} : vector<8x512xf32> to vector<8x128xf32>
    %336 = math.tanh %335 : vector<8x128xf32>
    %337 = vector.extract_strided_slice %322 {offsets = [0, 384], sizes = [8, 128], strides = [1, 1]} : vector<8x512xf32> to vector<8x128xf32>
    %338 = arith.negf %337 : vector<8x128xf32>
    %339 = math.exp %338 : vector<8x128xf32>
    %cst_94 = arith.constant 1.000000e+00 : f32
    %340 = vector.broadcast %cst_94 : f32 to vector<8x128xf32>
    %341 = arith.addf %340, %339 : vector<8x128xf32>
    %342 = arith.divf %340, %341 : vector<8x128xf32>
    %343 = arith.mulf %334, %312 : vector<8x128xf32>
    %344 = arith.mulf %328, %336 : vector<8x128xf32>
    %345 = arith.addf %343, %344 : vector<8x128xf32>
    %346 = math.tanh %345 : vector<8x128xf32>
    %347 = arith.mulf %342, %346 : vector<8x128xf32>
    %348 = arith.index_cast %318 : i32 to index
    %c0_95 = arith.constant 0 : index
    %349 = vector.load %arg13[%348, %c0_95] : memref<64x128xf32, #tpu.memory_space<vmem>>, vector<8x128xf32>
    tpu.vector_store %arg13[%348, %c0_95], %347 {strides = array<i32>} : memref<64x128xf32, #tpu.memory_space<vmem>>, vector<8x128xf32>,
    %c2_i32_96 = arith.constant 2 : i32
    %c8_i32_97 = arith.constant 8 : i32
    %350 = arith.muli %c2_i32_96, %c8_i32_97 : i32
    %351 = tpu.assume_multiple %350, 8 : i32
    %352 = arith.index_cast %351 : i32 to index
    %c0_98 = arith.constant 0 : index
    %353 = vector.load %arg14[%352, %c0_98] : memref<64x512xf32, #tpu.memory_space<vmem>>, vector<8x512xf32>
    %cst_99 = arith.constant dense<0.000000e+00> : vector<8x512xf32>
    %354 = tpu.matmul %347, %281, %cst_99 {dimension_numbers = #tpu.dot_dimension_numbers<[1], [0], [0], [1], [0, 0, 1, 1], [], []>} : vector<8x128xf32>, vector<128x512xf32>, vector<8x512xf32> -> vector<8x512xf32>
    %355 = arith.addf %353, %354 : vector<8x512xf32>
    %356 = vector.extract_strided_slice %355 {offsets = [0, 0], sizes = [8, 128], strides = [1, 1]} : vector<8x512xf32> to vector<8x128xf32>
    %357 = arith.negf %356 : vector<8x128xf32>
    %358 = math.exp %357 : vector<8x128xf32>
    %cst_100 = arith.constant 1.000000e+00 : f32
    %359 = vector.broadcast %cst_100 : f32 to vector<8x128xf32>
    %360 = arith.addf %359, %358 : vector<8x128xf32>
    %361 = arith.divf %359, %360 : vector<8x128xf32>
    %362 = vector.extract_strided_slice %355 {offsets = [0, 128], sizes = [8, 128], strides = [1, 1]} : vector<8x512xf32> to vector<8x128xf32>
    %363 = arith.negf %362 : vector<8x128xf32>
    %364 = math.exp %363 : vector<8x128xf32>
    %cst_101 = arith.constant 1.000000e+00 : f32
    %365 = vector.broadcast %cst_101 : f32 to vector<8x128xf32>
    %366 = arith.addf %365, %364 : vector<8x128xf32>
    %367 = arith.divf %365, %366 : vector<8x128xf32>
    %368 = vector.extract_strided_slice %355 {offsets = [0, 256], sizes = [8, 128], strides = [1, 1]} : vector<8x512xf32> to vector<8x128xf32>
    %369 = math.tanh %368 : vector<8x128xf32>
    %370 = vector.extract_strided_slice %355 {offsets = [0, 384], sizes = [8, 128], strides = [1, 1]} : vector<8x512xf32> to vector<8x128xf32>
    %371 = arith.negf %370 : vector<8x128xf32>
    %372 = math.exp %371 : vector<8x128xf32>
    %cst_102 = arith.constant 1.000000e+00 : f32
    %373 = vector.broadcast %cst_102 : f32 to vector<8x128xf32>
    %374 = arith.addf %373, %372 : vector<8x128xf32>
    %375 = arith.divf %373, %374 : vector<8x128xf32>
    %376 = arith.mulf %367, %345 : vector<8x128xf32>
    %377 = arith.mulf %361, %369 : vector<8x128xf32>
    %378 = arith.addf %376, %377 : vector<8x128xf32>
    %379 = math.tanh %378 : vector<8x128xf32>
    %380 = arith.mulf %375, %379 : vector<8x128xf32>
    %381 = arith.index_cast %351 : i32 to index
    %c0_103 = arith.constant 0 : index
    %382 = vector.load %arg13[%381, %c0_103] : memref<64x128xf32, #tpu.memory_space<vmem>>, vector<8x128xf32>
    tpu.vector_store %arg13[%381, %c0_103], %380 {strides = array<i32>} : memref<64x128xf32, #tpu.memory_space<vmem>>, vector<8x128xf32>,
    %c3_i32_104 = arith.constant 3 : i32
    %c8_i32_105 = arith.constant 8 : i32
    %383 = arith.muli %c3_i32_104, %c8_i32_105 : i32
    %384 = tpu.assume_multiple %383, 8 : i32
    %385 = arith.index_cast %384 : i32 to index
    %c0_106 = arith.constant 0 : index
    %386 = vector.load %arg14[%385, %c0_106] : memref<64x512xf32, #tpu.memory_space<vmem>>, vector<8x512xf32>
    %cst_107 = arith.constant dense<0.000000e+00> : vector<8x512xf32>
    %387 = tpu.matmul %380, %281, %cst_107 {dimension_numbers = #tpu.dot_dimension_numbers<[1], [0], [0], [1], [0, 0, 1, 1], [], []>} : vector<8x128xf32>, vector<128x512xf32>, vector<8x512xf32> -> vector<8x512xf32>
    %388 = arith.addf %386, %387 : vector<8x512xf32>
    %389 = vector.extract_strided_slice %388 {offsets = [0, 0], sizes = [8, 128], strides = [1, 1]} : vector<8x512xf32> to vector<8x128xf32>
    %390 = arith.negf %389 : vector<8x128xf32>
    %391 = math.exp %390 : vector<8x128xf32>
    %cst_108 = arith.constant 1.000000e+00 : f32
    %392 = vector.broadcast %cst_108 : f32 to vector<8x128xf32>
    %393 = arith.addf %392, %391 : vector<8x128xf32>
    %394 = arith.divf %392, %393 : vector<8x128xf32>
    %395 = vector.extract_strided_slice %388 {offsets = [0, 128], sizes = [8, 128], strides = [1, 1]} : vector<8x512xf32> to vector<8x128xf32>
    %396 = arith.negf %395 : vector<8x128xf32>
    %397 = math.exp %396 : vector<8x128xf32>
    %cst_109 = arith.constant 1.000000e+00 : f32
    %398 = vector.broadcast %cst_109 : f32 to vector<8x128xf32>
    %399 = arith.addf %398, %397 : vector<8x128xf32>
    %400 = arith.divf %398, %399 : vector<8x128xf32>
    %401 = vector.extract_strided_slice %388 {offsets = [0, 256], sizes = [8, 128], strides = [1, 1]} : vector<8x512xf32> to vector<8x128xf32>
    %402 = math.tanh %401 : vector<8x128xf32>
    %403 = vector.extract_strided_slice %388 {offsets = [0, 384], sizes = [8, 128], strides = [1, 1]} : vector<8x512xf32> to vector<8x128xf32>
    %404 = arith.negf %403 : vector<8x128xf32>
    %405 = math.exp %404 : vector<8x128xf32>
    %cst_110 = arith.constant 1.000000e+00 : f32
    %406 = vector.broadcast %cst_110 : f32 to vector<8x128xf32>
    %407 = arith.addf %406, %405 : vector<8x128xf32>
    %408 = arith.divf %406, %407 : vector<8x128xf32>
    %409 = arith.mulf %400, %378 : vector<8x128xf32>
    %410 = arith.mulf %394, %402 : vector<8x128xf32>
    %411 = arith.addf %409, %410 : vector<8x128xf32>
    %412 = math.tanh %411 : vector<8x128xf32>
    %413 = arith.mulf %408, %412 : vector<8x128xf32>
    %414 = arith.index_cast %384 : i32 to index
    %c0_111 = arith.constant 0 : index
    %415 = vector.load %arg13[%414, %c0_111] : memref<64x128xf32, #tpu.memory_space<vmem>>, vector<8x128xf32>
    tpu.vector_store %arg13[%414, %c0_111], %413 {strides = array<i32>} : memref<64x128xf32, #tpu.memory_space<vmem>>, vector<8x128xf32>,
    %c4_i32_112 = arith.constant 4 : i32
    %c8_i32_113 = arith.constant 8 : i32
    %416 = arith.muli %c4_i32_112, %c8_i32_113 : i32
    %417 = tpu.assume_multiple %416, 8 : i32
    %418 = arith.index_cast %417 : i32 to index
    %c0_114 = arith.constant 0 : index
    %419 = vector.load %arg14[%418, %c0_114] : memref<64x512xf32, #tpu.memory_space<vmem>>, vector<8x512xf32>
    %cst_115 = arith.constant dense<0.000000e+00> : vector<8x512xf32>
    %420 = tpu.matmul %413, %281, %cst_115 {dimension_numbers = #tpu.dot_dimension_numbers<[1], [0], [0], [1], [0, 0, 1, 1], [], []>} : vector<8x128xf32>, vector<128x512xf32>, vector<8x512xf32> -> vector<8x512xf32>
    %421 = arith.addf %419, %420 : vector<8x512xf32>
    %422 = vector.extract_strided_slice %421 {offsets = [0, 0], sizes = [8, 128], strides = [1, 1]} : vector<8x512xf32> to vector<8x128xf32>
    %423 = arith.negf %422 : vector<8x128xf32>
    %424 = math.exp %423 : vector<8x128xf32>
    %cst_116 = arith.constant 1.000000e+00 : f32
    %425 = vector.broadcast %cst_116 : f32 to vector<8x128xf32>
    %426 = arith.addf %425, %424 : vector<8x128xf32>
    %427 = arith.divf %425, %426 : vector<8x128xf32>
    %428 = vector.extract_strided_slice %421 {offsets = [0, 128], sizes = [8, 128], strides = [1, 1]} : vector<8x512xf32> to vector<8x128xf32>
    %429 = arith.negf %428 : vector<8x128xf32>
    %430 = math.exp %429 : vector<8x128xf32>
    %cst_117 = arith.constant 1.000000e+00 : f32
    %431 = vector.broadcast %cst_117 : f32 to vector<8x128xf32>
    %432 = arith.addf %431, %430 : vector<8x128xf32>
    %433 = arith.divf %431, %432 : vector<8x128xf32>
    %434 = vector.extract_strided_slice %421 {offsets = [0, 256], sizes = [8, 128], strides = [1, 1]} : vector<8x512xf32> to vector<8x128xf32>
    %435 = math.tanh %434 : vector<8x128xf32>
    %436 = vector.extract_strided_slice %421 {offsets = [0, 384], sizes = [8, 128], strides = [1, 1]} : vector<8x512xf32> to vector<8x128xf32>
    %437 = arith.negf %436 : vector<8x128xf32>
    %438 = math.exp %437 : vector<8x128xf32>
    %cst_118 = arith.constant 1.000000e+00 : f32
    %439 = vector.broadcast %cst_118 : f32 to vector<8x128xf32>
    %440 = arith.addf %439, %438 : vector<8x128xf32>
    %441 = arith.divf %439, %440 : vector<8x128xf32>
    %442 = arith.mulf %433, %411 : vector<8x128xf32>
    %443 = arith.mulf %427, %435 : vector<8x128xf32>
    %444 = arith.addf %442, %443 : vector<8x128xf32>
    %445 = math.tanh %444 : vector<8x128xf32>
    %446 = arith.mulf %441, %445 : vector<8x128xf32>
    %447 = arith.index_cast %417 : i32 to index
    %c0_119 = arith.constant 0 : index
    %448 = vector.load %arg13[%447, %c0_119] : memref<64x128xf32, #tpu.memory_space<vmem>>, vector<8x128xf32>
    tpu.vector_store %arg13[%447, %c0_119], %446 {strides = array<i32>} : memref<64x128xf32, #tpu.memory_space<vmem>>, vector<8x128xf32>,
    %c5_i32_120 = arith.constant 5 : i32
    %c8_i32_121 = arith.constant 8 : i32
    %449 = arith.muli %c5_i32_120, %c8_i32_121 : i32
    %450 = tpu.assume_multiple %449, 8 : i32
    %451 = arith.index_cast %450 : i32 to index
    %c0_122 = arith.constant 0 : index
    %452 = vector.load %arg14[%451, %c0_122] : memref<64x512xf32, #tpu.memory_space<vmem>>, vector<8x512xf32>
    %cst_123 = arith.constant dense<0.000000e+00> : vector<8x512xf32>
    %453 = tpu.matmul %446, %281, %cst_123 {dimension_numbers = #tpu.dot_dimension_numbers<[1], [0], [0], [1], [0, 0, 1, 1], [], []>} : vector<8x128xf32>, vector<128x512xf32>, vector<8x512xf32> -> vector<8x512xf32>
    %454 = arith.addf %452, %453 : vector<8x512xf32>
    %455 = vector.extract_strided_slice %454 {offsets = [0, 0], sizes = [8, 128], strides = [1, 1]} : vector<8x512xf32> to vector<8x128xf32>
    %456 = arith.negf %455 : vector<8x128xf32>
    %457 = math.exp %456 : vector<8x128xf32>
    %cst_124 = arith.constant 1.000000e+00 : f32
    %458 = vector.broadcast %cst_124 : f32 to vector<8x128xf32>
    %459 = arith.addf %458, %457 : vector<8x128xf32>
    %460 = arith.divf %458, %459 : vector<8x128xf32>
    %461 = vector.extract_strided_slice %454 {offsets = [0, 128], sizes = [8, 128], strides = [1, 1]} : vector<8x512xf32> to vector<8x128xf32>
    %462 = arith.negf %461 : vector<8x128xf32>
    %463 = math.exp %462 : vector<8x128xf32>
    %cst_125 = arith.constant 1.000000e+00 : f32
    %464 = vector.broadcast %cst_125 : f32 to vector<8x128xf32>
    %465 = arith.addf %464, %463 : vector<8x128xf32>
    %466 = arith.divf %464, %465 : vector<8x128xf32>
    %467 = vector.extract_strided_slice %454 {offsets = [0, 256], sizes = [8, 128], strides = [1, 1]} : vector<8x512xf32> to vector<8x128xf32>
    %468 = math.tanh %467 : vector<8x128xf32>
    %469 = vector.extract_strided_slice %454 {offsets = [0, 384], sizes = [8, 128], strides = [1, 1]} : vector<8x512xf32> to vector<8x128xf32>
    %470 = arith.negf %469 : vector<8x128xf32>
    %471 = math.exp %470 : vector<8x128xf32>
    %cst_126 = arith.constant 1.000000e+00 : f32
    %472 = vector.broadcast %cst_126 : f32 to vector<8x128xf32>
    %473 = arith.addf %472, %471 : vector<8x128xf32>
    %474 = arith.divf %472, %473 : vector<8x128xf32>
    %475 = arith.mulf %466, %444 : vector<8x128xf32>
    %476 = arith.mulf %460, %468 : vector<8x128xf32>
    %477 = arith.addf %475, %476 : vector<8x128xf32>
    %478 = math.tanh %477 : vector<8x128xf32>
    %479 = arith.mulf %474, %478 : vector<8x128xf32>
    %480 = arith.index_cast %450 : i32 to index
    %c0_127 = arith.constant 0 : index
    %481 = vector.load %arg13[%480, %c0_127] : memref<64x128xf32, #tpu.memory_space<vmem>>, vector<8x128xf32>
    tpu.vector_store %arg13[%480, %c0_127], %479 {strides = array<i32>} : memref<64x128xf32, #tpu.memory_space<vmem>>, vector<8x128xf32>,
    %c6_i32_128 = arith.constant 6 : i32
    %c8_i32_129 = arith.constant 8 : i32
    %482 = arith.muli %c6_i32_128, %c8_i32_129 : i32
    %483 = tpu.assume_multiple %482, 8 : i32
    %484 = arith.index_cast %483 : i32 to index
    %c0_130 = arith.constant 0 : index
    %485 = vector.load %arg14[%484, %c0_130] : memref<64x512xf32, #tpu.memory_space<vmem>>, vector<8x512xf32>
    %cst_131 = arith.constant dense<0.000000e+00> : vector<8x512xf32>
    %486 = tpu.matmul %479, %281, %cst_131 {dimension_numbers = #tpu.dot_dimension_numbers<[1], [0], [0], [1], [0, 0, 1, 1], [], []>} : vector<8x128xf32>, vector<128x512xf32>, vector<8x512xf32> -> vector<8x512xf32>
    %487 = arith.addf %485, %486 : vector<8x512xf32>
    %488 = vector.extract_strided_slice %487 {offsets = [0, 0], sizes = [8, 128], strides = [1, 1]} : vector<8x512xf32> to vector<8x128xf32>
    %489 = arith.negf %488 : vector<8x128xf32>
    %490 = math.exp %489 : vector<8x128xf32>
    %cst_132 = arith.constant 1.000000e+00 : f32
    %491 = vector.broadcast %cst_132 : f32 to vector<8x128xf32>
    %492 = arith.addf %491, %490 : vector<8x128xf32>
    %493 = arith.divf %491, %492 : vector<8x128xf32>
    %494 = vector.extract_strided_slice %487 {offsets = [0, 128], sizes = [8, 128], strides = [1, 1]} : vector<8x512xf32> to vector<8x128xf32>
    %495 = arith.negf %494 : vector<8x128xf32>
    %496 = math.exp %495 : vector<8x128xf32>
    %cst_133 = arith.constant 1.000000e+00 : f32
    %497 = vector.broadcast %cst_133 : f32 to vector<8x128xf32>
    %498 = arith.addf %497, %496 : vector<8x128xf32>
    %499 = arith.divf %497, %498 : vector<8x128xf32>
    %500 = vector.extract_strided_slice %487 {offsets = [0, 256], sizes = [8, 128], strides = [1, 1]} : vector<8x512xf32> to vector<8x128xf32>
    %501 = math.tanh %500 : vector<8x128xf32>
    %502 = vector.extract_strided_slice %487 {offsets = [0, 384], sizes = [8, 128], strides = [1, 1]} : vector<8x512xf32> to vector<8x128xf32>
    %503 = arith.negf %502 : vector<8x128xf32>
    %504 = math.exp %503 : vector<8x128xf32>
    %cst_134 = arith.constant 1.000000e+00 : f32
    %505 = vector.broadcast %cst_134 : f32 to vector<8x128xf32>
    %506 = arith.addf %505, %504 : vector<8x128xf32>
    %507 = arith.divf %505, %506 : vector<8x128xf32>
    %508 = arith.mulf %499, %477 : vector<8x128xf32>
    %509 = arith.mulf %493, %501 : vector<8x128xf32>
    %510 = arith.addf %508, %509 : vector<8x128xf32>
    %511 = math.tanh %510 : vector<8x128xf32>
    %512 = arith.mulf %507, %511 : vector<8x128xf32>
    %513 = arith.index_cast %483 : i32 to index
    %c0_135 = arith.constant 0 : index
    %514 = vector.load %arg13[%513, %c0_135] : memref<64x128xf32, #tpu.memory_space<vmem>>, vector<8x128xf32>
    tpu.vector_store %arg13[%513, %c0_135], %512 {strides = array<i32>} : memref<64x128xf32, #tpu.memory_space<vmem>>, vector<8x128xf32>,
    %c7_i32_136 = arith.constant 7 : i32
    %c8_i32_137 = arith.constant 8 : i32
    %515 = arith.muli %c7_i32_136, %c8_i32_137 : i32
    %516 = tpu.assume_multiple %515, 8 : i32
    %517 = arith.index_cast %516 : i32 to index
    %c0_138 = arith.constant 0 : index
    %518 = vector.load %arg14[%517, %c0_138] : memref<64x512xf32, #tpu.memory_space<vmem>>, vector<8x512xf32>
    %cst_139 = arith.constant dense<0.000000e+00> : vector<8x512xf32>
    %519 = tpu.matmul %512, %281, %cst_139 {dimension_numbers = #tpu.dot_dimension_numbers<[1], [0], [0], [1], [0, 0, 1, 1], [], []>} : vector<8x128xf32>, vector<128x512xf32>, vector<8x512xf32> -> vector<8x512xf32>
    %520 = arith.addf %518, %519 : vector<8x512xf32>
    %521 = vector.extract_strided_slice %520 {offsets = [0, 0], sizes = [8, 128], strides = [1, 1]} : vector<8x512xf32> to vector<8x128xf32>
    %522 = arith.negf %521 : vector<8x128xf32>
    %523 = math.exp %522 : vector<8x128xf32>
    %cst_140 = arith.constant 1.000000e+00 : f32
    %524 = vector.broadcast %cst_140 : f32 to vector<8x128xf32>
    %525 = arith.addf %524, %523 : vector<8x128xf32>
    %526 = arith.divf %524, %525 : vector<8x128xf32>
    %527 = vector.extract_strided_slice %520 {offsets = [0, 128], sizes = [8, 128], strides = [1, 1]} : vector<8x512xf32> to vector<8x128xf32>
    %528 = arith.negf %527 : vector<8x128xf32>
    %529 = math.exp %528 : vector<8x128xf32>
    %cst_141 = arith.constant 1.000000e+00 : f32
    %530 = vector.broadcast %cst_141 : f32 to vector<8x128xf32>
    %531 = arith.addf %530, %529 : vector<8x128xf32>
    %532 = arith.divf %530, %531 : vector<8x128xf32>
    %533 = vector.extract_strided_slice %520 {offsets = [0, 256], sizes = [8, 128], strides = [1, 1]} : vector<8x512xf32> to vector<8x128xf32>
    %534 = math.tanh %533 : vector<8x128xf32>
    %535 = vector.extract_strided_slice %520 {offsets = [0, 384], sizes = [8, 128], strides = [1, 1]} : vector<8x512xf32> to vector<8x128xf32>
    %536 = arith.negf %535 : vector<8x128xf32>
    %537 = math.exp %536 : vector<8x128xf32>
    %cst_142 = arith.constant 1.000000e+00 : f32
    %538 = vector.broadcast %cst_142 : f32 to vector<8x128xf32>
    %539 = arith.addf %538, %537 : vector<8x128xf32>
    %540 = arith.divf %538, %539 : vector<8x128xf32>
    %541 = arith.mulf %532, %510 : vector<8x128xf32>
    %542 = arith.mulf %526, %534 : vector<8x128xf32>
    %543 = arith.addf %541, %542 : vector<8x128xf32>
    %544 = math.tanh %543 : vector<8x128xf32>
    %545 = arith.mulf %540, %544 : vector<8x128xf32>
    %546 = arith.index_cast %516 : i32 to index
    %c0_143 = arith.constant 0 : index
    %547 = vector.load %arg13[%546, %c0_143] : memref<64x128xf32, #tpu.memory_space<vmem>>, vector<8x128xf32>
    tpu.vector_store %arg13[%546, %c0_143], %545 {strides = array<i32>} : memref<64x128xf32, #tpu.memory_space<vmem>>, vector<8x128xf32>,
    %c8_i32_144 = arith.constant 8 : i32
    %c0_145 = arith.constant 0 : index
    %c0_146 = arith.constant 0 : index
    %548 = vector.load %arg13[%c0_145, %c0_146] : memref<64x128xf32, #tpu.memory_space<vmem>>, vector<64x128xf32>
    %c0_147 = arith.constant 0 : index
    %c0_148 = arith.constant 0 : index
    %549 = vector.load %arg8[%c0_147, %c0_148] : memref<128x128xf32, #tpu.memory_space<vmem>>, vector<128x128xf32>
    %cst_149 = arith.constant dense<0.000000e+00> : vector<64x128xf32>
    %550 = tpu.matmul %548, %549, %cst_149 {dimension_numbers = #tpu.dot_dimension_numbers<[1], [0], [0], [1], [0, 0, 1, 1], [], []>} : vector<64x128xf32>, vector<128x128xf32>, vector<64x128xf32> -> vector<64x128xf32>
    %c0_150 = arith.constant 0 : index
    %c0_151 = arith.constant 0 : index
    %551 = vector.load %arg9[%c0_150, %c0_151] : memref<1x128xf32, #tpu.memory_space<vmem>>, vector<1x128xf32>
    %552 = vector.broadcast %551 : vector<1x128xf32> to vector<64x128xf32>
    %553 = arith.addf %550, %552 : vector<64x128xf32>
    %554 = math.tanh %553 : vector<64x128xf32>
    %c0_152 = arith.constant 0 : index
    %c0_153 = arith.constant 0 : index
    %555 = vector.load %arg10[%c0_152, %c0_153] : memref<128x128xf32, #tpu.memory_space<vmem>>, vector<128x128xf32>
    %cst_154 = arith.constant dense<0.000000e+00> : vector<64x128xf32>
    %556 = tpu.matmul %554, %555, %cst_154 {dimension_numbers = #tpu.dot_dimension_numbers<[1], [0], [0], [1], [0, 0, 1, 1], [], []>} : vector<64x128xf32>, vector<128x128xf32>, vector<64x128xf32> -> vector<64x128xf32>
    %c0_155 = arith.constant 0 : index
    %c0_156 = arith.constant 0 : index
    %557 = vector.load %arg11[%c0_155, %c0_156] : memref<1x128xf32, #tpu.memory_space<vmem>>, vector<1x128xf32>
    %558 = vector.broadcast %557 : vector<1x128xf32> to vector<64x128xf32>
    %559 = arith.addf %556, %558 : vector<64x128xf32>
    %c0_157 = arith.constant 0 : index
    %c0_158 = arith.constant 0 : index
    %560 = vector.load %arg12[%c0_157, %c0_158] : memref<64x128xf32, #tpu.memory_space<vmem>>, vector<64x128xf32>
    tpu.vector_store %arg12[%c0_157, %c0_158], %559 {strides = array<i32>} : memref<64x128xf32, #tpu.memory_space<vmem>>, vector<64x128xf32>,
    return
  }
  func.func @transform_0(%arg0: i32) -> (i32, i32) {
    %c0_i32 = arith.constant 0 : i32
    %c0_i32_0 = arith.constant 0 : i32
    %c0_i32_1 = arith.constant 0 : i32
    return %c0_i32, %c0_i32_0 : i32, i32
  }
  func.func @transform_1(%arg0: i32) -> (i32, i32) {
    %c0_i32 = arith.constant 0 : i32
    %c0_i32_0 = arith.constant 0 : i32
    %c0_i32_1 = arith.constant 0 : i32
    return %c0_i32, %c0_i32_0 : i32, i32
  }
  func.func @transform_2(%arg0: i32) -> (i32, i32) {
    %c0_i32 = arith.constant 0 : i32
    %c0_i32_0 = arith.constant 0 : i32
    %c0_i32_1 = arith.constant 0 : i32
    return %c0_i32, %c0_i32_0 : i32, i32
  }
  func.func @transform_3(%arg0: i32) -> (i32, i32) {
    %c0_i32 = arith.constant 0 : i32
    %c0_i32_0 = arith.constant 0 : i32
    %c0_i32_1 = arith.constant 0 : i32
    return %c0_i32, %c0_i32_0 : i32, i32
  }
  func.func @transform_4(%arg0: i32) -> (i32, i32) {
    %c0_i32 = arith.constant 0 : i32
    %c0_i32_0 = arith.constant 0 : i32
    %c0_i32_1 = arith.constant 0 : i32
    return %c0_i32, %c0_i32_0 : i32, i32
  }
  func.func @transform_5(%arg0: i32) -> (i32, i32) {
    %c0_i32 = arith.constant 0 : i32
    %c0_i32_0 = arith.constant 0 : i32
    %c0_i32_1 = arith.constant 0 : i32
    return %c0_i32, %c0_i32_0 : i32, i32
  }
  func.func @transform_6(%arg0: i32) -> (i32, i32) {
    %c0_i32 = arith.constant 0 : i32
    %c0_i32_0 = arith.constant 0 : i32
    %c0_i32_1 = arith.constant 0 : i32
    return %c0_i32, %c0_i32_0 : i32, i32
  }
  func.func @transform_7(%arg0: i32) -> (i32, i32) {
    %c0_i32 = arith.constant 0 : i32
    %c0_i32_0 = arith.constant 0 : i32
    %c0_i32_1 = arith.constant 0 : i32
    return %c0_i32, %c0_i32_0 : i32, i32
  }
  func.func @transform_8(%arg0: i32) -> (i32, i32) {
    %c0_i32 = arith.constant 0 : i32
    %c0_i32_0 = arith.constant 0 : i32
    %c0_i32_1 = arith.constant 0 : i32
    return %c0_i32, %c0_i32_0 : i32, i32
  }
  func.func @transform_9(%arg0: i32) -> (i32, i32) {
    %c0_i32 = arith.constant 0 : i32
    %c0_i32_0 = arith.constant 0 : i32
    %c0_i32_1 = arith.constant 0 : i32
    return %c0_i32, %c0_i32_0 : i32, i32
  }
  func.func @transform_10(%arg0: i32) -> (i32, i32) {
    %c0_i32 = arith.constant 0 : i32
    %c0_i32_0 = arith.constant 0 : i32
    %c0_i32_1 = arith.constant 0 : i32
    return %c0_i32, %c0_i32_0 : i32, i32
  }
  func.func @transform_11(%arg0: i32) -> (i32, i32) {
    %c0_i32 = arith.constant 0 : i32
    %c0_i32_0 = arith.constant 0 : i32
    %c0_i32_1 = arith.constant 0 : i32
    return %c0_i32, %c0_i32_0 : i32, i32
  }
}

</mosaic_0001>

<llo_original>
// kernel: tpu_custom_call.1
$region0: #{tpu_custom_call.1}
  #allocation0 [shape = 'u32[]', space=smem, size = 0x4, offset = 0x4, fixed_abs, tag = 'smem constant byte address 0x4 - core index']
  #allocation1 [shape = 'u32[144,128]{1,0:T(1,128)}', space=vmem, size = 0x12000, scoped, tag = 'internal scratch']
  #allocation2 [shape = 'f32[64,128]{1,0:T(8,128)}', space=vmem, size = 0x8000, scoped, tag = 'scratch operand']
  #allocation3 [shape = 'f32[64,512]{1,0:T(8,128)}', space=vmem, size = 0x20000, scoped, tag = 'scratch operand']
  %s0 = inlined_call_operand.hbm [shape: f32[64,128], index: 0, kind: input, shape index: {}]
  %s1 = inlined_call_operand.hbm [shape: f32[128,512], index: 1, kind: input, shape index: {}]
  %s2 = inlined_call_operand.hbm [shape: f32[128,512], index: 2, kind: input, shape index: {}]
  %s3 = inlined_call_operand.vmem [shape: f32[1,512], index: 3, kind: input, shape index: {}]
  %s4 = inlined_call_operand.hbm [shape: f32[128,512], index: 4, kind: input, shape index: {}]
  %s5 = inlined_call_operand.hbm [shape: f32[128,512], index: 5, kind: input, shape index: {}]
  %s6 = inlined_call_operand.vmem [shape: f32[1,512], index: 6, kind: input, shape index: {}]
  %s7 = inlined_call_operand.hbm [shape: f32[128,128], index: 7, kind: input, shape index: {}]
  %s8 = inlined_call_operand.vmem [shape: f32[1,128], index: 8, kind: input, shape index: {}]
  %s9 = inlined_call_operand.hbm [shape: f32[128,128], index: 9, kind: input, shape index: {}]
  %s10 = inlined_call_operand.vmem [shape: f32[1,128], index: 10, kind: input, shape index: {}]
  %s11 = inlined_call_operand.hbm [shape: f32[64,128], index: 11, kind: output, shape index: {}]
  %s12 = sld [smem:[#allocation0]]
  $region82: #{tpu_custom_call.1} parent=0
    _
  %s14 = ssub.s32 1, %s12
  %s15 = scalar_select 0, %s14, %s12
  $region1: #{tpu_custom_call.1} parent=0
    #allocation4 [shape = 'u8[32768]{0}', space=vmem, size = 0x8000, scoped, tag = 'input window, operand 0, single buffered']
    #allocation5 [shape = 's32[1]{0}', space=sflag, size = 0x4, scoped, tag = 'scoped memory for tpu_custom_call.1']
    #allocation6 [shape = 's32[1]{0}', space=sflag, size = 0x4, scoped, tag = 'scoped memory for tpu_custom_call.1']
    #allocation7 [shape = 'u8[262144]{0}', space=vmem, size = 0x40000, scoped, tag = 'input window, operand 1, single buffered']
    #allocation8 [shape = 's32[1]{0}', space=sflag, size = 0x4, scoped, tag = 'scoped memory for tpu_custom_call.1']
    #allocation9 [shape = 'u8[262144]{0}', space=vmem, size = 0x40000, scoped, tag = 'input window, operand 2, single buffered']
    #allocation10 [shape = 'u8[262144]{0}', space=vmem, size = 0x40000, scoped, tag = 'input window, operand 4, single buffered']
    #allocation11 [shape = 's32[1]{0}', space=sflag, size = 0x4, scoped, tag = 'scoped memory for tpu_custom_call.1']
    #allocation12 [shape = 'u8[262144]{0}', space=vmem, size = 0x40000, scoped, tag = 'input window, operand 5, single buffered']
    #allocation13 [shape = 'u8[65536]{0}', space=vmem, size = 0x10000, scoped, tag = 'input window, operand 7, single buffered']
    #allocation14 [shape = 's32[1]{0}', space=sflag, size = 0x4, scoped, tag = 'scoped memory for tpu_custom_call.1']
    #allocation15 [shape = 'u8[65536]{0}', space=vmem, size = 0x10000, scoped, tag = 'input window, operand 9, single buffered']
    #allocation16 [shape = 'u8[32768]{0}', space=vmem, size = 0x8000, scoped, tag = 'output window, operand 0, single buffered']
    %16 = vsyncpa [#allocation5], 0
    %17 = vsyncpa [#allocation8], 0
    %18 = vsyncpa [#allocation11], 0
    %19 = vsyncpa [#allocation14], 0
    %20 = vsyncpa [#allocation6], 0
    // Predicated region
    $region2: #{tpu_custom_call.1} parent=1 // pred_check
      _
    $region3: #{tpu_custom_call.1} parent=1 // pred_check_branch
      %22 = sbr.rel (0) target = $region5
    $region4: #{tpu_custom_call.1} parent=1 // pred_region
      %s24 = ssub.s32 1024, 1024
      %25 = vsyncadd [#allocation5], %s24
      %s26 = sshll.u32 [#allocation4], 4
      %s27 = int_to_ptr.vmem [resolvable:$true] %s26
      %32 = dma.hbm_to_vmem [thread:$0]  %s0, 1024, %s27, [#allocation5], 128, 128, 8
    $region5: #{tpu_custom_call.1} parent=1 // pred_fallthru
      _
    // Predicated region
    $region6: #{tpu_custom_call.1} parent=1 // pred_check
      _
    $region7: #{tpu_custom_call.1} parent=1 // pred_check_branch
      %34 = sbr.rel (0) target = $region9
    $region8: #{tpu_custom_call.1} parent=1 // pred_region
      %s36 = ssub.s32 8192, 8192
      %37 = vsyncadd [#allocation8], %s36
      %s38 = sshll.u32 [#allocation7], 4
      %s39 = int_to_ptr.vmem [resolvable:$true] %s38
      %44 = dma.hbm_to_vmem [thread:$0]  %s1, 8192, %s39, [#allocation8], 512, 512, 32
    $region9: #{tpu_custom_call.1} parent=1 // pred_fallthru
      _
    // Predicated region
    $region10: #{tpu_custom_call.1} parent=1 // pred_check
      _
    $region11: #{tpu_custom_call.1} parent=1 // pred_check_branch
      %46 = sbr.rel (0) target = $region13
    $region12: #{tpu_custom_call.1} parent=1 // pred_region
      %s48 = ssub.s32 8192, 8192
      %49 = vsyncadd [#allocation8], %s48
      %s50 = sshll.u32 [#allocation9], 4
      %s51 = int_to_ptr.vmem [resolvable:$true] %s50
      %56 = dma.hbm_to_vmem [thread:$0]  %s2, 8192, %s51, [#allocation8], 512, 512, 32
    $region13: #{tpu_custom_call.1} parent=1 // pred_fallthru
      _
    // Predicated region
    $region14: #{tpu_custom_call.1} parent=1 // pred_check
      _
    $region15: #{tpu_custom_call.1} parent=1 // pred_check_branch
      %58 = sbr.rel (0) target = $region17
    $region16: #{tpu_custom_call.1} parent=1 // pred_region
      _
    $region17: #{tpu_custom_call.1} parent=1 // pred_fallthru
      _
    // Predicated region
    $region18: #{tpu_custom_call.1} parent=1 // pred_check
      _
    $region19: #{tpu_custom_call.1} parent=1 // pred_check_branch
      %60 = sbr.rel (0) target = $region21
    $region20: #{tpu_custom_call.1} parent=1 // pred_region
      %s62 = ssub.s32 8192, 8192
      %63 = vsyncadd [#allocation11], %s62
      %s64 = sshll.u32 [#allocation10], 4
      %s65 = int_to_ptr.vmem [resolvable:$true] %s64
      %70 = dma.hbm_to_vmem [thread:$0]  %s4, 8192, %s65, [#allocation11], 512, 512, 32
    $region21: #{tpu_custom_call.1} parent=1 // pred_fallthru
      _
    // Predicated region
    $region22: #{tpu_custom_call.1} parent=1 // pred_check
      _
    $region23: #{tpu_custom_call.1} parent=1 // pred_check_branch
      %72 = sbr.rel (0) target = $region25
    $region24: #{tpu_custom_call.1} parent=1 // pred_region
      %s74 = ssub.s32 8192, 8192
      %75 = vsyncadd [#allocation11], %s74
      %s76 = sshll.u32 [#allocation12], 4
      %s77 = int_to_ptr.vmem [resolvable:$true] %s76
      %82 = dma.hbm_to_vmem [thread:$0]  %s5, 8192, %s77, [#allocation11], 512, 512, 32
    $region25: #{tpu_custom_call.1} parent=1 // pred_fallthru
      _
    // Predicated region
    $region26: #{tpu_custom_call.1} parent=1 // pred_check
      _
    $region27: #{tpu_custom_call.1} parent=1 // pred_check_branch
      %84 = sbr.rel (0) target = $region29
    $region28: #{tpu_custom_call.1} parent=1 // pred_region
      _
    $region29: #{tpu_custom_call.1} parent=1 // pred_fallthru
      _
    // Predicated region
    $region30: #{tpu_custom_call.1} parent=1 // pred_check
      _
    $region31: #{tpu_custom_call.1} parent=1 // pred_check_branch
      %86 = sbr.rel (0) target = $region33
    $region32: #{tpu_custom_call.1} parent=1 // pred_region
      %s88 = ssub.s32 2048, 2048
      %89 = vsyncadd [#allocation14], %s88
      %s90 = sshll.u32 [#allocation13], 4
      %s91 = int_to_ptr.vmem [resolvable:$true] %s90
      %96 = dma.hbm_to_vmem [thread:$0]  %s7, 2048, %s91, [#allocation14], 128, 128, 8
    $region33: #{tpu_custom_call.1} parent=1 // pred_fallthru
      _
    // Predicated region
    $region34: #{tpu_custom_call.1} parent=1 // pred_check
      _
    $region35: #{tpu_custom_call.1} parent=1 // pred_check_branch
      %98 = sbr.rel (0) target = $region37
    $region36: #{tpu_custom_call.1} parent=1 // pred_region
      _
    $region37: #{tpu_custom_call.1} parent=1 // pred_fallthru
      _
    // Predicated region
    $region38: #{tpu_custom_call.1} parent=1 // pred_check
      _
    $region39: #{tpu_custom_call.1} parent=1 // pred_check_branch
      %100 = sbr.rel (0) target = $region41
    $region40: #{tpu_custom_call.1} parent=1 // pred_region
      %s102 = ssub.s32 2048, 2048
      %103 = vsyncadd [#allocation14], %s102
      %s104 = sshll.u32 [#allocation15], 4
      %s105 = int_to_ptr.vmem [resolvable:$true] %s104
      %110 = dma.hbm_to_vmem [thread:$0]  %s9, 2048, %s105, [#allocation14], 128, 128, 8
    $region41: #{tpu_custom_call.1} parent=1 // pred_fallthru
      _
    // Predicated region
    $region42: #{tpu_custom_call.1} parent=1 // pred_check
      _
    $region43: #{tpu_custom_call.1} parent=1 // pred_check_branch
      %112 = sbr.rel (0) target = $region45
    $region44: #{tpu_custom_call.1} parent=1 // pred_region
      _
    $region45: #{tpu_custom_call.1} parent=1 // pred_fallthru
      _
    // Predicated region
    $region46: #{tpu_custom_call.1} parent=1 // pred_check
      _
    $region47: #{tpu_custom_call.1} parent=1 // pred_check_branch
      %114 = sbr.rel (0) target = $region49
    $region48: #{tpu_custom_call.1} parent=1 // pred_region
      %115 = dma.done [#allocation5], 1024
    $region49: #{tpu_custom_call.1} parent=1 // pred_fallthru
      _
    // Predicated region
    $region50: #{tpu_custom_call.1} parent=1 // pred_check
      _
    $region51: #{tpu_custom_call.1} parent=1 // pred_check_branch
      %117 = sbr.rel (0) target = $region53
    $region52: #{tpu_custom_call.1} parent=1 // pred_region
      %118 = dma.done [#allocation8], 8192
    $region53: #{tpu_custom_call.1} parent=1 // pred_fallthru
      _
    // Predicated region
    $region54: #{tpu_custom_call.1} parent=1 // pred_check
      _
    $region55: #{tpu_custom_call.1} parent=1 // pred_check_branch
      %120 = sbr.rel (0) target = $region57
    $region56: #{tpu_custom_call.1} parent=1 // pred_region
      %121 = dma.done [#allocation8], 8192
    $region57: #{tpu_custom_call.1} parent=1 // pred_fallthru
      _
    // Predicated region
    $region58: #{tpu_custom_call.1} parent=1 // pred_check
      _
    $region59: #{tpu_custom_call.1} parent=1 // pred_check_branch
      %123 = sbr.rel (0) target = $region61
    $region60: #{tpu_custom_call.1} parent=1 // pred_region
      %124 = dma.done [#allocation11], 8192
    $region61: #{tpu_custom_call.1} parent=1 // pred_fallthru
      _
    // Predicated region
    $region62: #{tpu_custom_call.1} parent=1 // pred_check
      _
    $region63: #{tpu_custom_call.1} parent=1 // pred_check_branch
      %126 = sbr.rel (0) target = $region65
    $region64: #{tpu_custom_call.1} parent=1 // pred_region
      %127 = dma.done [#allocation11], 8192
    $region65: #{tpu_custom_call.1} parent=1 // pred_fallthru
      _
    // Predicated region
    $region66: #{tpu_custom_call.1} parent=1 // pred_check
      _
    $region67: #{tpu_custom_call.1} parent=1 // pred_check_branch
      %129 = sbr.rel (0) target = $region69
    $region68: #{tpu_custom_call.1} parent=1 // pred_region
      %130 = dma.done [#allocation14], 2048
    $region69: #{tpu_custom_call.1} parent=1 // pred_fallthru
      _
    // Predicated region
    $region70: #{tpu_custom_call.1} parent=1 // pred_check
      _
    $region71: #{tpu_custom_call.1} parent=1 // pred_check_branch
      %132 = sbr.rel (0) target = $region73
    $region72: #{tpu_custom_call.1} parent=1 // pred_region
      %133 = dma.done [#allocation14], 2048
    $region73: #{tpu_custom_call.1} parent=1 // pred_fallthru
      _
    %v134 = vld [vmem:[#allocation4] sm:$0xff]
    %v135 = vld [vmem:[#allocation4 + $0x8] sm:$0xff]
    %v136 = vld [vmem:[#allocation4 + $0x10] sm:$0xff]
    %v137 = vld [vmem:[#allocation4 + $0x18] sm:$0xff]
    %v138 = vld [vmem:[#allocation4 + $0x20] sm:$0xff]
    %v139 = vld [vmem:[#allocation4 + $0x28] sm:$0xff]
    %v140 = vld [vmem:[#allocation4 + $0x30] sm:$0xff]
    %v141 = vld [vmem:[#allocation4 + $0x38] sm:$0xff]
    %v142 = vld [vmem:[#allocation7] sm:$0xff]
    %v143 = vld [vmem:[#allocation7 + $0x8] sm:$0xff]
    %v144 = vld [vmem:[#allocation7 + $0x10] sm:$0xff]
    %v145 = vld [vmem:[#allocation7 + $0x18] sm:$0xff]
    %v146 = vld [vmem:[#allocation7 + $0x20] sm:$0xff]
    %v147 = vld [vmem:[#allocation7 + $0x28] sm:$0xff]
    %v148 = vld [vmem:[#allocation7 + $0x30] sm:$0xff]
    %v149 = vld [vmem:[#allocation7 + $0x38] sm:$0xff]
    %v150 = vld [vmem:[#allocation7 + $0x40] sm:$0xff]
    %v151 = vld [vmem:[#allocation7 + $0x48] sm:$0xff]
    %v152 = vld [vmem:[#allocation7 + $0x50] sm:$0xff]
    %v153 = vld [vmem:[#allocation7 + $0x58] sm:$0xff]
    %v154 = vld [vmem:[#allocation7 + $0x60] sm:$0xff]
    %v155 = vld [vmem:[#allocation7 + $0x68] sm:$0xff]
    %v156 = vld [vmem:[#allocation7 + $0x70] sm:$0xff]
    %v157 = vld [vmem:[#allocation7 + $0x78] sm:$0xff]
    %v158 = vld [vmem:[#allocation7 + $0x80] sm:$0xff]
    %v159 = vld [vmem:[#allocation7 + $0x88] sm:$0xff]
    %v160 = vld [vmem:[#allocation7 + $0x90] sm:$0xff]
    %v161 = vld [vmem:[#allocation7 + $0x98] sm:$0xff]
    %v162 = vld [vmem:[#allocation7 + $0xa0] sm:$0xff]
    %v163 = vld [vmem:[#allocation7 + $0xa8] sm:$0xff]
    %v164 = vld [vmem:[#allocation7 + $0xb0] sm:$0xff]
    %v165 = vld [vmem:[#allocation7 + $0xb8] sm:$0xff]
    %v166 = vld [vmem:[#allocation7 + $0xc0] sm:$0xff]
    %v167 = vld [vmem:[#allocation7 + $0xc8] sm:$0xff]
    %v168 = vld [vmem:[#allocation7 + $0xd0] sm:$0xff]
    %v169 = vld [vmem:[#allocation7 + $0xd8] sm:$0xff]
    %v170 = vld [vmem:[#allocation7 + $0xe0] sm:$0xff]
    %v171 = vld [vmem:[#allocation7 + $0xe8] sm:$0xff]
    %v172 = vld [vmem:[#allocation7 + $0xf0] sm:$0xff]
    %v173 = vld [vmem:[#allocation7 + $0xf8] sm:$0xff]
    %v174 = vld [vmem:[#allocation7 + $0x100] sm:$0xff]
    %v175 = vld [vmem:[#allocation7 + $0x108] sm:$0xff]
    %v176 = vld [vmem:[#allocation7 + $0x110] sm:$0xff]
    %v177 = vld [vmem:[#allocation7 + $0x118] sm:$0xff]
    %v178 = vld [vmem:[#allocation7 + $0x120] sm:$0xff]
    %v179 = vld [vmem:[#allocation7 + $0x128] sm:$0xff]
    %v180 = vld [vmem:[#allocation7 + $0x130] sm:$0xff]
    %v181 = vld [vmem:[#allocation7 + $0x138] sm:$0xff]
    %v182 = vld [vmem:[#allocation7 + $0x140] sm:$0xff]
    %v183 = vld [vmem:[#allocation7 + $0x148] sm:$0xff]
    %v184 = vld [vmem:[#allocation7 + $0x150] sm:$0xff]
    %v185 = vld [vmem:[#allocation7 + $0x158] sm:$0xff]
    %v186 = vld [vmem:[#allocation7 + $0x160] sm:$0xff]
    %v187 = vld [vmem:[#allocation7 + $0x168] sm:$0xff]
    %v188 = vld [vmem:[#allocation7 + $0x170] sm:$0xff]
    %v189 = vld [vmem:[#allocation7 + $0x178] sm:$0xff]
    %v190 = vld [vmem:[#allocation7 + $0x180] sm:$0xff]
    %v191 = vld [vmem:[#allocation7 + $0x188] sm:$0xff]
    %v192 = vld [vmem:[#allocation7 + $0x190] sm:$0xff]
    %v193 = vld [vmem:[#allocation7 + $0x198] sm:$0xff]
    %v194 = vld [vmem:[#allocation7 + $0x1a0] sm:$0xff]
    %v195 = vld [vmem:[#allocation7 + $0x1a8] sm:$0xff]
    %v196 = vld [vmem:[#allocation7 + $0x1b0] sm:$0xff]
    %v197 = vld [vmem:[#allocation7 + $0x1b8] sm:$0xff]
    %v198 = vld [vmem:[#allocation7 + $0x1c0] sm:$0xff]
    %v199 = vld [vmem:[#allocation7 + $0x1c8] sm:$0xff]
    %v200 = vld [vmem:[#allocation7 + $0x1d0] sm:$0xff]
    %v201 = vld [vmem:[#allocation7 + $0x1d8] sm:$0xff]
    %v202 = vld [vmem:[#allocation7 + $0x1e0] sm:$0xff]
    %v203 = vld [vmem:[#allocation7 + $0x1e8] sm:$0xff]
    %v204 = vld [vmem:[#allocation7 + $0x1f0] sm:$0xff]
    %v205 = vld [vmem:[#allocation7 + $0x1f8] sm:$0xff]
    %v206 = vld [vmem:[%s3] sm:$0xf]
    %v208 = vlaneseq
    %v209 = vshrl.u32 %v208, 7
    %v210 = vsub.s32 0, %v209
    %v211 = vrot.slane %v206, %v210
    %v212 = vlaneseq
    %v213 = vshrl.u32 %v212, 7
    %v214 = vsub.s32 1, %v213
    %v215 = vrot.slane %v206, %v214
    %v216 = vlaneseq
    %v217 = vshrl.u32 %v216, 7
    %v218 = vsub.s32 2, %v217
    %v219 = vrot.slane %v206, %v218
    %v220 = vlaneseq
    %v221 = vshrl.u32 %v220, 7
    %v222 = vsub.s32 3, %v221
    %v223 = vrot.slane %v206, %v222
    %228 = vmatprep.subr.mxu0 %v203
    %229 = vmatpush1.msra.mxu0 %v202
    %230 = vmatprep.subr.mxu0 %v199
    %231 = vmatpush1.msra.mxu0 %v198
    %232 = vmatprep.subr.mxu0 %v195
    %233 = vmatpush1.msra.mxu0 %v194
    %234 = vmatprep.subr.mxu0 %v191
    %235 = vmatpush1.msra.mxu0 %v190
    %236 = vmatprep.subr.mxu0 %v187
    %237 = vmatpush1.msra.mxu0 %v186
    %238 = vmatprep.subr.mxu0 %v183
    %239 = vmatpush1.msra.mxu0 %v182
    %240 = vmatprep.subr.mxu0 %v179
    %241 = vmatpush1.msra.mxu0 %v178
    %242 = vmatprep.subr.mxu0 %v175
    %243 = vmatpush1.msra.mxu0 %v174
    %244 = vmatprep.subr.mxu0 %v171
    %245 = vmatpush1.msra.mxu0 %v170
    %246 = vmatprep.subr.mxu0 %v167
    %247 = vmatpush1.msra.mxu0 %v166
    %248 = vmatprep.subr.mxu0 %v163
    %249 = vmatpush1.msra.mxu0 %v162
    %250 = vmatprep.subr.mxu0 %v159
    %251 = vmatpush1.msra.mxu0 %v158
    %252 = vmatprep.subr.mxu0 %v155
    %253 = vmatpush1.msra.mxu0 %v154
    %254 = vmatprep.subr.mxu0 %v151
    %255 = vmatpush1.msra.mxu0 %v150
    %256 = vmatprep.subr.mxu0 %v147
    %257 = vmatpush1.msra.mxu0 %v146
    %258 = vmatprep.subr.mxu0 %v143
    %259 = vmatpush1.msra.mxu0 %v142
    %260 = vmatprep.subr.mxu0 0.0
    %261 = vmatpush2.msra.mxu0 0.0
    %262 = vmatprep.subr.mxu0 0.0
    %263 = vmatpush2.msra.mxu0 0.0
    %264 = vmatprep.subr.mxu0 0.0
    %265 = vmatpush2.msra.mxu0 0.0
    %266 = vmatprep.subr.mxu0 0.0
    %267 = vmatpush2.msra.mxu0 0.0
    %268 = vmatprep.subr.mxu0 0.0
    %269 = vmatpush2.msra.mxu0 0.0
    %270 = vmatprep.subr.mxu0 0.0
    %271 = vmatpush2.msra.mxu0 0.0
    %272 = vmatprep.subr.mxu0 0.0
    %273 = vmatpush2.msra.mxu0 0.0
    %274 = vmatprep.subr.mxu0 0.0
    %275 = vmatpush2.msra.mxu0 0.0
    %276 = vmatprep.subr.mxu0 0.0
    %277 = vmatpush2.msra.mxu0 0.0
    %278 = vmatprep.subr.mxu0 0.0
    %279 = vmatpush2.msra.mxu0 0.0
    %280 = vmatprep.subr.mxu0 0.0
    %281 = vmatpush2.msra.mxu0 0.0
    %282 = vmatprep.subr.mxu0 0.0
    %283 = vmatpush2.msra.mxu0 0.0
    %284 = vmatprep.subr.mxu0 0.0
    %285 = vmatpush2.msra.mxu0 0.0
    %286 = vmatprep.subr.mxu0 0.0
    %287 = vmatpush2.msra.mxu0 0.0
    %288 = vmatprep.subr.mxu0 0.0
    %289 = vmatpush2.msra.mxu0 0.0
    %290 = vmatprep.subr.mxu0 0.0
    %291 = vmatpush2.msra.mxu0 0.0
    %292 = vmatprep.mubr.f32.mxu0 0.0
    %293 = vmatmul.mubr.f32.gmra.mxu0 %v134
    %v294 = vpop.f32.mrf.mxu0
    %v295 = vadd.f32 %v211, %v294
    %v296 = vpop.f32.mrf.mxu0
    %v297 = vadd.f32 %v215, %v296
    %298 = vmatprep.mubr.f32.mxu0 0.0
    %299 = vmatmul.mubr.f32.gmra.mxu0 %v135
    %v300 = vpop.f32.mrf.mxu0
    %v301 = vadd.f32 %v211, %v300
    %v302 = vpop.f32.mrf.mxu0
    %v303 = vadd.f32 %v215, %v302
    %304 = vmatprep.mubr.f32.mxu0 0.0
    %305 = vmatmul.mubr.f32.gmra.mxu0 %v136
    %v306 = vpop.f32.mrf.mxu0
    %v307 = vadd.f32 %v211, %v306
    %v308 = vpop.f32.mrf.mxu0
    %v309 = vadd.f32 %v215, %v308
    %310 = vmatprep.mubr.f32.mxu0 0.0
    %311 = vmatmul.mubr.f32.gmra.mxu0 %v137
    %v312 = vpop.f32.mrf.mxu0
    %v313 = vadd.f32 %v211, %v312
    %v314 = vpop.f32.mrf.mxu0
    %v315 = vadd.f32 %v215, %v314
    %316 = vmatprep.mubr.f32.mxu0 0.0
    %317 = vmatmul.mubr.f32.gmra.mxu0 %v138
    %v318 = vpop.f32.mrf.mxu0
    %v319 = vadd.f32 %v211, %v318
    %v320 = vpop.f32.mrf.mxu0
    %v321 = vadd.f32 %v215, %v320
    %322 = vmatprep.mubr.f32.mxu0 0.0
    %323 = vmatmul.mubr.f32.gmra.mxu0 %v139
    %v324 = vpop.f32.mrf.mxu0
    %v325 = vadd.f32 %v211, %v324
    %v326 = vpop.f32.mrf.mxu0
    %v327 = vadd.f32 %v215, %v326
    %328 = vmatprep.mubr.f32.mxu0 0.0
    %329 = vmatmul.mubr.f32.gmra.mxu0 %v140
    %v330 = vpop.f32.mrf.mxu0
    %v331 = vadd.f32 %v211, %v330
    %v332 = vpop.f32.mrf.mxu0
    %v333 = vadd.f32 %v215, %v332
    %334 = vmatprep.mubr.f32.mxu0 0.0
    %335 = vmatmul.mubr.f32.gmra.mxu0 %v141
    %v336 = vpop.f32.mrf.mxu0
    %v337 = vadd.f32 %v211, %v336
    %v338 = vpop.f32.mrf.mxu0
    %v339 = vadd.f32 %v215, %v338
    %340 = vdwg.mxu0
    %341 = vmatprep.subr.mxu0 %v205
    %342 = vmatpush1.msra.mxu0 %v204
    %343 = vmatprep.subr.mxu0 %v201
    %344 = vmatpush1.msra.mxu0 %v200
    %345 = vmatprep.subr.mxu0 %v197
    %346 = vmatpush1.msra.mxu0 %v196
    %347 = vmatprep.subr.mxu0 %v193
    %348 = vmatpush1.msra.mxu0 %v192
    %349 = vmatprep.subr.mxu0 %v189
    %350 = vmatpush1.msra.mxu0 %v188
    %351 = vmatprep.subr.mxu0 %v185
    %352 = vmatpush1.msra.mxu0 %v184
    %353 = vmatprep.subr.mxu0 %v181
    %354 = vmatpush1.msra.mxu0 %v180
    %355 = vmatprep.subr.mxu0 %v177
    %356 = vmatpush1.msra.mxu0 %v176
    %357 = vmatprep.subr.mxu0 %v173
    %358 = vmatpush1.msra.mxu0 %v172
    %359 = vmatprep.subr.mxu0 %v169
    %360 = vmatpush1.msra.mxu0 %v168
    %361 = vmatprep.subr.mxu0 %v165
    %362 = vmatpush1.msra.mxu0 %v164
    %363 = vmatprep.subr.mxu0 %v161
    %364 = vmatpush1.msra.mxu0 %v160
    %365 = vmatprep.subr.mxu0 %v157
    %366 = vmatpush1.msra.mxu0 %v156
    %367 = vmatprep.subr.mxu0 %v153
    %368 = vmatpush1.msra.mxu0 %v152
    %369 = vmatprep.subr.mxu0 %v149
    %370 = vmatpush1.msra.mxu0 %v148
    %371 = vmatprep.subr.mxu0 %v145
    %372 = vmatpush1.msra.mxu0 %v144
    %373 = vmatprep.subr.mxu0 0.0
    %374 = vmatpush2.msra.mxu0 0.0
    %375 = vmatprep.subr.mxu0 0.0
    %376 = vmatpush2.msra.mxu0 0.0
    %377 = vmatprep.subr.mxu0 0.0
    %378 = vmatpush2.msra.mxu0 0.0
    %379 = vmatprep.subr.mxu0 0.0
    %380 = vmatpush2.msra.mxu0 0.0
    %381 = vmatprep.subr.mxu0 0.0
    %382 = vmatpush2.msra.mxu0 0.0
    %383 = vmatprep.subr.mxu0 0.0
    %384 = vmatpush2.msra.mxu0 0.0
    %385 = vmatprep.subr.mxu0 0.0
    %386 = vmatpush2.msra.mxu0 0.0
    %387 = vmatprep.subr.mxu0 0.0
    %388 = vmatpush2.msra.mxu0 0.0
    %389 = vmatprep.subr.mxu0 0.0
    %390 = vmatpush2.msra.mxu0 0.0
    %391 = vmatprep.subr.mxu0 0.0
    %392 = vmatpush2.msra.mxu0 0.0
    %393 = vmatprep.subr.mxu0 0.0
    %394 = vmatpush2.msra.mxu0 0.0
    %395 = vmatprep.subr.mxu0 0.0
    %396 = vmatpush2.msra.mxu0 0.0
    %397 = vmatprep.subr.mxu0 0.0
    %398 = vmatpush2.msra.mxu0 0.0
    %399 = vmatprep.subr.mxu0 0.0
    %400 = vmatpush2.msra.mxu0 0.0
    %401 = vmatprep.subr.mxu0 0.0
    %402 = vmatpush2.msra.mxu0 0.0
    %403 = vmatprep.subr.mxu0 0.0
    %404 = vmatpush2.msra.mxu0 0.0
    %405 = vmatprep.mubr.f32.mxu0 0.0
    %406 = vmatmul.mubr.f32.gmra.mxu0 %v134
    %v407 = vpop.f32.mrf.mxu0
    %v408 = vadd.f32 %v219, %v407
    %v409 = vpop.f32.mrf.mxu0
    %v410 = vadd.f32 %v223, %v409
    %411 = vmatprep.mubr.f32.mxu0 0.0
    %412 = vmatmul.mubr.f32.gmra.mxu0 %v135
    %v413 = vpop.f32.mrf.mxu0
    %v414 = vadd.f32 %v219, %v413
    %v415 = vpop.f32.mrf.mxu0
    %v416 = vadd.f32 %v223, %v415
    %417 = vmatprep.mubr.f32.mxu0 0.0
    %418 = vmatmul.mubr.f32.gmra.mxu0 %v136
    %v419 = vpop.f32.mrf.mxu0
    %v420 = vadd.f32 %v219, %v419
    %v421 = vpop.f32.mrf.mxu0
    %v422 = vadd.f32 %v223, %v421
    %423 = vmatprep.mubr.f32.mxu0 0.0
    %424 = vmatmul.mubr.f32.gmra.mxu0 %v137
    %v425 = vpop.f32.mrf.mxu0
    %v426 = vadd.f32 %v219, %v425
    %v427 = vpop.f32.mrf.mxu0
    %v428 = vadd.f32 %v223, %v427
    %429 = vmatprep.mubr.f32.mxu0 0.0
    %430 = vmatmul.mubr.f32.gmra.mxu0 %v138
    %v431 = vpop.f32.mrf.mxu0
    %v432 = vadd.f32 %v219, %v431
    %v433 = vpop.f32.mrf.mxu0
    %v434 = vadd.f32 %v223, %v433
    %435 = vmatprep.mubr.f32.mxu0 0.0
    %436 = vmatmul.mubr.f32.gmra.mxu0 %v139
    %v437 = vpop.f32.mrf.mxu0
    %v438 = vadd.f32 %v219, %v437
    %v439 = vpop.f32.mrf.mxu0
    %v440 = vadd.f32 %v223, %v439
    %441 = vmatprep.mubr.f32.mxu0 0.0
    %442 = vmatmul.mubr.f32.gmra.mxu0 %v140
    %v443 = vpop.f32.mrf.mxu0
    %v444 = vadd.f32 %v219, %v443
    %v445 = vpop.f32.mrf.mxu0
    %v446 = vadd.f32 %v223, %v445
    %447 = vmatprep.mubr.f32.mxu0 0.0
    %448 = vmatmul.mubr.f32.gmra.mxu0 %v141
    %v449 = vpop.f32.mrf.mxu0
    %v450 = vadd.f32 %v219, %v449
    %v451 = vpop.f32.mrf.mxu0
    %v452 = vadd.f32 %v223, %v451
    %453 = vdwg.mxu0
    %454 = vst [vmem:[#allocation3] sm:$0xff] %v295
    %455 = vst [vmem:[#allocation3 + $0x8] sm:$0xff] %v297
    %456 = vst [vmem:[#allocation3 + $0x10] sm:$0xff] %v408
    %457 = vst [vmem:[#allocation3 + $0x18] sm:$0xff] %v410
    %458 = vst [vmem:[#allocation3 + $0x20] sm:$0xff] %v301
    %459 = vst [vmem:[#allocation3 + $0x28] sm:$0xff] %v303
    %460 = vst [vmem:[#allocation3 + $0x30] sm:$0xff] %v414
    %461 = vst [vmem:[#allocation3 + $0x38] sm:$0xff] %v416
    %462 = vst [vmem:[#allocation3 + $0x40] sm:$0xff] %v307
    %463 = vst [vmem:[#allocation3 + $0x48] sm:$0xff] %v309
    %464 = vst [vmem:[#allocation3 + $0x50] sm:$0xff] %v420
    %465 = vst [vmem:[#allocation3 + $0x58] sm:$0xff] %v422
    %466 = vst [vmem:[#allocation3 + $0x60] sm:$0xff] %v313
    %467 = vst [vmem:[#allocation3 + $0x68] sm:$0xff] %v315
    %468 = vst [vmem:[#allocation3 + $0x70] sm:$0xff] %v426
    %469 = vst [vmem:[#allocation3 + $0x78] sm:$0xff] %v428
    %470 = vst [vmem:[#allocation3 + $0x80] sm:$0xff] %v319
    %471 = vst [vmem:[#allocation3 + $0x88] sm:$0xff] %v321
    %472 = vst [vmem:[#allocation3 + $0x90] sm:$0xff] %v432
    %473 = vst [vmem:[#allocation3 + $0x98] sm:$0xff] %v434
    %474 = vst [vmem:[#allocation3 + $0xa0] sm:$0xff] %v325
    %475 = vst [vmem:[#allocation3 + $0xa8] sm:$0xff] %v327
    %476 = vst [vmem:[#allocation3 + $0xb0] sm:$0xff] %v438
    %477 = vst [vmem:[#allocation3 + $0xb8] sm:$0xff] %v440
    %478 = vst [vmem:[#allocation3 + $0xc0] sm:$0xff] %v331
    %479 = vst [vmem:[#allocation3 + $0xc8] sm:$0xff] %v333
    %480 = vst [vmem:[#allocation3 + $0xd0] sm:$0xff] %v444
    %481 = vst [vmem:[#allocation3 + $0xd8] sm:$0xff] %v446
    %482 = vst [vmem:[#allocation3 + $0xe0] sm:$0xff] %v337
    %483 = vst [vmem:[#allocation3 + $0xe8] sm:$0xff] %v339
    %484 = vst [vmem:[#allocation3 + $0xf0] sm:$0xff] %v450
    %485 = vst [vmem:[#allocation3 + $0xf8] sm:$0xff] %v452
    %v486 = vld [vmem:[#allocation9] sm:$0xff]
    %v487 = vld [vmem:[#allocation9 + $0x8] sm:$0xff]
    %v488 = vld [vmem:[#allocation9 + $0x10] sm:$0xff]
    %v489 = vld [vmem:[#allocation9 + $0x18] sm:$0xff]
    %v490 = vld [vmem:[#allocation9 + $0x20] sm:$0xff]
    %v491 = vld [vmem:[#allocation9 + $0x28] sm:$0xff]
    %v492 = vld [vmem:[#allocation9 + $0x30] sm:$0xff]
    %v493 = vld [vmem:[#allocation9 + $0x38] sm:$0xff]
    %v494 = vld [vmem:[#allocation9 + $0x40] sm:$0xff]
    %v495 = vld [vmem:[#allocation9 + $0x48] sm:$0xff]
    %v496 = vld [vmem:[#allocation9 + $0x50] sm:$0xff]
    %v497 = vld [vmem:[#allocation9 + $0x58] sm:$0xff]
    %v498 = vld [vmem:[#allocation9 + $0x60] sm:$0xff]
    %v499 = vld [vmem:[#allocation9 + $0x68] sm:$0xff]
    %v500 = vld [vmem:[#allocation9 + $0x70] sm:$0xff]
    %v501 = vld [vmem:[#allocation9 + $0x78] sm:$0xff]
    %v502 = vld [vmem:[#allocation9 + $0x80] sm:$0xff]
    %v503 = vld [vmem:[#allocation9 + $0x88] sm:$0xff]
    %v504 = vld [vmem:[#allocation9 + $0x90] sm:$0xff]
    %v505 = vld [vmem:[#allocation9 + $0x98] sm:$0xff]
    %v506 = vld [vmem:[#allocation9 + $0xa0] sm:$0xff]
    %v507 = vld [vmem:[#allocation9 + $0xa8] sm:$0xff]
    %v508 = vld [vmem:[#allocation9 + $0xb0] sm:$0xff]
    %v509 = vld [vmem:[#allocation9 + $0xb8] sm:$0xff]
    %v510 = vld [vmem:[#allocation9 + $0xc0] sm:$0xff]
    %v511 = vld [vmem:[#allocation9 + $0xc8] sm:$0xff]
    %v512 = vld [vmem:[#allocation9 + $0xd0] sm:$0xff]
    %v513 = vld [vmem:[#allocation9 + $0xd8] sm:$0xff]
    %v514 = vld [vmem:[#allocation9 + $0xe0] sm:$0xff]
    %v515 = vld [vmem:[#allocation9 + $0xe8] sm:$0xff]
    %v516 = vld [vmem:[#allocation9 + $0xf0] sm:$0xff]
    %v517 = vld [vmem:[#allocation9 + $0xf8] sm:$0xff]
    %v518 = vld [vmem:[#allocation9 + $0x100] sm:$0xff]
    %v519 = vld [vmem:[#allocation9 + $0x108] sm:$0xff]
    %v520 = vld [vmem:[#allocation9 + $0x110] sm:$0xff]
    %v521 = vld [vmem:[#allocation9 + $0x118] sm:$0xff]
    %v522 = vld [vmem:[#allocation9 + $0x120] sm:$0xff]
    %v523 = vld [vmem:[#allocation9 + $0x128] sm:$0xff]
    %v524 = vld [vmem:[#allocation9 + $0x130] sm:$0xff]
    %v525 = vld [vmem:[#allocation9 + $0x138] sm:$0xff]
    %v526 = vld [vmem:[#allocation9 + $0x140] sm:$0xff]
    %v527 = vld [vmem:[#allocation9 + $0x148] sm:$0xff]
    %v528 = vld [vmem:[#allocation9 + $0x150] sm:$0xff]
    %v529 = vld [vmem:[#allocation9 + $0x158] sm:$0xff]
    %v530 = vld [vmem:[#allocation9 + $0x160] sm:$0xff]
    %v531 = vld [vmem:[#allocation9 + $0x168] sm:$0xff]
    %v532 = vld [vmem:[#allocation9 + $0x170] sm:$0xff]
    %v533 = vld [vmem:[#allocation9 + $0x178] sm:$0xff]
    %v534 = vld [vmem:[#allocation9 + $0x180] sm:$0xff]
    %v535 = vld [vmem:[#allocation9 + $0x188] sm:$0xff]
    %v536 = vld [vmem:[#allocation9 + $0x190] sm:$0xff]
    %v537 = vld [vmem:[#allocation9 + $0x198] sm:$0xff]
    %v538 = vld [vmem:[#allocation9 + $0x1a0] sm:$0xff]
    %v539 = vld [vmem:[#allocation9 + $0x1a8] sm:$0xff]
    %v540 = vld [vmem:[#allocation9 + $0x1b0] sm:$0xff]
    %v541 = vld [vmem:[#allocation9 + $0x1b8] sm:$0xff]
    %v542 = vld [vmem:[#allocation9 + $0x1c0] sm:$0xff]
    %v543 = vld [vmem:[#allocation9 + $0x1c8] sm:$0xff]
    %v544 = vld [vmem:[#allocation9 + $0x1d0] sm:$0xff]
    %v545 = vld [vmem:[#allocation9 + $0x1d8] sm:$0xff]
    %v546 = vld [vmem:[#allocation9 + $0x1e0] sm:$0xff]
    %v547 = vld [vmem:[#allocation9 + $0x1e8] sm:$0xff]
    %v548 = vld [vmem:[#allocation9 + $0x1f0] sm:$0xff]
    %v549 = vld [vmem:[#allocation9 + $0x1f8] sm:$0xff]
    %s550 = smul.u32 0, 4
    %s551 = smul.addr %s550, 8
    %s552 = scalar_lea.vmem [#allocation3], %s551
    %v553 = vld [vmem:[%s552] sm:$0xff]
    %v554 = vld [vmem:[%s552 + $0x8] sm:$0xff]
    %v555 = vld [vmem:[%s552 + $0x10] sm:$0xff]
    %v556 = vld [vmem:[%s552 + $0x18] sm:$0xff]
    %557 = vmatprep.subr.mxu0 %v547
    %558 = vmatpush1.msra.mxu0 %v546
    %559 = vmatprep.subr.mxu0 %v543
    %560 = vmatpush1.msra.mxu0 %v542
    %561 = vmatprep.subr.mxu0 %v539
    %562 = vmatpush1.msra.mxu0 %v538
    %563 = vmatprep.subr.mxu0 %v535
    %564 = vmatpush1.msra.mxu0 %v534
    %565 = vmatprep.subr.mxu0 %v531
    %566 = vmatpush1.msra.mxu0 %v530
    %567 = vmatprep.subr.mxu0 %v527
    %568 = vmatpush1.msra.mxu0 %v526
    %569 = vmatprep.subr.mxu0 %v523
    %570 = vmatpush1.msra.mxu0 %v522
    %571 = vmatprep.subr.mxu0 %v519
    %572 = vmatpush1.msra.mxu0 %v518
    %573 = vmatprep.subr.mxu0 %v515
    %574 = vmatpush1.msra.mxu0 %v514
    %575 = vmatprep.subr.mxu0 %v511
    %576 = vmatpush1.msra.mxu0 %v510
    %577 = vmatprep.subr.mxu0 %v507
    %578 = vmatpush1.msra.mxu0 %v506
    %579 = vmatprep.subr.mxu0 %v503
    %580 = vmatpush1.msra.mxu0 %v502
    %581 = vmatprep.subr.mxu0 %v499
    %582 = vmatpush1.msra.mxu0 %v498
    %583 = vmatprep.subr.mxu0 %v495
    %584 = vmatpush1.msra.mxu0 %v494
    %585 = vmatprep.subr.mxu0 %v491
    %586 = vmatpush1.msra.mxu0 %v490
    %587 = vmatprep.subr.mxu0 %v487
    %588 = vmatpush1.msra.mxu0 %v486
    %589 = vmatprep.subr.mxu0 0.0
    %590 = vmatpush2.msra.mxu0 0.0
    %591 = vmatprep.subr.mxu0 0.0
    %592 = vmatpush2.msra.mxu0 0.0
    %593 = vmatprep.subr.mxu0 0.0
    %594 = vmatpush2.msra.mxu0 0.0
    %595 = vmatprep.subr.mxu0 0.0
    %596 = vmatpush2.msra.mxu0 0.0
    %597 = vmatprep.subr.mxu0 0.0
    %598 = vmatpush2.msra.mxu0 0.0
    %599 = vmatprep.subr.mxu0 0.0
    %600 = vmatpush2.msra.mxu0 0.0
    %601 = vmatprep.subr.mxu0 0.0
    %602 = vmatpush2.msra.mxu0 0.0
    %603 = vmatprep.subr.mxu0 0.0
    %604 = vmatpush2.msra.mxu0 0.0
    %605 = vmatprep.subr.mxu0 0.0
    %606 = vmatpush2.msra.mxu0 0.0
    %607 = vmatprep.subr.mxu0 0.0
    %608 = vmatpush2.msra.mxu0 0.0
    %609 = vmatprep.subr.mxu0 0.0
    %610 = vmatpush2.msra.mxu0 0.0
    %611 = vmatprep.subr.mxu0 0.0
    %612 = vmatpush2.msra.mxu0 0.0
    %613 = vmatprep.subr.mxu0 0.0
    %614 = vmatpush2.msra.mxu0 0.0
    %615 = vmatprep.subr.mxu0 0.0
    %616 = vmatpush2.msra.mxu0 0.0
    %617 = vmatprep.subr.mxu0 0.0
    %618 = vmatpush2.msra.mxu0 0.0
    %619 = vmatprep.subr.mxu0 0.0
    %620 = vmatpush2.msra.mxu0 0.0
    %621 = vmatprep.mubr.f32.mxu0 0.0
    %622 = vmatmul.mubr.f32.gmra.mxu0 0.0
    %v623 = vpop.f32.mrf.mxu0
    %v624 = vadd.f32 0.0, %v623
    %v625 = vpop.f32.mrf.mxu0
    %v626 = vadd.f32 0.0, %v625
    %627 = vdwg.mxu0
    %628 = vmatprep.subr.mxu0 %v549
    %629 = vmatpush1.msra.mxu0 %v548
    %630 = vmatprep.subr.mxu0 %v545
    %631 = vmatpush1.msra.mxu0 %v544
    %632 = vmatprep.subr.mxu0 %v541
    %633 = vmatpush1.msra.mxu0 %v540
    %634 = vmatprep.subr.mxu0 %v537
    %635 = vmatpush1.msra.mxu0 %v536
    %636 = vmatprep.subr.mxu0 %v533
    %637 = vmatpush1.msra.mxu0 %v532
    %638 = vmatprep.subr.mxu0 %v529
    %639 = vmatpush1.msra.mxu0 %v528
    %640 = vmatprep.subr.mxu0 %v525
    %641 = vmatpush1.msra.mxu0 %v524
    %642 = vmatprep.subr.mxu0 %v521
    %643 = vmatpush1.msra.mxu0 %v520
    %644 = vmatprep.subr.mxu0 %v517
    %645 = vmatpush1.msra.mxu0 %v516
    %646 = vmatprep.subr.mxu0 %v513
    %647 = vmatpush1.msra.mxu0 %v512
    %648 = vmatprep.subr.mxu0 %v509
    %649 = vmatpush1.msra.mxu0 %v508
    %650 = vmatprep.subr.mxu0 %v505
    %651 = vmatpush1.msra.mxu0 %v504
    %652 = vmatprep.subr.mxu0 %v501
    %653 = vmatpush1.msra.mxu0 %v500
    %654 = vmatprep.subr.mxu0 %v497
    %655 = vmatpush1.msra.mxu0 %v496
    %656 = vmatprep.subr.mxu0 %v493
    %657 = vmatpush1.msra.mxu0 %v492
    %658 = vmatprep.subr.mxu0 %v489
    %659 = vmatpush1.msra.mxu0 %v488
    %660 = vmatprep.subr.mxu0 0.0
    %661 = vmatpush2.msra.mxu0 0.0
    %662 = vmatprep.subr.mxu0 0.0
    %663 = vmatpush2.msra.mxu0 0.0
    %664 = vmatprep.subr.mxu0 0.0
    %665 = vmatpush2.msra.mxu0 0.0
    %666 = vmatprep.subr.mxu0 0.0
    %667 = vmatpush2.msra.mxu0 0.0
    %668 = vmatprep.subr.mxu0 0.0
    %669 = vmatpush2.msra.mxu0 0.0
    %670 = vmatprep.subr.mxu0 0.0
    %671 = vmatpush2.msra.mxu0 0.0
    %672 = vmatprep.subr.mxu0 0.0
    %673 = vmatpush2.msra.mxu0 0.0
    %674 = vmatprep.subr.mxu0 0.0
    %675 = vmatpush2.msra.mxu0 0.0
    %676 = vmatprep.subr.mxu0 0.0
    %677 = vmatpush2.msra.mxu0 0.0
    %678 = vmatprep.subr.mxu0 0.0
    %679 = vmatpush2.msra.mxu0 0.0
    %680 = vmatprep.subr.mxu0 0.0
    %681 = vmatpush2.msra.mxu0 0.0
    %682 = vmatprep.subr.mxu0 0.0
    %683 = vmatpush2.msra.mxu0 0.0
    %684 = vmatprep.subr.mxu0 0.0
    %685 = vmatpush2.msra.mxu0 0.0
    %686 = vmatprep.subr.mxu0 0.0
    %687 = vmatpush2.msra.mxu0 0.0
    %688 = vmatprep.subr.mxu0 0.0
    %689 = vmatpush2.msra.mxu0 0.0
    %690 = vmatprep.subr.mxu0 0.0
    %691 = vmatpush2.msra.mxu0 0.0
    %692 = vmatprep.mubr.f32.mxu0 0.0
    %693 = vmatmul.mubr.f32.gmra.mxu0 0.0
    %v694 = vpop.f32.mrf.mxu0
    %v695 = vadd.f32 0.0, %v694
    %v696 = vpop.f32.mrf.mxu0
    %v697 = vadd.f32 0.0, %v696
    %698 = vdwg.mxu0
    %v699 = vadd.f32 %v553, %v624
    %v700 = vadd.f32 %v554, %v626
    %v701 = vadd.f32 %v555, %v695
    %v702 = vadd.f32 %v556, %v697
    %v703 = vxor.u32 %v699, 2147483648
    %v704 = vmul.f32 %v703, 1.442695
    %v705 = vpow.pop %v704
    %v706 = vadd.f32 %v705, 1.0
    %v707 = vrcp.pop %v706
    %v708 = vmul.f32 1.0, %v707
    %v709 = vxor.u32 %v700, 2147483648
    %v710 = vmul.f32 %v709, 1.442695
    %v711 = vpow.pop %v710
    %v712 = vadd.f32 %v711, 1.0
    %v713 = vrcp.pop %v712
    %v714 = vmul.f32 1.0, %v713
    %v715 = vtanh.pop %v701
    %v716 = vxor.u32 %v702, 2147483648
    %v717 = vmul.f32 %v716, 1.442695
    %v718 = vpow.pop %v717
    %v719 = vadd.f32 %v718, 1.0
    %v720 = vrcp.pop %v719
    %v721 = vmul.f32 1.0, %v720
    %v722 = vmul.f32 %v714, 0.0
    %v723 = vmul.f32 %v708, %v715
    %v724 = vadd.f32 %v722, %v723
    %v725 = vtanh.pop %v724
    %v726 = vmul.f32 %v721, %v725
    %727 = vst [vmem:[#allocation2] sm:$0xff] %v726
    %s728 = smul.u32 1, 4
    %s729 = smul.addr %s728, 8
    %s730 = scalar_lea.vmem [#allocation3], %s729
    %v731 = vld [vmem:[%s730] sm:$0xff]
    %v732 = vld [vmem:[%s730 + $0x8] sm:$0xff]
    %v733 = vld [vmem:[%s730 + $0x10] sm:$0xff]
    %v734 = vld [vmem:[%s730 + $0x18] sm:$0xff]
    %735 = vmatprep.subr.mxu0 %v547
    %736 = vmatpush1.msra.mxu0 %v546
    %737 = vmatprep.subr.mxu0 %v543
    %738 = vmatpush1.msra.mxu0 %v542
    %739 = vmatprep.subr.mxu0 %v539
    %740 = vmatpush1.msra.mxu0 %v538
    %741 = vmatprep.subr.mxu0 %v535
    %742 = vmatpush1.msra.mxu0 %v534
    %743 = vmatprep.subr.mxu0 %v531
    %744 = vmatpush1.msra.mxu0 %v530
    %745 = vmatprep.subr.mxu0 %v527
    %746 = vmatpush1.msra.mxu0 %v526
    %747 = vmatprep.subr.mxu0 %v523
    %748 = vmatpush1.msra.mxu0 %v522
    %749 = vmatprep.subr.mxu0 %v519
    %750 = vmatpush1.msra.mxu0 %v518
    %751 = vmatprep.subr.mxu0 %v515
    %752 = vmatpush1.msra.mxu0 %v514
    %753 = vmatprep.subr.mxu0 %v511
    %754 = vmatpush1.msra.mxu0 %v510
    %755 = vmatprep.subr.mxu0 %v507
    %756 = vmatpush1.msra.mxu0 %v506
    %757 = vmatprep.subr.mxu0 %v503
    %758 = vmatpush1.msra.mxu0 %v502
    %759 = vmatprep.subr.mxu0 %v499
    %760 = vmatpush1.msra.mxu0 %v498
    %761 = vmatprep.subr.mxu0 %v495
    %762 = vmatpush1.msra.mxu0 %v494
    %763 = vmatprep.subr.mxu0 %v491
    %764 = vmatpush1.msra.mxu0 %v490
    %765 = vmatprep.subr.mxu0 %v487
    %766 = vmatpush1.msra.mxu0 %v486
    %767 = vmatprep.subr.mxu0 0.0
    %768 = vmatpush2.msra.mxu0 0.0
    %769 = vmatprep.subr.mxu0 0.0
    %770 = vmatpush2.msra.mxu0 0.0
    %771 = vmatprep.subr.mxu0 0.0
    %772 = vmatpush2.msra.mxu0 0.0
    %773 = vmatprep.subr.mxu0 0.0
    %774 = vmatpush2.msra.mxu0 0.0
    %775 = vmatprep.subr.mxu0 0.0
    %776 = vmatpush2.msra.mxu0 0.0
    %777 = vmatprep.subr.mxu0 0.0
    %778 = vmatpush2.msra.mxu0 0.0
    %779 = vmatprep.subr.mxu0 0.0
    %780 = vmatpush2.msra.mxu0 0.0
    %781 = vmatprep.subr.mxu0 0.0
    %782 = vmatpush2.msra.mxu0 0.0
    %783 = vmatprep.subr.mxu0 0.0
    %784 = vmatpush2.msra.mxu0 0.0
    %785 = vmatprep.subr.mxu0 0.0
    %786 = vmatpush2.msra.mxu0 0.0
    %787 = vmatprep.subr.mxu0 0.0
    %788 = vmatpush2.msra.mxu0 0.0
    %789 = vmatprep.subr.mxu0 0.0
    %790 = vmatpush2.msra.mxu0 0.0
    %791 = vmatprep.subr.mxu0 0.0
    %792 = vmatpush2.msra.mxu0 0.0
    %793 = vmatprep.subr.mxu0 0.0
    %794 = vmatpush2.msra.mxu0 0.0
    %795 = vmatprep.subr.mxu0 0.0
    %796 = vmatpush2.msra.mxu0 0.0
    %797 = vmatprep.subr.mxu0 0.0
    %798 = vmatpush2.msra.mxu0 0.0
    %799 = vmatprep.mubr.f32.mxu0 0.0
    %800 = vmatmul.mubr.f32.gmra.mxu0 %v726
    %v801 = vpop.f32.mrf.mxu0
    %v802 = vadd.f32 0.0, %v801
    %v803 = vpop.f32.mrf.mxu0
    %v804 = vadd.f32 0.0, %v803
    %805 = vdwg.mxu0
    %806 = vmatprep.subr.mxu0 %v549
    %807 = vmatpush1.msra.mxu0 %v548
    %808 = vmatprep.subr.mxu0 %v545
    %809 = vmatpush1.msra.mxu0 %v544
    %810 = vmatprep.subr.mxu0 %v541
    %811 = vmatpush1.msra.mxu0 %v540
    %812 = vmatprep.subr.mxu0 %v537
    %813 = vmatpush1.msra.mxu0 %v536
    %814 = vmatprep.subr.mxu0 %v533
    %815 = vmatpush1.msra.mxu0 %v532
    %816 = vmatprep.subr.mxu0 %v529
    %817 = vmatpush1.msra.mxu0 %v528
    %818 = vmatprep.subr.mxu0 %v525
    %819 = vmatpush1.msra.mxu0 %v524
    %820 = vmatprep.subr.mxu0 %v521
    %821 = vmatpush1.msra.mxu0 %v520
    %822 = vmatprep.subr.mxu0 %v517
    %823 = vmatpush1.msra.mxu0 %v516
    %824 = vmatprep.subr.mxu0 %v513
    %825 = vmatpush1.msra.mxu0 %v512
    %826 = vmatprep.subr.mxu0 %v509
    %827 = vmatpush1.msra.mxu0 %v508
    %828 = vmatprep.subr.mxu0 %v505
    %829 = vmatpush1.msra.mxu0 %v504
    %830 = vmatprep.subr.mxu0 %v501
    %831 = vmatpush1.msra.mxu0 %v500
    %832 = vmatprep.subr.mxu0 %v497
    %833 = vmatpush1.msra.mxu0 %v496
    %834 = vmatprep.subr.mxu0 %v493
    %835 = vmatpush1.msra.mxu0 %v492
    %836 = vmatprep.subr.mxu0 %v489
    %837 = vmatpush1.msra.mxu0 %v488
    %838 = vmatprep.subr.mxu0 0.0
    %839 = vmatpush2.msra.mxu0 0.0
    %840 = vmatprep.subr.mxu0 0.0
    %841 = vmatpush2.msra.mxu0 0.0
    %842 = vmatprep.subr.mxu0 0.0
    %843 = vmatpush2.msra.mxu0 0.0
    %844 = vmatprep.subr.mxu0 0.0
    %845 = vmatpush2.msra.mxu0 0.0
    %846 = vmatprep.subr.mxu0 0.0
    %847 = vmatpush2.msra.mxu0 0.0
    %848 = vmatprep.subr.mxu0 0.0
    %849 = vmatpush2.msra.mxu0 0.0
    %850 = vmatprep.subr.mxu0 0.0
    %851 = vmatpush2.msra.mxu0 0.0
    %852 = vmatprep.subr.mxu0 0.0
    %853 = vmatpush2.msra.mxu0 0.0
    %854 = vmatprep.subr.mxu0 0.0
    %855 = vmatpush2.msra.mxu0 0.0
    %856 = vmatprep.subr.mxu0 0.0
    %857 = vmatpush2.msra.mxu0 0.0
    %858 = vmatprep.subr.mxu0 0.0
    %859 = vmatpush2.msra.mxu0 0.0
    %860 = vmatprep.subr.mxu0 0.0
    %861 = vmatpush2.msra.mxu0 0.0
    %862 = vmatprep.subr.mxu0 0.0
    %863 = vmatpush2.msra.mxu0 0.0
    %864 = vmatprep.subr.mxu0 0.0
    %865 = vmatpush2.msra.mxu0 0.0
    %866 = vmatprep.subr.mxu0 0.0
    %867 = vmatpush2.msra.mxu0 0.0
    %868 = vmatprep.subr.mxu0 0.0
    %869 = vmatpush2.msra.mxu0 0.0
    %870 = vmatprep.mubr.f32.mxu0 0.0
    %871 = vmatmul.mubr.f32.gmra.mxu0 %v726
    %v872 = vpop.f32.mrf.mxu0
    %v873 = vadd.f32 0.0, %v872
    %v874 = vpop.f32.mrf.mxu0
    %v875 = vadd.f32 0.0, %v874
    %876 = vdwg.mxu0
    %v877 = vadd.f32 %v731, %v802
    %v878 = vadd.f32 %v732, %v804
    %v879 = vadd.f32 %v733, %v873
    %v880 = vadd.f32 %v734, %v875
    %v881 = vxor.u32 %v877, 2147483648
    %v882 = vmul.f32 %v881, 1.442695
    %v883 = vpow.pop %v882
    %v884 = vadd.f32 %v883, 1.0
    %v885 = vrcp.pop %v884
    %v886 = vmul.f32 1.0, %v885
    %v887 = vxor.u32 %v878, 2147483648
    %v888 = vmul.f32 %v887, 1.442695
    %v889 = vpow.pop %v888
    %v890 = vadd.f32 %v889, 1.0
    %v891 = vrcp.pop %v890
    %v892 = vmul.f32 1.0, %v891
    %v893 = vtanh.pop %v879
    %v894 = vxor.u32 %v880, 2147483648
    %v895 = vmul.f32 %v894, 1.442695
    %v896 = vpow.pop %v895
    %v897 = vadd.f32 %v896, 1.0
    %v898 = vrcp.pop %v897
    %v899 = vmul.f32 1.0, %v898
    %v900 = vmul.f32 %v892, %v724
    %v901 = vmul.f32 %v886, %v893
    %v902 = vadd.f32 %v900, %v901
    %v903 = vtanh.pop %v902
    %v904 = vmul.f32 %v899, %v903
    %s905 = scalar_lea.vmem [#allocation2], 8
    %906 = vst [vmem:[%s905] sm:$0xff] %v904
    %s907 = smul.u32 2, 4
    %s908 = smul.addr %s907, 8
    %s909 = scalar_lea.vmem [#allocation3], %s908
    %v910 = vld [vmem:[%s909] sm:$0xff]
    %v911 = vld [vmem:[%s909 + $0x8] sm:$0xff]
    %v912 = vld [vmem:[%s909 + $0x10] sm:$0xff]
    %v913 = vld [vmem:[%s909 + $0x18] sm:$0xff]
    %914 = vmatprep.subr.mxu0 %v547
    %915 = vmatpush1.msra.mxu0 %v546
    %916 = vmatprep.subr.mxu0 %v543
    %917 = vmatpush1.msra.mxu0 %v542
    %918 = vmatprep.subr.mxu0 %v539
    %919 = vmatpush1.msra.mxu0 %v538
    %920 = vmatprep.subr.mxu0 %v535
    %921 = vmatpush1.msra.mxu0 %v534
    %922 = vmatprep.subr.mxu0 %v531
    %923 = vmatpush1.msra.mxu0 %v530
    %924 = vmatprep.subr.mxu0 %v527
    %925 = vmatpush1.msra.mxu0 %v526
    %926 = vmatprep.subr.mxu0 %v523
    %927 = vmatpush1.msra.mxu0 %v522
    %928 = vmatprep.subr.mxu0 %v519
    %929 = vmatpush1.msra.mxu0 %v518
    %930 = vmatprep.subr.mxu0 %v515
    %931 = vmatpush1.msra.mxu0 %v514
    %932 = vmatprep.subr.mxu0 %v511
    %933 = vmatpush1.msra.mxu0 %v510
    %934 = vmatprep.subr.mxu0 %v507
    %935 = vmatpush1.msra.mxu0 %v506
    %936 = vmatprep.subr.mxu0 %v503
    %937 = vmatpush1.msra.mxu0 %v502
    %938 = vmatprep.subr.mxu0 %v499
    %939 = vmatpush1.msra.mxu0 %v498
    %940 = vmatprep.subr.mxu0 %v495
    %941 = vmatpush1.msra.mxu0 %v494
    %942 = vmatprep.subr.mxu0 %v491
    %943 = vmatpush1.msra.mxu0 %v490
    %944 = vmatprep.subr.mxu0 %v487
    %945 = vmatpush1.msra.mxu0 %v486
    %946 = vmatprep.subr.mxu0 0.0
    %947 = vmatpush2.msra.mxu0 0.0
    %948 = vmatprep.subr.mxu0 0.0
    %949 = vmatpush2.msra.mxu0 0.0
    %950 = vmatprep.subr.mxu0 0.0
    %951 = vmatpush2.msra.mxu0 0.0
    %952 = vmatprep.subr.mxu0 0.0
    %953 = vmatpush2.msra.mxu0 0.0
    %954 = vmatprep.subr.mxu0 0.0
    %955 = vmatpush2.msra.mxu0 0.0
    %956 = vmatprep.subr.mxu0 0.0
    %957 = vmatpush2.msra.mxu0 0.0
    %958 = vmatprep.subr.mxu0 0.0
    %959 = vmatpush2.msra.mxu0 0.0
    %960 = vmatprep.subr.mxu0 0.0
    %961 = vmatpush2.msra.mxu0 0.0
    %962 = vmatprep.subr.mxu0 0.0
    %963 = vmatpush2.msra.mxu0 0.0
    %964 = vmatprep.subr.mxu0 0.0
    %965 = vmatpush2.msra.mxu0 0.0
    %966 = vmatprep.subr.mxu0 0.0
    %967 = vmatpush2.msra.mxu0 0.0
    %968 = vmatprep.subr.mxu0 0.0
    %969 = vmatpush2.msra.mxu0 0.0
    %970 = vmatprep.subr.mxu0 0.0
    %971 = vmatpush2.msra.mxu0 0.0
    %972 = vmatprep.subr.mxu0 0.0
    %973 = vmatpush2.msra.mxu0 0.0
    %974 = vmatprep.subr.mxu0 0.0
    %975 = vmatpush2.msra.mxu0 0.0
    %976 = vmatprep.subr.mxu0 0.0
    %977 = vmatpush2.msra.mxu0 0.0
    %978 = vmatprep.mubr.f32.mxu0 0.0
    %979 = vmatmul.mubr.f32.gmra.mxu0 %v904
    %v980 = vpop.f32.mrf.mxu0
    %v981 = vadd.f32 0.0, %v980
    %v982 = vpop.f32.mrf.mxu0
    %v983 = vadd.f32 0.0, %v982
    %984 = vdwg.mxu0
    %985 = vmatprep.subr.mxu0 %v549
    %986 = vmatpush1.msra.mxu0 %v548
    %987 = vmatprep.subr.mxu0 %v545
    %988 = vmatpush1.msra.mxu0 %v544
    %989 = vmatprep.subr.mxu0 %v541
    %990 = vmatpush1.msra.mxu0 %v540
    %991 = vmatprep.subr.mxu0 %v537
    %992 = vmatpush1.msra.mxu0 %v536
    %993 = vmatprep.subr.mxu0 %v533
    %994 = vmatpush1.msra.mxu0 %v532
    %995 = vmatprep.subr.mxu0 %v529
    %996 = vmatpush1.msra.mxu0 %v528
    %997 = vmatprep.subr.mxu0 %v525
    %998 = vmatpush1.msra.mxu0 %v524
    %999 = vmatprep.subr.mxu0 %v521
    %1000 = vmatpush1.msra.mxu0 %v520
    %1001 = vmatprep.subr.mxu0 %v517
    %1002 = vmatpush1.msra.mxu0 %v516
    %1003 = vmatprep.subr.mxu0 %v513
    %1004 = vmatpush1.msra.mxu0 %v512
    %1005 = vmatprep.subr.mxu0 %v509
    %1006 = vmatpush1.msra.mxu0 %v508
    %1007 = vmatprep.subr.mxu0 %v505
    %1008 = vmatpush1.msra.mxu0 %v504
    %1009 = vmatprep.subr.mxu0 %v501
    %1010 = vmatpush1.msra.mxu0 %v500
    %1011 = vmatprep.subr.mxu0 %v497
    %1012 = vmatpush1.msra.mxu0 %v496
    %1013 = vmatprep.subr.mxu0 %v493
    %1014 = vmatpush1.msra.mxu0 %v492
    %1015 = vmatprep.subr.mxu0 %v489
    %1016 = vmatpush1.msra.mxu0 %v488
    %1017 = vmatprep.subr.mxu0 0.0
    %1018 = vmatpush2.msra.mxu0 0.0
    %1019 = vmatprep.subr.mxu0 0.0
    %1020 = vmatpush2.msra.mxu0 0.0
    %1021 = vmatprep.subr.mxu0 0.0
    %1022 = vmatpush2.msra.mxu0 0.0
    %1023 = vmatprep.subr.mxu0 0.0
    %1024 = vmatpush2.msra.mxu0 0.0
    %1025 = vmatprep.subr.mxu0 0.0
    %1026 = vmatpush2.msra.mxu0 0.0
    %1027 = vmatprep.subr.mxu0 0.0
    %1028 = vmatpush2.msra.mxu0 0.0
    %1029 = vmatprep.subr.mxu0 0.0
    %1030 = vmatpush2.msra.mxu0 0.0
    %1031 = vmatprep.subr.mxu0 0.0
    %1032 = vmatpush2.msra.mxu0 0.0
    %1033 = vmatprep.subr.mxu0 0.0
    %1034 = vmatpush2.msra.mxu0 0.0
    %1035 = vmatprep.subr.mxu0 0.0
    %1036 = vmatpush2.msra.mxu0 0.0
    %1037 = vmatprep.subr.mxu0 0.0
    %1038 = vmatpush2.msra.mxu0 0.0
    %1039 = vmatprep.subr.mxu0 0.0
    %1040 = vmatpush2.msra.mxu0 0.0
    %1041 = vmatprep.subr.mxu0 0.0
    %1042 = vmatpush2.msra.mxu0 0.0
    %1043 = vmatprep.subr.mxu0 0.0
    %1044 = vmatpush2.msra.mxu0 0.0
    %1045 = vmatprep.subr.mxu0 0.0
    %1046 = vmatpush2.msra.mxu0 0.0
    %1047 = vmatprep.subr.mxu0 0.0
    %1048 = vmatpush2.msra.mxu0 0.0
    %1049 = vmatprep.mubr.f32.mxu0 0.0
    %1050 = vmatmul.mubr.f32.gmra.mxu0 %v904
    %v1051 = vpop.f32.mrf.mxu0
    %v1052 = vadd.f32 0.0, %v1051
    %v1053 = vpop.f32.mrf.mxu0
    %v1054 = vadd.f32 0.0, %v1053
    %1055 = vdwg.mxu0
    %v1056 = vadd.f32 %v910, %v981
    %v1057 = vadd.f32 %v911, %v983
    %v1058 = vadd.f32 %v912, %v1052
    %v1059 = vadd.f32 %v913, %v1054
    %v1060 = vxor.u32 %v1056, 2147483648
    %v1061 = vmul.f32 %v1060, 1.442695
    %v1062 = vpow.pop %v1061
    %v1063 = vadd.f32 %v1062, 1.0
    %v1064 = vrcp.pop %v1063
    %v1065 = vmul.f32 1.0, %v1064
    %v1066 = vxor.u32 %v1057, 2147483648
    %v1067 = vmul.f32 %v1066, 1.442695
    %v1068 = vpow.pop %v1067
    %v1069 = vadd.f32 %v1068, 1.0
    %v1070 = vrcp.pop %v1069
    %v1071 = vmul.f32 1.0, %v1070
    %v1072 = vtanh.pop %v1058
    %v1073 = vxor.u32 %v1059, 2147483648
    %v1074 = vmul.f32 %v1073, 1.442695
    %v1075 = vpow.pop %v1074
    %v1076 = vadd.f32 %v1075, 1.0
    %v1077 = vrcp.pop %v1076
    %v1078 = vmul.f32 1.0, %v1077
    %v1079 = vmul.f32 %v1071, %v902
    %v1080 = vmul.f32 %v1065, %v1072
    %v1081 = vadd.f32 %v1079, %v1080
    %v1082 = vtanh.pop %v1081
    %v1083 = vmul.f32 %v1078, %v1082
    %s1084 = scalar_lea.vmem [#allocation2], 16
    %1085 = vst [vmem:[%s1084] sm:$0xff] %v1083
    %s1086 = smul.u32 3, 4
    %s1087 = smul.addr %s1086, 8
    %s1088 = scalar_lea.vmem [#allocation3], %s1087
    %v1089 = vld [vmem:[%s1088] sm:$0xff]
    %v1090 = vld [vmem:[%s1088 + $0x8] sm:$0xff]
    %v1091 = vld [vmem:[%s1088 + $0x10] sm:$0xff]
    %v1092 = vld [vmem:[%s1088 + $0x18] sm:$0xff]
    %1093 = vmatprep.subr.mxu0 %v547
    %1094 = vmatpush1.msra.mxu0 %v546
    %1095 = vmatprep.subr.mxu0 %v543
    %1096 = vmatpush1.msra.mxu0 %v542
    %1097 = vmatprep.subr.mxu0 %v539
    %1098 = vmatpush1.msra.mxu0 %v538
    %1099 = vmatprep.subr.mxu0 %v535
    %1100 = vmatpush1.msra.mxu0 %v534
    %1101 = vmatprep.subr.mxu0 %v531
    %1102 = vmatpush1.msra.mxu0 %v530
    %1103 = vmatprep.subr.mxu0 %v527
    %1104 = vmatpush1.msra.mxu0 %v526
    %1105 = vmatprep.subr.mxu0 %v523
    %1106 = vmatpush1.msra.mxu0 %v522
    %1107 = vmatprep.subr.mxu0 %v519
    %1108 = vmatpush1.msra.mxu0 %v518
    %1109 = vmatprep.subr.mxu0 %v515
    %1110 = vmatpush1.msra.mxu0 %v514
    %1111 = vmatprep.subr.mxu0 %v511
    %1112 = vmatpush1.msra.mxu0 %v510
    %1113 = vmatprep.subr.mxu0 %v507
    %1114 = vmatpush1.msra.mxu0 %v506
    %1115 = vmatprep.subr.mxu0 %v503
    %1116 = vmatpush1.msra.mxu0 %v502
    %1117 = vmatprep.subr.mxu0 %v499
    %1118 = vmatpush1.msra.mxu0 %v498
    %1119 = vmatprep.subr.mxu0 %v495
    %1120 = vmatpush1.msra.mxu0 %v494
    %1121 = vmatprep.subr.mxu0 %v491
    %1122 = vmatpush1.msra.mxu0 %v490
    %1123 = vmatprep.subr.mxu0 %v487
    %1124 = vmatpush1.msra.mxu0 %v486
    %1125 = vmatprep.subr.mxu0 0.0
    %1126 = vmatpush2.msra.mxu0 0.0
    %1127 = vmatprep.subr.mxu0 0.0
    %1128 = vmatpush2.msra.mxu0 0.0
    %1129 = vmatprep.subr.mxu0 0.0
    %1130 = vmatpush2.msra.mxu0 0.0
    %1131 = vmatprep.subr.mxu0 0.0
    %1132 = vmatpush2.msra.mxu0 0.0
    %1133 = vmatprep.subr.mxu0 0.0
    %1134 = vmatpush2.msra.mxu0 0.0
    %1135 = vmatprep.subr.mxu0 0.0
    %1136 = vmatpush2.msra.mxu0 0.0
    %1137 = vmatprep.subr.mxu0 0.0
    %1138 = vmatpush2.msra.mxu0 0.0
    %1139 = vmatprep.subr.mxu0 0.0
    %1140 = vmatpush2.msra.mxu0 0.0
    %1141 = vmatprep.subr.mxu0 0.0
    %1142 = vmatpush2.msra.mxu0 0.0
    %1143 = vmatprep.subr.mxu0 0.0
    %1144 = vmatpush2.msra.mxu0 0.0
    %1145 = vmatprep.subr.mxu0 0.0
    %1146 = vmatpush2.msra.mxu0 0.0
    %1147 = vmatprep.subr.mxu0 0.0
    %1148 = vmatpush2.msra.mxu0 0.0
    %1149 = vmatprep.subr.mxu0 0.0
    %1150 = vmatpush2.msra.mxu0 0.0
    %1151 = vmatprep.subr.mxu0 0.0
    %1152 = vmatpush2.msra.mxu0 0.0
    %1153 = vmatprep.subr.mxu0 0.0
    %1154 = vmatpush2.msra.mxu0 0.0
    %1155 = vmatprep.subr.mxu0 0.0
    %1156 = vmatpush2.msra.mxu0 0.0
    %1157 = vmatprep.mubr.f32.mxu0 0.0
    %1158 = vmatmul.mubr.f32.gmra.mxu0 %v1083
    %v1159 = vpop.f32.mrf.mxu0
    %v1160 = vadd.f32 0.0, %v1159
    %v1161 = vpop.f32.mrf.mxu0
    %v1162 = vadd.f32 0.0, %v1161
    %1163 = vdwg.mxu0
    %1164 = vmatprep.subr.mxu0 %v549
    %1165 = vmatpush1.msra.mxu0 %v548
    %1166 = vmatprep.subr.mxu0 %v545
    %1167 = vmatpush1.msra.mxu0 %v544
    %1168 = vmatprep.subr.mxu0 %v541
    %1169 = vmatpush1.msra.mxu0 %v540
    %1170 = vmatprep.subr.mxu0 %v537
    %1171 = vmatpush1.msra.mxu0 %v536
    %1172 = vmatprep.subr.mxu0 %v533
    %1173 = vmatpush1.msra.mxu0 %v532
    %1174 = vmatprep.subr.mxu0 %v529
    %1175 = vmatpush1.msra.mxu0 %v528
    %1176 = vmatprep.subr.mxu0 %v525
    %1177 = vmatpush1.msra.mxu0 %v524
    %1178 = vmatprep.subr.mxu0 %v521
    %1179 = vmatpush1.msra.mxu0 %v520
    %1180 = vmatprep.subr.mxu0 %v517
    %1181 = vmatpush1.msra.mxu0 %v516
    %1182 = vmatprep.subr.mxu0 %v513
    %1183 = vmatpush1.msra.mxu0 %v512
    %1184 = vmatprep.subr.mxu0 %v509
    %1185 = vmatpush1.msra.mxu0 %v508
    %1186 = vmatprep.subr.mxu0 %v505
    %1187 = vmatpush1.msra.mxu0 %v504
    %1188 = vmatprep.subr.mxu0 %v501
    %1189 = vmatpush1.msra.mxu0 %v500
    %1190 = vmatprep.subr.mxu0 %v497
    %1191 = vmatpush1.msra.mxu0 %v496
    %1192 = vmatprep.subr.mxu0 %v493
    %1193 = vmatpush1.msra.mxu0 %v492
    %1194 = vmatprep.subr.mxu0 %v489
    %1195 = vmatpush1.msra.mxu0 %v488
    %1196 = vmatprep.subr.mxu0 0.0
    %1197 = vmatpush2.msra.mxu0 0.0
    %1198 = vmatprep.subr.mxu0 0.0
    %1199 = vmatpush2.msra.mxu0 0.0
    %1200 = vmatprep.subr.mxu0 0.0
    %1201 = vmatpush2.msra.mxu0 0.0
    %1202 = vmatprep.subr.mxu0 0.0
    %1203 = vmatpush2.msra.mxu0 0.0
    %1204 = vmatprep.subr.mxu0 0.0
    %1205 = vmatpush2.msra.mxu0 0.0
    %1206 = vmatprep.subr.mxu0 0.0
    %1207 = vmatpush2.msra.mxu0 0.0
    %1208 = vmatprep.subr.mxu0 0.0
    %1209 = vmatpush2.msra.mxu0 0.0
    %1210 = vmatprep.subr.mxu0 0.0
    %1211 = vmatpush2.msra.mxu0 0.0
    %1212 = vmatprep.subr.mxu0 0.0
    %1213 = vmatpush2.msra.mxu0 0.0
    %1214 = vmatprep.subr.mxu0 0.0
    %1215 = vmatpush2.msra.mxu0 0.0
    %1216 = vmatprep.subr.mxu0 0.0
    %1217 = vmatpush2.msra.mxu0 0.0
    %1218 = vmatprep.subr.mxu0 0.0
    %1219 = vmatpush2.msra.mxu0 0.0
    %1220 = vmatprep.subr.mxu0 0.0
    %1221 = vmatpush2.msra.mxu0 0.0
    %1222 = vmatprep.subr.mxu0 0.0
    %1223 = vmatpush2.msra.mxu0 0.0
    %1224 = vmatprep.subr.mxu0 0.0
    %1225 = vmatpush2.msra.mxu0 0.0
    %1226 = vmatprep.subr.mxu0 0.0
    %1227 = vmatpush2.msra.mxu0 0.0
    %1228 = vmatprep.mubr.f32.mxu0 0.0
    %1229 = vmatmul.mubr.f32.gmra.mxu0 %v1083
    %v1230 = vpop.f32.mrf.mxu0
    %v1231 = vadd.f32 0.0, %v1230
    %v1232 = vpop.f32.mrf.mxu0
    %v1233 = vadd.f32 0.0, %v1232
    %1234 = vdwg.mxu0
    %v1235 = vadd.f32 %v1089, %v1160
    %v1236 = vadd.f32 %v1090, %v1162
    %v1237 = vadd.f32 %v1091, %v1231
    %v1238 = vadd.f32 %v1092, %v1233
    %v1239 = vxor.u32 %v1235, 2147483648
    %v1240 = vmul.f32 %v1239, 1.442695
    %v1241 = vpow.pop %v1240
    %v1242 = vadd.f32 %v1241, 1.0
    %v1243 = vrcp.pop %v1242
    %v1244 = vmul.f32 1.0, %v1243
    %v1245 = vxor.u32 %v1236, 2147483648
    %v1246 = vmul.f32 %v1245, 1.442695
    %v1247 = vpow.pop %v1246
    %v1248 = vadd.f32 %v1247, 1.0
    %v1249 = vrcp.pop %v1248
    %v1250 = vmul.f32 1.0, %v1249
    %v1251 = vtanh.pop %v1237
    %v1252 = vxor.u32 %v1238, 2147483648
    %v1253 = vmul.f32 %v1252, 1.442695
    %v1254 = vpow.pop %v1253
    %v1255 = vadd.f32 %v1254, 1.0
    %v1256 = vrcp.pop %v1255
    %v1257 = vmul.f32 1.0, %v1256
    %v1258 = vmul.f32 %v1250, %v1081
    %v1259 = vmul.f32 %v1244, %v1251
    %v1260 = vadd.f32 %v1258, %v1259
    %v1261 = vtanh.pop %v1260
    %v1262 = vmul.f32 %v1257, %v1261
    %s1263 = scalar_lea.vmem [#allocation2], 24
    %1264 = vst [vmem:[%s1263] sm:$0xff] %v1262
    %s1265 = smul.u32 4, 4
    %s1266 = smul.addr %s1265, 8
    %s1267 = scalar_lea.vmem [#allocation3], %s1266
    %v1268 = vld [vmem:[%s1267] sm:$0xff]
    %v1269 = vld [vmem:[%s1267 + $0x8] sm:$0xff]
    %v1270 = vld [vmem:[%s1267 + $0x10] sm:$0xff]
    %v1271 = vld [vmem:[%s1267 + $0x18] sm:$0xff]
    %1272 = vmatprep.subr.mxu0 %v547
    %1273 = vmatpush1.msra.mxu0 %v546
    %1274 = vmatprep.subr.mxu0 %v543
    %1275 = vmatpush1.msra.mxu0 %v542
    %1276 = vmatprep.subr.mxu0 %v539
    %1277 = vmatpush1.msra.mxu0 %v538
    %1278 = vmatprep.subr.mxu0 %v535
    %1279 = vmatpush1.msra.mxu0 %v534
    %1280 = vmatprep.subr.mxu0 %v531
    %1281 = vmatpush1.msra.mxu0 %v530
    %1282 = vmatprep.subr.mxu0 %v527
    %1283 = vmatpush1.msra.mxu0 %v526
    %1284 = vmatprep.subr.mxu0 %v523
    %1285 = vmatpush1.msra.mxu0 %v522
    %1286 = vmatprep.subr.mxu0 %v519
    %1287 = vmatpush1.msra.mxu0 %v518
    %1288 = vmatprep.subr.mxu0 %v515
    %1289 = vmatpush1.msra.mxu0 %v514
    %1290 = vmatprep.subr.mxu0 %v511
    %1291 = vmatpush1.msra.mxu0 %v510
    %1292 = vmatprep.subr.mxu0 %v507
    %1293 = vmatpush1.msra.mxu0 %v506
    %1294 = vmatprep.subr.mxu0 %v503
    %1295 = vmatpush1.msra.mxu0 %v502
    %1296 = vmatprep.subr.mxu0 %v499
    %1297 = vmatpush1.msra.mxu0 %v498
    %1298 = vmatprep.subr.mxu0 %v495
    %1299 = vmatpush1.msra.mxu0 %v494
    %1300 = vmatprep.subr.mxu0 %v491
    %1301 = vmatpush1.msra.mxu0 %v490
    %1302 = vmatprep.subr.mxu0 %v487
    %1303 = vmatpush1.msra.mxu0 %v486
    %1304 = vmatprep.subr.mxu0 0.0
    %1305 = vmatpush2.msra.mxu0 0.0
    %1306 = vmatprep.subr.mxu0 0.0
    %1307 = vmatpush2.msra.mxu0 0.0
    %1308 = vmatprep.subr.mxu0 0.0
    %1309 = vmatpush2.msra.mxu0 0.0
    %1310 = vmatprep.subr.mxu0 0.0
    %1311 = vmatpush2.msra.mxu0 0.0
    %1312 = vmatprep.subr.mxu0 0.0
    %1313 = vmatpush2.msra.mxu0 0.0
    %1314 = vmatprep.subr.mxu0 0.0
    %1315 = vmatpush2.msra.mxu0 0.0
    %1316 = vmatprep.subr.mxu0 0.0
    %1317 = vmatpush2.msra.mxu0 0.0
    %1318 = vmatprep.subr.mxu0 0.0
    %1319 = vmatpush2.msra.mxu0 0.0
    %1320 = vmatprep.subr.mxu0 0.0
    %1321 = vmatpush2.msra.mxu0 0.0
    %1322 = vmatprep.subr.mxu0 0.0
    %1323 = vmatpush2.msra.mxu0 0.0
    %1324 = vmatprep.subr.mxu0 0.0
    %1325 = vmatpush2.msra.mxu0 0.0
    %1326 = vmatprep.subr.mxu0 0.0
    %1327 = vmatpush2.msra.mxu0 0.0
    %1328 = vmatprep.subr.mxu0 0.0
    %1329 = vmatpush2.msra.mxu0 0.0
    %1330 = vmatprep.subr.mxu0 0.0
    %1331 = vmatpush2.msra.mxu0 0.0
    %1332 = vmatprep.subr.mxu0 0.0
    %1333 = vmatpush2.msra.mxu0 0.0
    %1334 = vmatprep.subr.mxu0 0.0
    %1335 = vmatpush2.msra.mxu0 0.0
    %1336 = vmatprep.mubr.f32.mxu0 0.0
    %1337 = vmatmul.mubr.f32.gmra.mxu0 %v1262
    %v1338 = vpop.f32.mrf.mxu0
    %v1339 = vadd.f32 0.0, %v1338
    %v1340 = vpop.f32.mrf.mxu0
    %v1341 = vadd.f32 0.0, %v1340
    %1342 = vdwg.mxu0
    %1343 = vmatprep.subr.mxu0 %v549
    %1344 = vmatpush1.msra.mxu0 %v548
    %1345 = vmatprep.subr.mxu0 %v545
    %1346 = vmatpush1.msra.mxu0 %v544
    %1347 = vmatprep.subr.mxu0 %v541
    %1348 = vmatpush1.msra.mxu0 %v540
    %1349 = vmatprep.subr.mxu0 %v537
    %1350 = vmatpush1.msra.mxu0 %v536
    %1351 = vmatprep.subr.mxu0 %v533
    %1352 = vmatpush1.msra.mxu0 %v532
    %1353 = vmatprep.subr.mxu0 %v529
    %1354 = vmatpush1.msra.mxu0 %v528
    %1355 = vmatprep.subr.mxu0 %v525
    %1356 = vmatpush1.msra.mxu0 %v524
    %1357 = vmatprep.subr.mxu0 %v521
    %1358 = vmatpush1.msra.mxu0 %v520
    %1359 = vmatprep.subr.mxu0 %v517
    %1360 = vmatpush1.msra.mxu0 %v516
    %1361 = vmatprep.subr.mxu0 %v513
    %1362 = vmatpush1.msra.mxu0 %v512
    %1363 = vmatprep.subr.mxu0 %v509
    %1364 = vmatpush1.msra.mxu0 %v508
    %1365 = vmatprep.subr.mxu0 %v505
    %1366 = vmatpush1.msra.mxu0 %v504
    %1367 = vmatprep.subr.mxu0 %v501
    %1368 = vmatpush1.msra.mxu0 %v500
    %1369 = vmatprep.subr.mxu0 %v497
    %1370 = vmatpush1.msra.mxu0 %v496
    %1371 = vmatprep.subr.mxu0 %v493
    %1372 = vmatpush1.msra.mxu0 %v492
    %1373 = vmatprep.subr.mxu0 %v489
    %1374 = vmatpush1.msra.mxu0 %v488
    %1375 = vmatprep.subr.mxu0 0.0
    %1376 = vmatpush2.msra.mxu0 0.0
    %1377 = vmatprep.subr.mxu0 0.0
    %1378 = vmatpush2.msra.mxu0 0.0
    %1379 = vmatprep.subr.mxu0 0.0
    %1380 = vmatpush2.msra.mxu0 0.0
    %1381 = vmatprep.subr.mxu0 0.0
    %1382 = vmatpush2.msra.mxu0 0.0
    %1383 = vmatprep.subr.mxu0 0.0
    %1384 = vmatpush2.msra.mxu0 0.0
    %1385 = vmatprep.subr.mxu0 0.0
    %1386 = vmatpush2.msra.mxu0 0.0
    %1387 = vmatprep.subr.mxu0 0.0
    %1388 = vmatpush2.msra.mxu0 0.0
    %1389 = vmatprep.subr.mxu0 0.0
    %1390 = vmatpush2.msra.mxu0 0.0
    %1391 = vmatprep.subr.mxu0 0.0
    %1392 = vmatpush2.msra.mxu0 0.0
    %1393 = vmatprep.subr.mxu0 0.0
    %1394 = vmatpush2.msra.mxu0 0.0
    %1395 = vmatprep.subr.mxu0 0.0
    %1396 = vmatpush2.msra.mxu0 0.0
    %1397 = vmatprep.subr.mxu0 0.0
    %1398 = vmatpush2.msra.mxu0 0.0
    %1399 = vmatprep.subr.mxu0 0.0
    %1400 = vmatpush2.msra.mxu0 0.0
    %1401 = vmatprep.subr.mxu0 0.0
    %1402 = vmatpush2.msra.mxu0 0.0
    %1403 = vmatprep.subr.mxu0 0.0
    %1404 = vmatpush2.msra.mxu0 0.0
    %1405 = vmatprep.subr.mxu0 0.0
    %1406 = vmatpush2.msra.mxu0 0.0
    %1407 = vmatprep.mubr.f32.mxu0 0.0
    %1408 = vmatmul.mubr.f32.gmra.mxu0 %v1262
    %v1409 = vpop.f32.mrf.mxu0
    %v1410 = vadd.f32 0.0, %v1409
    %v1411 = vpop.f32.mrf.mxu0
    %v1412 = vadd.f32 0.0, %v1411
    %1413 = vdwg.mxu0
    %v1414 = vadd.f32 %v1268, %v1339
    %v1415 = vadd.f32 %v1269, %v1341
    %v1416 = vadd.f32 %v1270, %v1410
    %v1417 = vadd.f32 %v1271, %v1412
    %v1418 = vxor.u32 %v1414, 2147483648
    %v1419 = vmul.f32 %v1418, 1.442695
    %v1420 = vpow.pop %v1419
    %v1421 = vadd.f32 %v1420, 1.0
    %v1422 = vrcp.pop %v1421
    %v1423 = vmul.f32 1.0, %v1422
    %v1424 = vxor.u32 %v1415, 2147483648
    %v1425 = vmul.f32 %v1424, 1.442695
    %v1426 = vpow.pop %v1425
    %v1427 = vadd.f32 %v1426, 1.0
    %v1428 = vrcp.pop %v1427
    %v1429 = vmul.f32 1.0, %v1428
    %v1430 = vtanh.pop %v1416
    %v1431 = vxor.u32 %v1417, 2147483648
    %v1432 = vmul.f32 %v1431, 1.442695
    %v1433 = vpow.pop %v1432
    %v1434 = vadd.f32 %v1433, 1.0
    %v1435 = vrcp.pop %v1434
    %v1436 = vmul.f32 1.0, %v1435
    %v1437 = vmul.f32 %v1429, %v1260
    %v1438 = vmul.f32 %v1423, %v1430
    %v1439 = vadd.f32 %v1437, %v1438
    %v1440 = vtanh.pop %v1439
    %v1441 = vmul.f32 %v1436, %v1440
    %s1442 = scalar_lea.vmem [#allocation2], 32
    %1443 = vst [vmem:[%s1442] sm:$0xff] %v1441
    %s1444 = smul.u32 5, 4
    %s1445 = smul.addr %s1444, 8
    %s1446 = scalar_lea.vmem [#allocation3], %s1445
    %v1447 = vld [vmem:[%s1446] sm:$0xff]
    %v1448 = vld [vmem:[%s1446 + $0x8] sm:$0xff]
    %v1449 = vld [vmem:[%s1446 + $0x10] sm:$0xff]
    %v1450 = vld [vmem:[%s1446 + $0x18] sm:$0xff]
    %1451 = vmatprep.subr.mxu0 %v547
    %1452 = vmatpush1.msra.mxu0 %v546
    %1453 = vmatprep.subr.mxu0 %v543
    %1454 = vmatpush1.msra.mxu0 %v542
    %1455 = vmatprep.subr.mxu0 %v539
    %1456 = vmatpush1.msra.mxu0 %v538
    %1457 = vmatprep.subr.mxu0 %v535
    %1458 = vmatpush1.msra.mxu0 %v534
    %1459 = vmatprep.subr.mxu0 %v531
    %1460 = vmatpush1.msra.mxu0 %v530
    %1461 = vmatprep.subr.mxu0 %v527
    %1462 = vmatpush1.msra.mxu0 %v526
    %1463 = vmatprep.subr.mxu0 %v523
    %1464 = vmatpush1.msra.mxu0 %v522
    %1465 = vmatprep.subr.mxu0 %v519
    %1466 = vmatpush1.msra.mxu0 %v518
    %1467 = vmatprep.subr.mxu0 %v515
    %1468 = vmatpush1.msra.mxu0 %v514
    %1469 = vmatprep.subr.mxu0 %v511
    %1470 = vmatpush1.msra.mxu0 %v510
    %1471 = vmatprep.subr.mxu0 %v507
    %1472 = vmatpush1.msra.mxu0 %v506
    %1473 = vmatprep.subr.mxu0 %v503
    %1474 = vmatpush1.msra.mxu0 %v502
    %1475 = vmatprep.subr.mxu0 %v499
    %1476 = vmatpush1.msra.mxu0 %v498
    %1477 = vmatprep.subr.mxu0 %v495
    %1478 = vmatpush1.msra.mxu0 %v494
    %1479 = vmatprep.subr.mxu0 %v491
    %1480 = vmatpush1.msra.mxu0 %v490
    %1481 = vmatprep.subr.mxu0 %v487
    %1482 = vmatpush1.msra.mxu0 %v486
    %1483 = vmatprep.subr.mxu0 0.0
    %1484 = vmatpush2.msra.mxu0 0.0
    %1485 = vmatprep.subr.mxu0 0.0
    %1486 = vmatpush2.msra.mxu0 0.0
    %1487 = vmatprep.subr.mxu0 0.0
    %1488 = vmatpush2.msra.mxu0 0.0
    %1489 = vmatprep.subr.mxu0 0.0
    %1490 = vmatpush2.msra.mxu0 0.0
    %1491 = vmatprep.subr.mxu0 0.0
    %1492 = vmatpush2.msra.mxu0 0.0
    %1493 = vmatprep.subr.mxu0 0.0
    %1494 = vmatpush2.msra.mxu0 0.0
    %1495 = vmatprep.subr.mxu0 0.0
    %1496 = vmatpush2.msra.mxu0 0.0
    %1497 = vmatprep.subr.mxu0 0.0
    %1498 = vmatpush2.msra.mxu0 0.0
    %1499 = vmatprep.subr.mxu0 0.0
    %1500 = vmatpush2.msra.mxu0 0.0
    %1501 = vmatprep.subr.mxu0 0.0
    %1502 = vmatpush2.msra.mxu0 0.0
    %1503 = vmatprep.subr.mxu0 0.0
    %1504 = vmatpush2.msra.mxu0 0.0
    %1505 = vmatprep.subr.mxu0 0.0
    %1506 = vmatpush2.msra.mxu0 0.0
    %1507 = vmatprep.subr.mxu0 0.0
    %1508 = vmatpush2.msra.mxu0 0.0
    %1509 = vmatprep.subr.mxu0 0.0
    %1510 = vmatpush2.msra.mxu0 0.0
    %1511 = vmatprep.subr.mxu0 0.0
    %1512 = vmatpush2.msra.mxu0 0.0
    %1513 = vmatprep.subr.mxu0 0.0
    %1514 = vmatpush2.msra.mxu0 0.0
    %1515 = vmatprep.mubr.f32.mxu0 0.0
    %1516 = vmatmul.mubr.f32.gmra.mxu0 %v1441
    %v1517 = vpop.f32.mrf.mxu0
    %v1518 = vadd.f32 0.0, %v1517
    %v1519 = vpop.f32.mrf.mxu0
    %v1520 = vadd.f32 0.0, %v1519
    %1521 = vdwg.mxu0
    %1522 = vmatprep.subr.mxu0 %v549
    %1523 = vmatpush1.msra.mxu0 %v548
    %1524 = vmatprep.subr.mxu0 %v545
    %1525 = vmatpush1.msra.mxu0 %v544
    %1526 = vmatprep.subr.mxu0 %v541
    %1527 = vmatpush1.msra.mxu0 %v540
    %1528 = vmatprep.subr.mxu0 %v537
    %1529 = vmatpush1.msra.mxu0 %v536
    %1530 = vmatprep.subr.mxu0 %v533
    %1531 = vmatpush1.msra.mxu0 %v532
    %1532 = vmatprep.subr.mxu0 %v529
    %1533 = vmatpush1.msra.mxu0 %v528
    %1534 = vmatprep.subr.mxu0 %v525
    %1535 = vmatpush1.msra.mxu0 %v524
    %1536 = vmatprep.subr.mxu0 %v521
    %1537 = vmatpush1.msra.mxu0 %v520
    %1538 = vmatprep.subr.mxu0 %v517
    %1539 = vmatpush1.msra.mxu0 %v516
    %1540 = vmatprep.subr.mxu0 %v513
    %1541 = vmatpush1.msra.mxu0 %v512
    %1542 = vmatprep.subr.mxu0 %v509
    %1543 = vmatpush1.msra.mxu0 %v508
    %1544 = vmatprep.subr.mxu0 %v505
    %1545 = vmatpush1.msra.mxu0 %v504
    %1546 = vmatprep.subr.mxu0 %v501
    %1547 = vmatpush1.msra.mxu0 %v500
    %1548 = vmatprep.subr.mxu0 %v497
    %1549 = vmatpush1.msra.mxu0 %v496
    %1550 = vmatprep.subr.mxu0 %v493
    %1551 = vmatpush1.msra.mxu0 %v492
    %1552 = vmatprep.subr.mxu0 %v489
    %1553 = vmatpush1.msra.mxu0 %v488
    %1554 = vmatprep.subr.mxu0 0.0
    %1555 = vmatpush2.msra.mxu0 0.0
    %1556 = vmatprep.subr.mxu0 0.0
    %1557 = vmatpush2.msra.mxu0 0.0
    %1558 = vmatprep.subr.mxu0 0.0
    %1559 = vmatpush2.msra.mxu0 0.0
    %1560 = vmatprep.subr.mxu0 0.0
    %1561 = vmatpush2.msra.mxu0 0.0
    %1562 = vmatprep.subr.mxu0 0.0
    %1563 = vmatpush2.msra.mxu0 0.0
    %1564 = vmatprep.subr.mxu0 0.0
    %1565 = vmatpush2.msra.mxu0 0.0
    %1566 = vmatprep.subr.mxu0 0.0
    %1567 = vmatpush2.msra.mxu0 0.0
    %1568 = vmatprep.subr.mxu0 0.0
    %1569 = vmatpush2.msra.mxu0 0.0
    %1570 = vmatprep.subr.mxu0 0.0
    %1571 = vmatpush2.msra.mxu0 0.0
    %1572 = vmatprep.subr.mxu0 0.0
    %1573 = vmatpush2.msra.mxu0 0.0
    %1574 = vmatprep.subr.mxu0 0.0
    %1575 = vmatpush2.msra.mxu0 0.0
    %1576 = vmatprep.subr.mxu0 0.0
    %1577 = vmatpush2.msra.mxu0 0.0
    %1578 = vmatprep.subr.mxu0 0.0
    %1579 = vmatpush2.msra.mxu0 0.0
    %1580 = vmatprep.subr.mxu0 0.0
    %1581 = vmatpush2.msra.mxu0 0.0
    %1582 = vmatprep.subr.mxu0 0.0
    %1583 = vmatpush2.msra.mxu0 0.0
    %1584 = vmatprep.subr.mxu0 0.0
    %1585 = vmatpush2.msra.mxu0 0.0
    %1586 = vmatprep.mubr.f32.mxu0 0.0
    %1587 = vmatmul.mubr.f32.gmra.mxu0 %v1441
    %v1588 = vpop.f32.mrf.mxu0
    %v1589 = vadd.f32 0.0, %v1588
    %v1590 = vpop.f32.mrf.mxu0
    %v1591 = vadd.f32 0.0, %v1590
    %1592 = vdwg.mxu0
    %v1593 = vadd.f32 %v1447, %v1518
    %v1594 = vadd.f32 %v1448, %v1520
    %v1595 = vadd.f32 %v1449, %v1589
    %v1596 = vadd.f32 %v1450, %v1591
    %v1597 = vxor.u32 %v1593, 2147483648
    %v1598 = vmul.f32 %v1597, 1.442695
    %v1599 = vpow.pop %v1598
    %v1600 = vadd.f32 %v1599, 1.0
    %v1601 = vrcp.pop %v1600
    %v1602 = vmul.f32 1.0, %v1601
    %v1603 = vxor.u32 %v1594, 2147483648
    %v1604 = vmul.f32 %v1603, 1.442695
    %v1605 = vpow.pop %v1604
    %v1606 = vadd.f32 %v1605, 1.0
    %v1607 = vrcp.pop %v1606
    %v1608 = vmul.f32 1.0, %v1607
    %v1609 = vtanh.pop %v1595
    %v1610 = vxor.u32 %v1596, 2147483648
    %v1611 = vmul.f32 %v1610, 1.442695
    %v1612 = vpow.pop %v1611
    %v1613 = vadd.f32 %v1612, 1.0
    %v1614 = vrcp.pop %v1613
    %v1615 = vmul.f32 1.0, %v1614
    %v1616 = vmul.f32 %v1608, %v1439
    %v1617 = vmul.f32 %v1602, %v1609
    %v1618 = vadd.f32 %v1616, %v1617
    %v1619 = vtanh.pop %v1618
    %v1620 = vmul.f32 %v1615, %v1619
    %s1621 = scalar_lea.vmem [#allocation2], 40
    %1622 = vst [vmem:[%s1621] sm:$0xff] %v1620
    %s1623 = smul.u32 6, 4
    %s1624 = smul.addr %s1623, 8
    %s1625 = scalar_lea.vmem [#allocation3], %s1624
    %v1626 = vld [vmem:[%s1625] sm:$0xff]
    %v1627 = vld [vmem:[%s1625 + $0x8] sm:$0xff]
    %v1628 = vld [vmem:[%s1625 + $0x10] sm:$0xff]
    %v1629 = vld [vmem:[%s1625 + $0x18] sm:$0xff]
    %1630 = vmatprep.subr.mxu0 %v547
    %1631 = vmatpush1.msra.mxu0 %v546
    %1632 = vmatprep.subr.mxu0 %v543
    %1633 = vmatpush1.msra.mxu0 %v542
    %1634 = vmatprep.subr.mxu0 %v539
    %1635 = vmatpush1.msra.mxu0 %v538
    %1636 = vmatprep.subr.mxu0 %v535
    %1637 = vmatpush1.msra.mxu0 %v534
    %1638 = vmatprep.subr.mxu0 %v531
    %1639 = vmatpush1.msra.mxu0 %v530
    %1640 = vmatprep.subr.mxu0 %v527
    %1641 = vmatpush1.msra.mxu0 %v526
    %1642 = vmatprep.subr.mxu0 %v523
    %1643 = vmatpush1.msra.mxu0 %v522
    %1644 = vmatprep.subr.mxu0 %v519
    %1645 = vmatpush1.msra.mxu0 %v518
    %1646 = vmatprep.subr.mxu0 %v515
    %1647 = vmatpush1.msra.mxu0 %v514
    %1648 = vmatprep.subr.mxu0 %v511
    %1649 = vmatpush1.msra.mxu0 %v510
    %1650 = vmatprep.subr.mxu0 %v507
    %1651 = vmatpush1.msra.mxu0 %v506
    %1652 = vmatprep.subr.mxu0 %v503
    %1653 = vmatpush1.msra.mxu0 %v502
    %1654 = vmatprep.subr.mxu0 %v499
    %1655 = vmatpush1.msra.mxu0 %v498
    %1656 = vmatprep.subr.mxu0 %v495
    %1657 = vmatpush1.msra.mxu0 %v494
    %1658 = vmatprep.subr.mxu0 %v491
    %1659 = vmatpush1.msra.mxu0 %v490
    %1660 = vmatprep.subr.mxu0 %v487
    %1661 = vmatpush1.msra.mxu0 %v486
    %1662 = vmatprep.subr.mxu0 0.0
    %1663 = vmatpush2.msra.mxu0 0.0
    %1664 = vmatprep.subr.mxu0 0.0
    %1665 = vmatpush2.msra.mxu0 0.0
    %1666 = vmatprep.subr.mxu0 0.0
    %1667 = vmatpush2.msra.mxu0 0.0
    %1668 = vmatprep.subr.mxu0 0.0
    %1669 = vmatpush2.msra.mxu0 0.0
    %1670 = vmatprep.subr.mxu0 0.0
    %1671 = vmatpush2.msra.mxu0 0.0
    %1672 = vmatprep.subr.mxu0 0.0
    %1673 = vmatpush2.msra.mxu0 0.0
    %1674 = vmatprep.subr.mxu0 0.0
    %1675 = vmatpush2.msra.mxu0 0.0
    %1676 = vmatprep.subr.mxu0 0.0
    %1677 = vmatpush2.msra.mxu0 0.0
    %1678 = vmatprep.subr.mxu0 0.0
    %1679 = vmatpush2.msra.mxu0 0.0
    %1680 = vmatprep.subr.mxu0 0.0
    %1681 = vmatpush2.msra.mxu0 0.0
    %1682 = vmatprep.subr.mxu0 0.0
    %1683 = vmatpush2.msra.mxu0 0.0
    %1684 = vmatprep.subr.mxu0 0.0
    %1685 = vmatpush2.msra.mxu0 0.0
    %1686 = vmatprep.subr.mxu0 0.0
    %1687 = vmatpush2.msra.mxu0 0.0
    %1688 = vmatprep.subr.mxu0 0.0
    %1689 = vmatpush2.msra.mxu0 0.0
    %1690 = vmatprep.subr.mxu0 0.0
    %1691 = vmatpush2.msra.mxu0 0.0
    %1692 = vmatprep.subr.mxu0 0.0
    %1693 = vmatpush2.msra.mxu0 0.0
    %1694 = vmatprep.mubr.f32.mxu0 0.0
    %1695 = vmatmul.mubr.f32.gmra.mxu0 %v1620
    %v1696 = vpop.f32.mrf.mxu0
    %v1697 = vadd.f32 0.0, %v1696
    %v1698 = vpop.f32.mrf.mxu0
    %v1699 = vadd.f32 0.0, %v1698
    %1700 = vdwg.mxu0
    %1701 = vmatprep.subr.mxu0 %v549
    %1702 = vmatpush1.msra.mxu0 %v548
    %1703 = vmatprep.subr.mxu0 %v545
    %1704 = vmatpush1.msra.mxu0 %v544
    %1705 = vmatprep.subr.mxu0 %v541
    %1706 = vmatpush1.msra.mxu0 %v540
    %1707 = vmatprep.subr.mxu0 %v537
    %1708 = vmatpush1.msra.mxu0 %v536
    %1709 = vmatprep.subr.mxu0 %v533
    %1710 = vmatpush1.msra.mxu0 %v532
    %1711 = vmatprep.subr.mxu0 %v529
    %1712 = vmatpush1.msra.mxu0 %v528
    %1713 = vmatprep.subr.mxu0 %v525
    %1714 = vmatpush1.msra.mxu0 %v524
    %1715 = vmatprep.subr.mxu0 %v521
    %1716 = vmatpush1.msra.mxu0 %v520
    %1717 = vmatprep.subr.mxu0 %v517
    %1718 = vmatpush1.msra.mxu0 %v516
    %1719 = vmatprep.subr.mxu0 %v513
    %1720 = vmatpush1.msra.mxu0 %v512
    %1721 = vmatprep.subr.mxu0 %v509
    %1722 = vmatpush1.msra.mxu0 %v508
    %1723 = vmatprep.subr.mxu0 %v505
    %1724 = vmatpush1.msra.mxu0 %v504
    %1725 = vmatprep.subr.mxu0 %v501
    %1726 = vmatpush1.msra.mxu0 %v500
    %1727 = vmatprep.subr.mxu0 %v497
    %1728 = vmatpush1.msra.mxu0 %v496
    %1729 = vmatprep.subr.mxu0 %v493
    %1730 = vmatpush1.msra.mxu0 %v492
    %1731 = vmatprep.subr.mxu0 %v489
    %1732 = vmatpush1.msra.mxu0 %v488
    %1733 = vmatprep.subr.mxu0 0.0
    %1734 = vmatpush2.msra.mxu0 0.0
    %1735 = vmatprep.subr.mxu0 0.0
    %1736 = vmatpush2.msra.mxu0 0.0
    %1737 = vmatprep.subr.mxu0 0.0
    %1738 = vmatpush2.msra.mxu0 0.0
    %1739 = vmatprep.subr.mxu0 0.0
    %1740 = vmatpush2.msra.mxu0 0.0
    %1741 = vmatprep.subr.mxu0 0.0
    %1742 = vmatpush2.msra.mxu0 0.0
    %1743 = vmatprep.subr.mxu0 0.0
    %1744 = vmatpush2.msra.mxu0 0.0
    %1745 = vmatprep.subr.mxu0 0.0
    %1746 = vmatpush2.msra.mxu0 0.0
    %1747 = vmatprep.subr.mxu0 0.0
    %1748 = vmatpush2.msra.mxu0 0.0
    %1749 = vmatprep.subr.mxu0 0.0
    %1750 = vmatpush2.msra.mxu0 0.0
    %1751 = vmatprep.subr.mxu0 0.0
    %1752 = vmatpush2.msra.mxu0 0.0
    %1753 = vmatprep.subr.mxu0 0.0
    %1754 = vmatpush2.msra.mxu0 0.0
    %1755 = vmatprep.subr.mxu0 0.0
    %1756 = vmatpush2.msra.mxu0 0.0
    %1757 = vmatprep.subr.mxu0 0.0
    %1758 = vmatpush2.msra.mxu0 0.0
    %1759 = vmatprep.subr.mxu0 0.0
    %1760 = vmatpush2.msra.mxu0 0.0
    %1761 = vmatprep.subr.mxu0 0.0
    %1762 = vmatpush2.msra.mxu0 0.0
    %1763 = vmatprep.subr.mxu0 0.0
    %1764 = vmatpush2.msra.mxu0 0.0
    %1765 = vmatprep.mubr.f32.mxu0 0.0
    %1766 = vmatmul.mubr.f32.gmra.mxu0 %v1620
    %v1767 = vpop.f32.mrf.mxu0
    %v1768 = vadd.f32 0.0, %v1767
    %v1769 = vpop.f32.mrf.mxu0
    %v1770 = vadd.f32 0.0, %v1769
    %1771 = vdwg.mxu0
    %v1772 = vadd.f32 %v1626, %v1697
    %v1773 = vadd.f32 %v1627, %v1699
    %v1774 = vadd.f32 %v1628, %v1768
    %v1775 = vadd.f32 %v1629, %v1770
    %v1776 = vxor.u32 %v1772, 2147483648
    %v1777 = vmul.f32 %v1776, 1.442695
    %v1778 = vpow.pop %v1777
    %v1779 = vadd.f32 %v1778, 1.0
    %v1780 = vrcp.pop %v1779
    %v1781 = vmul.f32 1.0, %v1780
    %v1782 = vxor.u32 %v1773, 2147483648
    %v1783 = vmul.f32 %v1782, 1.442695
    %v1784 = vpow.pop %v1783
    %v1785 = vadd.f32 %v1784, 1.0
    %v1786 = vrcp.pop %v1785
    %v1787 = vmul.f32 1.0, %v1786
    %v1788 = vtanh.pop %v1774
    %v1789 = vxor.u32 %v1775, 2147483648
    %v1790 = vmul.f32 %v1789, 1.442695
    %v1791 = vpow.pop %v1790
    %v1792 = vadd.f32 %v1791, 1.0
    %v1793 = vrcp.pop %v1792
    %v1794 = vmul.f32 1.0, %v1793
    %v1795 = vmul.f32 %v1787, %v1618
    %v1796 = vmul.f32 %v1781, %v1788
    %v1797 = vadd.f32 %v1795, %v1796
    %v1798 = vtanh.pop %v1797
    %v1799 = vmul.f32 %v1794, %v1798
    %s1800 = scalar_lea.vmem [#allocation2], 48
    %1801 = vst [vmem:[%s1800] sm:$0xff] %v1799
    %s1802 = smul.u32 7, 4
    %s1803 = smul.addr %s1802, 8
    %s1804 = scalar_lea.vmem [#allocation3], %s1803
    %v1805 = vld [vmem:[%s1804] sm:$0xff]
    %v1806 = vld [vmem:[%s1804 + $0x8] sm:$0xff]
    %v1807 = vld [vmem:[%s1804 + $0x10] sm:$0xff]
    %v1808 = vld [vmem:[%s1804 + $0x18] sm:$0xff]
    %1809 = vmatprep.subr.mxu0 %v547
    %1810 = vmatpush1.msra.mxu0 %v546
    %1811 = vmatprep.subr.mxu0 %v543
    %1812 = vmatpush1.msra.mxu0 %v542
    %1813 = vmatprep.subr.mxu0 %v539
    %1814 = vmatpush1.msra.mxu0 %v538
    %1815 = vmatprep.subr.mxu0 %v535
    %1816 = vmatpush1.msra.mxu0 %v534
    %1817 = vmatprep.subr.mxu0 %v531
    %1818 = vmatpush1.msra.mxu0 %v530
    %1819 = vmatprep.subr.mxu0 %v527
    %1820 = vmatpush1.msra.mxu0 %v526
    %1821 = vmatprep.subr.mxu0 %v523
    %1822 = vmatpush1.msra.mxu0 %v522
    %1823 = vmatprep.subr.mxu0 %v519
    %1824 = vmatpush1.msra.mxu0 %v518
    %1825 = vmatprep.subr.mxu0 %v515
    %1826 = vmatpush1.msra.mxu0 %v514
    %1827 = vmatprep.subr.mxu0 %v511
    %1828 = vmatpush1.msra.mxu0 %v510
    %1829 = vmatprep.subr.mxu0 %v507
    %1830 = vmatpush1.msra.mxu0 %v506
    %1831 = vmatprep.subr.mxu0 %v503
    %1832 = vmatpush1.msra.mxu0 %v502
    %1833 = vmatprep.subr.mxu0 %v499
    %1834 = vmatpush1.msra.mxu0 %v498
    %1835 = vmatprep.subr.mxu0 %v495
    %1836 = vmatpush1.msra.mxu0 %v494
    %1837 = vmatprep.subr.mxu0 %v491
    %1838 = vmatpush1.msra.mxu0 %v490
    %1839 = vmatprep.subr.mxu0 %v487
    %1840 = vmatpush1.msra.mxu0 %v486
    %1841 = vmatprep.subr.mxu0 0.0
    %1842 = vmatpush2.msra.mxu0 0.0
    %1843 = vmatprep.subr.mxu0 0.0
    %1844 = vmatpush2.msra.mxu0 0.0
    %1845 = vmatprep.subr.mxu0 0.0
    %1846 = vmatpush2.msra.mxu0 0.0
    %1847 = vmatprep.subr.mxu0 0.0
    %1848 = vmatpush2.msra.mxu0 0.0
    %1849 = vmatprep.subr.mxu0 0.0
    %1850 = vmatpush2.msra.mxu0 0.0
    %1851 = vmatprep.subr.mxu0 0.0
    %1852 = vmatpush2.msra.mxu0 0.0
    %1853 = vmatprep.subr.mxu0 0.0
    %1854 = vmatpush2.msra.mxu0 0.0
    %1855 = vmatprep.subr.mxu0 0.0
    %1856 = vmatpush2.msra.mxu0 0.0
    %1857 = vmatprep.subr.mxu0 0.0
    %1858 = vmatpush2.msra.mxu0 0.0
    %1859 = vmatprep.subr.mxu0 0.0
    %1860 = vmatpush2.msra.mxu0 0.0
    %1861 = vmatprep.subr.mxu0 0.0
    %1862 = vmatpush2.msra.mxu0 0.0
    %1863 = vmatprep.subr.mxu0 0.0
    %1864 = vmatpush2.msra.mxu0 0.0
    %1865 = vmatprep.subr.mxu0 0.0
    %1866 = vmatpush2.msra.mxu0 0.0
    %1867 = vmatprep.subr.mxu0 0.0
    %1868 = vmatpush2.msra.mxu0 0.0
    %1869 = vmatprep.subr.mxu0 0.0
    %1870 = vmatpush2.msra.mxu0 0.0
    %1871 = vmatprep.subr.mxu0 0.0
    %1872 = vmatpush2.msra.mxu0 0.0
    %1873 = vmatprep.mubr.f32.mxu0 0.0
    %1874 = vmatmul.mubr.f32.gmra.mxu0 %v1799
    %v1875 = vpop.f32.mrf.mxu0
    %v1876 = vadd.f32 0.0, %v1875
    %v1877 = vpop.f32.mrf.mxu0
    %v1878 = vadd.f32 0.0, %v1877
    %1879 = vdwg.mxu0
    %1880 = vmatprep.subr.mxu0 %v549
    %1881 = vmatpush1.msra.mxu0 %v548
    %1882 = vmatprep.subr.mxu0 %v545
    %1883 = vmatpush1.msra.mxu0 %v544
    %1884 = vmatprep.subr.mxu0 %v541
    %1885 = vmatpush1.msra.mxu0 %v540
    %1886 = vmatprep.subr.mxu0 %v537
    %1887 = vmatpush1.msra.mxu0 %v536
    %1888 = vmatprep.subr.mxu0 %v533
    %1889 = vmatpush1.msra.mxu0 %v532
    %1890 = vmatprep.subr.mxu0 %v529
    %1891 = vmatpush1.msra.mxu0 %v528
    %1892 = vmatprep.subr.mxu0 %v525
    %1893 = vmatpush1.msra.mxu0 %v524
    %1894 = vmatprep.subr.mxu0 %v521
    %1895 = vmatpush1.msra.mxu0 %v520
    %1896 = vmatprep.subr.mxu0 %v517
    %1897 = vmatpush1.msra.mxu0 %v516
    %1898 = vmatprep.subr.mxu0 %v513
    %1899 = vmatpush1.msra.mxu0 %v512
    %1900 = vmatprep.subr.mxu0 %v509
    %1901 = vmatpush1.msra.mxu0 %v508
    %1902 = vmatprep.subr.mxu0 %v505
    %1903 = vmatpush1.msra.mxu0 %v504
    %1904 = vmatprep.subr.mxu0 %v501
    %1905 = vmatpush1.msra.mxu0 %v500
    %1906 = vmatprep.subr.mxu0 %v497
    %1907 = vmatpush1.msra.mxu0 %v496
    %1908 = vmatprep.subr.mxu0 %v493
    %1909 = vmatpush1.msra.mxu0 %v492
    %1910 = vmatprep.subr.mxu0 %v489
    %1911 = vmatpush1.msra.mxu0 %v488
    %1912 = vmatprep.subr.mxu0 0.0
    %1913 = vmatpush2.msra.mxu0 0.0
    %1914 = vmatprep.subr.mxu0 0.0
    %1915 = vmatpush2.msra.mxu0 0.0
    %1916 = vmatprep.subr.mxu0 0.0
    %1917 = vmatpush2.msra.mxu0 0.0
    %1918 = vmatprep.subr.mxu0 0.0
    %1919 = vmatpush2.msra.mxu0 0.0
    %1920 = vmatprep.subr.mxu0 0.0
    %1921 = vmatpush2.msra.mxu0 0.0
    %1922 = vmatprep.subr.mxu0 0.0
    %1923 = vmatpush2.msra.mxu0 0.0
    %1924 = vmatprep.subr.mxu0 0.0
    %1925 = vmatpush2.msra.mxu0 0.0
    %1926 = vmatprep.subr.mxu0 0.0
    %1927 = vmatpush2.msra.mxu0 0.0
    %1928 = vmatprep.subr.mxu0 0.0
    %1929 = vmatpush2.msra.mxu0 0.0
    %1930 = vmatprep.subr.mxu0 0.0
    %1931 = vmatpush2.msra.mxu0 0.0
    %1932 = vmatprep.subr.mxu0 0.0
    %1933 = vmatpush2.msra.mxu0 0.0
    %1934 = vmatprep.subr.mxu0 0.0
    %1935 = vmatpush2.msra.mxu0 0.0
    %1936 = vmatprep.subr.mxu0 0.0
    %1937 = vmatpush2.msra.mxu0 0.0
    %1938 = vmatprep.subr.mxu0 0.0
    %1939 = vmatpush2.msra.mxu0 0.0
    %1940 = vmatprep.subr.mxu0 0.0
    %1941 = vmatpush2.msra.mxu0 0.0
    %1942 = vmatprep.subr.mxu0 0.0
    %1943 = vmatpush2.msra.mxu0 0.0
    %1944 = vmatprep.mubr.f32.mxu0 0.0
    %1945 = vmatmul.mubr.f32.gmra.mxu0 %v1799
    %v1946 = vpop.f32.mrf.mxu0
    %v1947 = vadd.f32 0.0, %v1946
    %v1948 = vpop.f32.mrf.mxu0
    %v1949 = vadd.f32 0.0, %v1948
    %1950 = vdwg.mxu0
    %v1951 = vadd.f32 %v1805, %v1876
    %v1952 = vadd.f32 %v1806, %v1878
    %v1953 = vadd.f32 %v1807, %v1947
    %v1954 = vadd.f32 %v1808, %v1949
    %v1955 = vxor.u32 %v1951, 2147483648
    %v1956 = vmul.f32 %v1955, 1.442695
    %v1957 = vpow.pop %v1956
    %v1958 = vadd.f32 %v1957, 1.0
    %v1959 = vrcp.pop %v1958
    %v1960 = vmul.f32 1.0, %v1959
    %v1961 = vxor.u32 %v1952, 2147483648
    %v1962 = vmul.f32 %v1961, 1.442695
    %v1963 = vpow.pop %v1962
    %v1964 = vadd.f32 %v1963, 1.0
    %v1965 = vrcp.pop %v1964
    %v1966 = vmul.f32 1.0, %v1965
    %v1967 = vtanh.pop %v1953
    %v1968 = vxor.u32 %v1954, 2147483648
    %v1969 = vmul.f32 %v1968, 1.442695
    %v1970 = vpow.pop %v1969
    %v1971 = vadd.f32 %v1970, 1.0
    %v1972 = vrcp.pop %v1971
    %v1973 = vmul.f32 1.0, %v1972
    %v1974 = vmul.f32 %v1966, %v1797
    %v1975 = vmul.f32 %v1960, %v1967
    %v1976 = vadd.f32 %v1974, %v1975
    %v1977 = vtanh.pop %v1976
    %v1978 = vmul.f32 %v1973, %v1977
    %s1979 = scalar_lea.vmem [#allocation2], 56
    %1980 = vst [vmem:[%s1979] sm:$0xff] %v1978
    %v1981 = vld [vmem:[#allocation2] sm:$0xff]
    %v1982 = vld [vmem:[#allocation2 + $0x8] sm:$0xff]
    %v1983 = vld [vmem:[#allocation2 + $0x10] sm:$0xff]
    %v1984 = vld [vmem:[#allocation2 + $0x18] sm:$0xff]
    %v1985 = vld [vmem:[#allocation2 + $0x20] sm:$0xff]
    %v1986 = vld [vmem:[#allocation2 + $0x28] sm:$0xff]
    %v1987 = vld [vmem:[#allocation2 + $0x30] sm:$0xff]
    %v1988 = vld [vmem:[#allocation2 + $0x38] sm:$0xff]
    %v1989 = vld [vmem:[#allocation10] sm:$0xff]
    %v1990 = vld [vmem:[#allocation10 + $0x8] sm:$0xff]
    %v1991 = vld [vmem:[#allocation10 + $0x10] sm:$0xff]
    %v1992 = vld [vmem:[#allocation10 + $0x18] sm:$0xff]
    %v1993 = vld [vmem:[#allocation10 + $0x20] sm:$0xff]
    %v1994 = vld [vmem:[#allocation10 + $0x28] sm:$0xff]
    %v1995 = vld [vmem:[#allocation10 + $0x30] sm:$0xff]
    %v1996 = vld [vmem:[#allocation10 + $0x38] sm:$0xff]
    %v1997 = vld [vmem:[#allocation10 + $0x40] sm:$0xff]
    %v1998 = vld [vmem:[#allocation10 + $0x48] sm:$0xff]
    %v1999 = vld [vmem:[#allocation10 + $0x50] sm:$0xff]
    %v2000 = vld [vmem:[#allocation10 + $0x58] sm:$0xff]
    %v2001 = vld [vmem:[#allocation10 + $0x60] sm:$0xff]
    %v2002 = vld [vmem:[#allocation10 + $0x68] sm:$0xff]
    %v2003 = vld [vmem:[#allocation10 + $0x70] sm:$0xff]
    %v2004 = vld [vmem:[#allocation10 + $0x78] sm:$0xff]
    %v2005 = vld [vmem:[#allocation10 + $0x80] sm:$0xff]
    %v2006 = vld [vmem:[#allocation10 + $0x88] sm:$0xff]
    %v2007 = vld [vmem:[#allocation10 + $0x90] sm:$0xff]
    %v2008 = vld [vmem:[#allocation10 + $0x98] sm:$0xff]
    %v2009 = vld [vmem:[#allocation10 + $0xa0] sm:$0xff]
    %v2010 = vld [vmem:[#allocation10 + $0xa8] sm:$0xff]
    %v2011 = vld [vmem:[#allocation10 + $0xb0] sm:$0xff]
    %v2012 = vld [vmem:[#allocation10 + $0xb8] sm:$0xff]
    %v2013 = vld [vmem:[#allocation10 + $0xc0] sm:$0xff]
    %v2014 = vld [vmem:[#allocation10 + $0xc8] sm:$0xff]
    %v2015 = vld [vmem:[#allocation10 + $0xd0] sm:$0xff]
    %v2016 = vld [vmem:[#allocation10 + $0xd8] sm:$0xff]
    %v2017 = vld [vmem:[#allocation10 + $0xe0] sm:$0xff]
    %v2018 = vld [vmem:[#allocation10 + $0xe8] sm:$0xff]
    %v2019 = vld [vmem:[#allocation10 + $0xf0] sm:$0xff]
    %v2020 = vld [vmem:[#allocation10 + $0xf8] sm:$0xff]
    %v2021 = vld [vmem:[#allocation10 + $0x100] sm:$0xff]
    %v2022 = vld [vmem:[#allocation10 + $0x108] sm:$0xff]
    %v2023 = vld [vmem:[#allocation10 + $0x110] sm:$0xff]
    %v2024 = vld [vmem:[#allocation10 + $0x118] sm:$0xff]
    %v2025 = vld [vmem:[#allocation10 + $0x120] sm:$0xff]
    %v2026 = vld [vmem:[#allocation10 + $0x128] sm:$0xff]
    %v2027 = vld [vmem:[#allocation10 + $0x130] sm:$0xff]
    %v2028 = vld [vmem:[#allocation10 + $0x138] sm:$0xff]
    %v2029 = vld [vmem:[#allocation10 + $0x140] sm:$0xff]
    %v2030 = vld [vmem:[#allocation10 + $0x148] sm:$0xff]
    %v2031 = vld [vmem:[#allocation10 + $0x150] sm:$0xff]
    %v2032 = vld [vmem:[#allocation10 + $0x158] sm:$0xff]
    %v2033 = vld [vmem:[#allocation10 + $0x160] sm:$0xff]
    %v2034 = vld [vmem:[#allocation10 + $0x168] sm:$0xff]
    %v2035 = vld [vmem:[#allocation10 + $0x170] sm:$0xff]
    %v2036 = vld [vmem:[#allocation10 + $0x178] sm:$0xff]
    %v2037 = vld [vmem:[#allocation10 + $0x180] sm:$0xff]
    %v2038 = vld [vmem:[#allocation10 + $0x188] sm:$0xff]
    %v2039 = vld [vmem:[#allocation10 + $0x190] sm:$0xff]
    %v2040 = vld [vmem:[#allocation10 + $0x198] sm:$0xff]
    %v2041 = vld [vmem:[#allocation10 + $0x1a0] sm:$0xff]
    %v2042 = vld [vmem:[#allocation10 + $0x1a8] sm:$0xff]
    %v2043 = vld [vmem:[#allocation10 + $0x1b0] sm:$0xff]
    %v2044 = vld [vmem:[#allocation10 + $0x1b8] sm:$0xff]
    %v2045 = vld [vmem:[#allocation10 + $0x1c0] sm:$0xff]
    %v2046 = vld [vmem:[#allocation10 + $0x1c8] sm:$0xff]
    %v2047 = vld [vmem:[#allocation10 + $0x1d0] sm:$0xff]
    %v2048 = vld [vmem:[#allocation10 + $0x1d8] sm:$0xff]
    %v2049 = vld [vmem:[#allocation10 + $0x1e0] sm:$0xff]
    %v2050 = vld [vmem:[#allocation10 + $0x1e8] sm:$0xff]
    %v2051 = vld [vmem:[#allocation10 + $0x1f0] sm:$0xff]
    %v2052 = vld [vmem:[#allocation10 + $0x1f8] sm:$0xff]
    %v2053 = vld [vmem:[%s6] sm:$0xf]
    %v2055 = vlaneseq
    %v2056 = vshrl.u32 %v2055, 7
    %v2057 = vsub.s32 0, %v2056
    %v2058 = vrot.slane %v2053, %v2057
    %v2059 = vlaneseq
    %v2060 = vshrl.u32 %v2059, 7
    %v2061 = vsub.s32 1, %v2060
    %v2062 = vrot.slane %v2053, %v2061
    %v2063 = vlaneseq
    %v2064 = vshrl.u32 %v2063, 7
    %v2065 = vsub.s32 2, %v2064
    %v2066 = vrot.slane %v2053, %v2065
    %v2067 = vlaneseq
    %v2068 = vshrl.u32 %v2067, 7
    %v2069 = vsub.s32 3, %v2068
    %v2070 = vrot.slane %v2053, %v2069
    %2075 = vmatprep.subr.mxu0 %v2050
    %2076 = vmatpush1.msra.mxu0 %v2049
    %2077 = vmatprep.subr.mxu0 %v2046
    %2078 = vmatpush1.msra.mxu0 %v2045
    %2079 = vmatprep.subr.mxu0 %v2042
    %2080 = vmatpush1.msra.mxu0 %v2041
    %2081 = vmatprep.subr.mxu0 %v2038
    %2082 = vmatpush1.msra.mxu0 %v2037
    %2083 = vmatprep.subr.mxu0 %v2034
    %2084 = vmatpush1.msra.mxu0 %v2033
    %2085 = vmatprep.subr.mxu0 %v2030
    %2086 = vmatpush1.msra.mxu0 %v2029
    %2087 = vmatprep.subr.mxu0 %v2026
    %2088 = vmatpush1.msra.mxu0 %v2025
    %2089 = vmatprep.subr.mxu0 %v2022
    %2090 = vmatpush1.msra.mxu0 %v2021
    %2091 = vmatprep.subr.mxu0 %v2018
    %2092 = vmatpush1.msra.mxu0 %v2017
    %2093 = vmatprep.subr.mxu0 %v2014
    %2094 = vmatpush1.msra.mxu0 %v2013
    %2095 = vmatprep.subr.mxu0 %v2010
    %2096 = vmatpush1.msra.mxu0 %v2009
    %2097 = vmatprep.subr.mxu0 %v2006
    %2098 = vmatpush1.msra.mxu0 %v2005
    %2099 = vmatprep.subr.mxu0 %v2002
    %2100 = vmatpush1.msra.mxu0 %v2001
    %2101 = vmatprep.subr.mxu0 %v1998
    %2102 = vmatpush1.msra.mxu0 %v1997
    %2103 = vmatprep.subr.mxu0 %v1994
    %2104 = vmatpush1.msra.mxu0 %v1993
    %2105 = vmatprep.subr.mxu0 %v1990
    %2106 = vmatpush1.msra.mxu0 %v1989
    %2107 = vmatprep.subr.mxu0 0.0
    %2108 = vmatpush2.msra.mxu0 0.0
    %2109 = vmatprep.subr.mxu0 0.0
    %2110 = vmatpush2.msra.mxu0 0.0
    %2111 = vmatprep.subr.mxu0 0.0
    %2112 = vmatpush2.msra.mxu0 0.0
    %2113 = vmatprep.subr.mxu0 0.0
    %2114 = vmatpush2.msra.mxu0 0.0
    %2115 = vmatprep.subr.mxu0 0.0
    %2116 = vmatpush2.msra.mxu0 0.0
    %2117 = vmatprep.subr.mxu0 0.0
    %2118 = vmatpush2.msra.mxu0 0.0
    %2119 = vmatprep.subr.mxu0 0.0
    %2120 = vmatpush2.msra.mxu0 0.0
    %2121 = vmatprep.subr.mxu0 0.0
    %2122 = vmatpush2.msra.mxu0 0.0
    %2123 = vmatprep.subr.mxu0 0.0
    %2124 = vmatpush2.msra.mxu0 0.0
    %2125 = vmatprep.subr.mxu0 0.0
    %2126 = vmatpush2.msra.mxu0 0.0
    %2127 = vmatprep.subr.mxu0 0.0
    %2128 = vmatpush2.msra.mxu0 0.0
    %2129 = vmatprep.subr.mxu0 0.0
    %2130 = vmatpush2.msra.mxu0 0.0
    %2131 = vmatprep.subr.mxu0 0.0
    %2132 = vmatpush2.msra.mxu0 0.0
    %2133 = vmatprep.subr.mxu0 0.0
    %2134 = vmatpush2.msra.mxu0 0.0
    %2135 = vmatprep.subr.mxu0 0.0
    %2136 = vmatpush2.msra.mxu0 0.0
    %2137 = vmatprep.subr.mxu0 0.0
    %2138 = vmatpush2.msra.mxu0 0.0
    %2139 = vmatprep.mubr.f32.mxu0 0.0
    %2140 = vmatmul.mubr.f32.gmra.mxu0 %v1981
    %v2141 = vpop.f32.mrf.mxu0
    %v2142 = vadd.f32 %v2058, %v2141
    %v2143 = vpop.f32.mrf.mxu0
    %v2144 = vadd.f32 %v2062, %v2143
    %2145 = vmatprep.mubr.f32.mxu0 0.0
    %2146 = vmatmul.mubr.f32.gmra.mxu0 %v1982
    %v2147 = vpop.f32.mrf.mxu0
    %v2148 = vadd.f32 %v2058, %v2147
    %v2149 = vpop.f32.mrf.mxu0
    %v2150 = vadd.f32 %v2062, %v2149
    %2151 = vmatprep.mubr.f32.mxu0 0.0
    %2152 = vmatmul.mubr.f32.gmra.mxu0 %v1983
    %v2153 = vpop.f32.mrf.mxu0
    %v2154 = vadd.f32 %v2058, %v2153
    %v2155 = vpop.f32.mrf.mxu0
    %v2156 = vadd.f32 %v2062, %v2155
    %2157 = vmatprep.mubr.f32.mxu0 0.0
    %2158 = vmatmul.mubr.f32.gmra.mxu0 %v1984
    %v2159 = vpop.f32.mrf.mxu0
    %v2160 = vadd.f32 %v2058, %v2159
    %v2161 = vpop.f32.mrf.mxu0
    %v2162 = vadd.f32 %v2062, %v2161
    %2163 = vmatprep.mubr.f32.mxu0 0.0
    %2164 = vmatmul.mubr.f32.gmra.mxu0 %v1985
    %v2165 = vpop.f32.mrf.mxu0
    %v2166 = vadd.f32 %v2058, %v2165
    %v2167 = vpop.f32.mrf.mxu0
    %v2168 = vadd.f32 %v2062, %v2167
    %2169 = vmatprep.mubr.f32.mxu0 0.0
    %2170 = vmatmul.mubr.f32.gmra.mxu0 %v1986
    %v2171 = vpop.f32.mrf.mxu0
    %v2172 = vadd.f32 %v2058, %v2171
    %v2173 = vpop.f32.mrf.mxu0
    %v2174 = vadd.f32 %v2062, %v2173
    %2175 = vmatprep.mubr.f32.mxu0 0.0
    %2176 = vmatmul.mubr.f32.gmra.mxu0 %v1987
    %v2177 = vpop.f32.mrf.mxu0
    %v2178 = vadd.f32 %v2058, %v2177
    %v2179 = vpop.f32.mrf.mxu0
    %v2180 = vadd.f32 %v2062, %v2179
    %2181 = vmatprep.mubr.f32.mxu0 0.0
    %2182 = vmatmul.mubr.f32.gmra.mxu0 %v1988
    %v2183 = vpop.f32.mrf.mxu0
    %v2184 = vadd.f32 %v2058, %v2183
    %v2185 = vpop.f32.mrf.mxu0
    %v2186 = vadd.f32 %v2062, %v2185
    %2187 = vdwg.mxu0
    %2188 = vmatprep.subr.mxu0 %v2052
    %2189 = vmatpush1.msra.mxu0 %v2051
    %2190 = vmatprep.subr.mxu0 %v2048
    %2191 = vmatpush1.msra.mxu0 %v2047
    %2192 = vmatprep.subr.mxu0 %v2044
    %2193 = vmatpush1.msra.mxu0 %v2043
    %2194 = vmatprep.subr.mxu0 %v2040
    %2195 = vmatpush1.msra.mxu0 %v2039
    %2196 = vmatprep.subr.mxu0 %v2036
    %2197 = vmatpush1.msra.mxu0 %v2035
    %2198 = vmatprep.subr.mxu0 %v2032
    %2199 = vmatpush1.msra.mxu0 %v2031
    %2200 = vmatprep.subr.mxu0 %v2028
    %2201 = vmatpush1.msra.mxu0 %v2027
    %2202 = vmatprep.subr.mxu0 %v2024
    %2203 = vmatpush1.msra.mxu0 %v2023
    %2204 = vmatprep.subr.mxu0 %v2020
    %2205 = vmatpush1.msra.mxu0 %v2019
    %2206 = vmatprep.subr.mxu0 %v2016
    %2207 = vmatpush1.msra.mxu0 %v2015
    %2208 = vmatprep.subr.mxu0 %v2012
    %2209 = vmatpush1.msra.mxu0 %v2011
    %2210 = vmatprep.subr.mxu0 %v2008
    %2211 = vmatpush1.msra.mxu0 %v2007
    %2212 = vmatprep.subr.mxu0 %v2004
    %2213 = vmatpush1.msra.mxu0 %v2003
    %2214 = vmatprep.subr.mxu0 %v2000
    %2215 = vmatpush1.msra.mxu0 %v1999
    %2216 = vmatprep.subr.mxu0 %v1996
    %2217 = vmatpush1.msra.mxu0 %v1995
    %2218 = vmatprep.subr.mxu0 %v1992
    %2219 = vmatpush1.msra.mxu0 %v1991
    %2220 = vmatprep.subr.mxu0 0.0
    %2221 = vmatpush2.msra.mxu0 0.0
    %2222 = vmatprep.subr.mxu0 0.0
    %2223 = vmatpush2.msra.mxu0 0.0
    %2224 = vmatprep.subr.mxu0 0.0
    %2225 = vmatpush2.msra.mxu0 0.0
    %2226 = vmatprep.subr.mxu0 0.0
    %2227 = vmatpush2.msra.mxu0 0.0
    %2228 = vmatprep.subr.mxu0 0.0
    %2229 = vmatpush2.msra.mxu0 0.0
    %2230 = vmatprep.subr.mxu0 0.0
    %2231 = vmatpush2.msra.mxu0 0.0
    %2232 = vmatprep.subr.mxu0 0.0
    %2233 = vmatpush2.msra.mxu0 0.0
    %2234 = vmatprep.subr.mxu0 0.0
    %2235 = vmatpush2.msra.mxu0 0.0
    %2236 = vmatprep.subr.mxu0 0.0
    %2237 = vmatpush2.msra.mxu0 0.0
    %2238 = vmatprep.subr.mxu0 0.0
    %2239 = vmatpush2.msra.mxu0 0.0
    %2240 = vmatprep.subr.mxu0 0.0
    %2241 = vmatpush2.msra.mxu0 0.0
    %2242 = vmatprep.subr.mxu0 0.0
    %2243 = vmatpush2.msra.mxu0 0.0
    %2244 = vmatprep.subr.mxu0 0.0
    %2245 = vmatpush2.msra.mxu0 0.0
    %2246 = vmatprep.subr.mxu0 0.0
    %2247 = vmatpush2.msra.mxu0 0.0
    %2248 = vmatprep.subr.mxu0 0.0
    %2249 = vmatpush2.msra.mxu0 0.0
    %2250 = vmatprep.subr.mxu0 0.0
    %2251 = vmatpush2.msra.mxu0 0.0
    %2252 = vmatprep.mubr.f32.mxu0 0.0
    %2253 = vmatmul.mubr.f32.gmra.mxu0 %v1981
    %v2254 = vpop.f32.mrf.mxu0
    %v2255 = vadd.f32 %v2066, %v2254
    %v2256 = vpop.f32.mrf.mxu0
    %v2257 = vadd.f32 %v2070, %v2256
    %2258 = vmatprep.mubr.f32.mxu0 0.0
    %2259 = vmatmul.mubr.f32.gmra.mxu0 %v1982
    %v2260 = vpop.f32.mrf.mxu0
    %v2261 = vadd.f32 %v2066, %v2260
    %v2262 = vpop.f32.mrf.mxu0
    %v2263 = vadd.f32 %v2070, %v2262
    %2264 = vmatprep.mubr.f32.mxu0 0.0
    %2265 = vmatmul.mubr.f32.gmra.mxu0 %v1983
    %v2266 = vpop.f32.mrf.mxu0
    %v2267 = vadd.f32 %v2066, %v2266
    %v2268 = vpop.f32.mrf.mxu0
    %v2269 = vadd.f32 %v2070, %v2268
    %2270 = vmatprep.mubr.f32.mxu0 0.0
    %2271 = vmatmul.mubr.f32.gmra.mxu0 %v1984
    %v2272 = vpop.f32.mrf.mxu0
    %v2273 = vadd.f32 %v2066, %v2272
    %v2274 = vpop.f32.mrf.mxu0
    %v2275 = vadd.f32 %v2070, %v2274
    %2276 = vmatprep.mubr.f32.mxu0 0.0
    %2277 = vmatmul.mubr.f32.gmra.mxu0 %v1985
    %v2278 = vpop.f32.mrf.mxu0
    %v2279 = vadd.f32 %v2066, %v2278
    %v2280 = vpop.f32.mrf.mxu0
    %v2281 = vadd.f32 %v2070, %v2280
    %2282 = vmatprep.mubr.f32.mxu0 0.0
    %2283 = vmatmul.mubr.f32.gmra.mxu0 %v1986
    %v2284 = vpop.f32.mrf.mxu0
    %v2285 = vadd.f32 %v2066, %v2284
    %v2286 = vpop.f32.mrf.mxu0
    %v2287 = vadd.f32 %v2070, %v2286
    %2288 = vmatprep.mubr.f32.mxu0 0.0
    %2289 = vmatmul.mubr.f32.gmra.mxu0 %v1987
    %v2290 = vpop.f32.mrf.mxu0
    %v2291 = vadd.f32 %v2066, %v2290
    %v2292 = vpop.f32.mrf.mxu0
    %v2293 = vadd.f32 %v2070, %v2292
    %2294 = vmatprep.mubr.f32.mxu0 0.0
    %2295 = vmatmul.mubr.f32.gmra.mxu0 %v1988
    %v2296 = vpop.f32.mrf.mxu0
    %v2297 = vadd.f32 %v2066, %v2296
    %v2298 = vpop.f32.mrf.mxu0
    %v2299 = vadd.f32 %v2070, %v2298
    %2300 = vdwg.mxu0
    %2301 = vst [vmem:[#allocation3] sm:$0xff] %v2142
    %2302 = vst [vmem:[#allocation3 + $0x8] sm:$0xff] %v2144
    %2303 = vst [vmem:[#allocation3 + $0x10] sm:$0xff] %v2255
    %2304 = vst [vmem:[#allocation3 + $0x18] sm:$0xff] %v2257
    %2305 = vst [vmem:[#allocation3 + $0x20] sm:$0xff] %v2148
    %2306 = vst [vmem:[#allocation3 + $0x28] sm:$0xff] %v2150
    %2307 = vst [vmem:[#allocation3 + $0x30] sm:$0xff] %v2261
    %2308 = vst [vmem:[#allocation3 + $0x38] sm:$0xff] %v2263
    %2309 = vst [vmem:[#allocation3 + $0x40] sm:$0xff] %v2154
    %2310 = vst [vmem:[#allocation3 + $0x48] sm:$0xff] %v2156
    %2311 = vst [vmem:[#allocation3 + $0x50] sm:$0xff] %v2267
    %2312 = vst [vmem:[#allocation3 + $0x58] sm:$0xff] %v2269
    %2313 = vst [vmem:[#allocation3 + $0x60] sm:$0xff] %v2160
    %2314 = vst [vmem:[#allocation3 + $0x68] sm:$0xff] %v2162
    %2315 = vst [vmem:[#allocation3 + $0x70] sm:$0xff] %v2273
    %2316 = vst [vmem:[#allocation3 + $0x78] sm:$0xff] %v2275
    %2317 = vst [vmem:[#allocation3 + $0x80] sm:$0xff] %v2166
    %2318 = vst [vmem:[#allocation3 + $0x88] sm:$0xff] %v2168
    %2319 = vst [vmem:[#allocation3 + $0x90] sm:$0xff] %v2279
    %2320 = vst [vmem:[#allocation3 + $0x98] sm:$0xff] %v2281
    %2321 = vst [vmem:[#allocation3 + $0xa0] sm:$0xff] %v2172
    %2322 = vst [vmem:[#allocation3 + $0xa8] sm:$0xff] %v2174
    %2323 = vst [vmem:[#allocation3 + $0xb0] sm:$0xff] %v2285
    %2324 = vst [vmem:[#allocation3 + $0xb8] sm:$0xff] %v2287
    %2325 = vst [vmem:[#allocation3 + $0xc0] sm:$0xff] %v2178
    %2326 = vst [vmem:[#allocation3 + $0xc8] sm:$0xff] %v2180
    %2327 = vst [vmem:[#allocation3 + $0xd0] sm:$0xff] %v2291
    %2328 = vst [vmem:[#allocation3 + $0xd8] sm:$0xff] %v2293
    %2329 = vst [vmem:[#allocation3 + $0xe0] sm:$0xff] %v2184
    %2330 = vst [vmem:[#allocation3 + $0xe8] sm:$0xff] %v2186
    %2331 = vst [vmem:[#allocation3 + $0xf0] sm:$0xff] %v2297
    %2332 = vst [vmem:[#allocation3 + $0xf8] sm:$0xff] %v2299
    %v2333 = vld [vmem:[#allocation12] sm:$0xff]
    %v2334 = vld [vmem:[#allocation12 + $0x8] sm:$0xff]
    %v2335 = vld [vmem:[#allocation12 + $0x10] sm:$0xff]
    %v2336 = vld [vmem:[#allocation12 + $0x18] sm:$0xff]
    %v2337 = vld [vmem:[#allocation12 + $0x20] sm:$0xff]
    %v2338 = vld [vmem:[#allocation12 + $0x28] sm:$0xff]
    %v2339 = vld [vmem:[#allocation12 + $0x30] sm:$0xff]
    %v2340 = vld [vmem:[#allocation12 + $0x38] sm:$0xff]
    %v2341 = vld [vmem:[#allocation12 + $0x40] sm:$0xff]
    %v2342 = vld [vmem:[#allocation12 + $0x48] sm:$0xff]
    %v2343 = vld [vmem:[#allocation12 + $0x50] sm:$0xff]
    %v2344 = vld [vmem:[#allocation12 + $0x58] sm:$0xff]
    %v2345 = vld [vmem:[#allocation12 + $0x60] sm:$0xff]
    %v2346 = vld [vmem:[#allocation12 + $0x68] sm:$0xff]
    %v2347 = vld [vmem:[#allocation12 + $0x70] sm:$0xff]
    %v2348 = vld [vmem:[#allocation12 + $0x78] sm:$0xff]
    %v2349 = vld [vmem:[#allocation12 + $0x80] sm:$0xff]
    %v2350 = vld [vmem:[#allocation12 + $0x88] sm:$0xff]
    %v2351 = vld [vmem:[#allocation12 + $0x90] sm:$0xff]
    %v2352 = vld [vmem:[#allocation12 + $0x98] sm:$0xff]
    %v2353 = vld [vmem:[#allocation12 + $0xa0] sm:$0xff]
    %v2354 = vld [vmem:[#allocation12 + $0xa8] sm:$0xff]
    %v2355 = vld [vmem:[#allocation12 + $0xb0] sm:$0xff]
    %v2356 = vld [vmem:[#allocation12 + $0xb8] sm:$0xff]
    %v2357 = vld [vmem:[#allocation12 + $0xc0] sm:$0xff]
    %v2358 = vld [vmem:[#allocation12 + $0xc8] sm:$0xff]
    %v2359 = vld [vmem:[#allocation12 + $0xd0] sm:$0xff]
    %v2360 = vld [vmem:[#allocation12 + $0xd8] sm:$0xff]
    %v2361 = vld [vmem:[#allocation12 + $0xe0] sm:$0xff]
    %v2362 = vld [vmem:[#allocation12 + $0xe8] sm:$0xff]
    %v2363 = vld [vmem:[#allocation12 + $0xf0] sm:$0xff]
    %v2364 = vld [vmem:[#allocation12 + $0xf8] sm:$0xff]
    %v2365 = vld [vmem:[#allocation12 + $0x100] sm:$0xff]
    %v2366 = vld [vmem:[#allocation12 + $0x108] sm:$0xff]
    %v2367 = vld [vmem:[#allocation12 + $0x110] sm:$0xff]
    %v2368 = vld [vmem:[#allocation12 + $0x118] sm:$0xff]
    %v2369 = vld [vmem:[#allocation12 + $0x120] sm:$0xff]
    %v2370 = vld [vmem:[#allocation12 + $0x128] sm:$0xff]
    %v2371 = vld [vmem:[#allocation12 + $0x130] sm:$0xff]
    %v2372 = vld [vmem:[#allocation12 + $0x138] sm:$0xff]
    %v2373 = vld [vmem:[#allocation12 + $0x140] sm:$0xff]
    %v2374 = vld [vmem:[#allocation12 + $0x148] sm:$0xff]
    %v2375 = vld [vmem:[#allocation12 + $0x150] sm:$0xff]
    %v2376 = vld [vmem:[#allocation12 + $0x158] sm:$0xff]
    %v2377 = vld [vmem:[#allocation12 + $0x160] sm:$0xff]
    %v2378 = vld [vmem:[#allocation12 + $0x168] sm:$0xff]
    %v2379 = vld [vmem:[#allocation12 + $0x170] sm:$0xff]
    %v2380 = vld [vmem:[#allocation12 + $0x178] sm:$0xff]
    %v2381 = vld [vmem:[#allocation12 + $0x180] sm:$0xff]
    %v2382 = vld [vmem:[#allocation12 + $0x188] sm:$0xff]
    %v2383 = vld [vmem:[#allocation12 + $0x190] sm:$0xff]
    %v2384 = vld [vmem:[#allocation12 + $0x198] sm:$0xff]
    %v2385 = vld [vmem:[#allocation12 + $0x1a0] sm:$0xff]
    %v2386 = vld [vmem:[#allocation12 + $0x1a8] sm:$0xff]
    %v2387 = vld [vmem:[#allocation12 + $0x1b0] sm:$0xff]
    %v2388 = vld [vmem:[#allocation12 + $0x1b8] sm:$0xff]
    %v2389 = vld [vmem:[#allocation12 + $0x1c0] sm:$0xff]
    %v2390 = vld [vmem:[#allocation12 + $0x1c8] sm:$0xff]
    %v2391 = vld [vmem:[#allocation12 + $0x1d0] sm:$0xff]
    %v2392 = vld [vmem:[#allocation12 + $0x1d8] sm:$0xff]
    %v2393 = vld [vmem:[#allocation12 + $0x1e0] sm:$0xff]
    %v2394 = vld [vmem:[#allocation12 + $0x1e8] sm:$0xff]
    %v2395 = vld [vmem:[#allocation12 + $0x1f0] sm:$0xff]
    %v2396 = vld [vmem:[#allocation12 + $0x1f8] sm:$0xff]
    %v2397 = vld [vmem:[%s552] sm:$0xff]
    %v2398 = vld [vmem:[%s552 + $0x8] sm:$0xff]
    %v2399 = vld [vmem:[%s552 + $0x10] sm:$0xff]
    %v2400 = vld [vmem:[%s552 + $0x18] sm:$0xff]
    %2401 = vmatprep.subr.mxu0 %v2394
    %2402 = vmatpush1.msra.mxu0 %v2393
    %2403 = vmatprep.subr.mxu0 %v2390
    %2404 = vmatpush1.msra.mxu0 %v2389
    %2405 = vmatprep.subr.mxu0 %v2386
    %2406 = vmatpush1.msra.mxu0 %v2385
    %2407 = vmatprep.subr.mxu0 %v2382
    %2408 = vmatpush1.msra.mxu0 %v2381
    %2409 = vmatprep.subr.mxu0 %v2378
    %2410 = vmatpush1.msra.mxu0 %v2377
    %2411 = vmatprep.subr.mxu0 %v2374
    %2412 = vmatpush1.msra.mxu0 %v2373
    %2413 = vmatprep.subr.mxu0 %v2370
    %2414 = vmatpush1.msra.mxu0 %v2369
    %2415 = vmatprep.subr.mxu0 %v2366
    %2416 = vmatpush1.msra.mxu0 %v2365
    %2417 = vmatprep.subr.mxu0 %v2362
    %2418 = vmatpush1.msra.mxu0 %v2361
    %2419 = vmatprep.subr.mxu0 %v2358
    %2420 = vmatpush1.msra.mxu0 %v2357
    %2421 = vmatprep.subr.mxu0 %v2354
    %2422 = vmatpush1.msra.mxu0 %v2353
    %2423 = vmatprep.subr.mxu0 %v2350
    %2424 = vmatpush1.msra.mxu0 %v2349
    %2425 = vmatprep.subr.mxu0 %v2346
    %2426 = vmatpush1.msra.mxu0 %v2345
    %2427 = vmatprep.subr.mxu0 %v2342
    %2428 = vmatpush1.msra.mxu0 %v2341
    %2429 = vmatprep.subr.mxu0 %v2338
    %2430 = vmatpush1.msra.mxu0 %v2337
    %2431 = vmatprep.subr.mxu0 %v2334
    %2432 = vmatpush1.msra.mxu0 %v2333
    %2433 = vmatprep.subr.mxu0 0.0
    %2434 = vmatpush2.msra.mxu0 0.0
    %2435 = vmatprep.subr.mxu0 0.0
    %2436 = vmatpush2.msra.mxu0 0.0
    %2437 = vmatprep.subr.mxu0 0.0
    %2438 = vmatpush2.msra.mxu0 0.0
    %2439 = vmatprep.subr.mxu0 0.0
    %2440 = vmatpush2.msra.mxu0 0.0
    %2441 = vmatprep.subr.mxu0 0.0
    %2442 = vmatpush2.msra.mxu0 0.0
    %2443 = vmatprep.subr.mxu0 0.0
    %2444 = vmatpush2.msra.mxu0 0.0
    %2445 = vmatprep.subr.mxu0 0.0
    %2446 = vmatpush2.msra.mxu0 0.0
    %2447 = vmatprep.subr.mxu0 0.0
    %2448 = vmatpush2.msra.mxu0 0.0
    %2449 = vmatprep.subr.mxu0 0.0
    %2450 = vmatpush2.msra.mxu0 0.0
    %2451 = vmatprep.subr.mxu0 0.0
    %2452 = vmatpush2.msra.mxu0 0.0
    %2453 = vmatprep.subr.mxu0 0.0
    %2454 = vmatpush2.msra.mxu0 0.0
    %2455 = vmatprep.subr.mxu0 0.0
    %2456 = vmatpush2.msra.mxu0 0.0
    %2457 = vmatprep.subr.mxu0 0.0
    %2458 = vmatpush2.msra.mxu0 0.0
    %2459 = vmatprep.subr.mxu0 0.0
    %2460 = vmatpush2.msra.mxu0 0.0
    %2461 = vmatprep.subr.mxu0 0.0
    %2462 = vmatpush2.msra.mxu0 0.0
    %2463 = vmatprep.subr.mxu0 0.0
    %2464 = vmatpush2.msra.mxu0 0.0
    %2465 = vmatprep.mubr.f32.mxu0 0.0
    %2466 = vmatmul.mubr.f32.gmra.mxu0 0.0
    %v2467 = vpop.f32.mrf.mxu0
    %v2468 = vadd.f32 0.0, %v2467
    %v2469 = vpop.f32.mrf.mxu0
    %v2470 = vadd.f32 0.0, %v2469
    %2471 = vdwg.mxu0
    %2472 = vmatprep.subr.mxu0 %v2396
    %2473 = vmatpush1.msra.mxu0 %v2395
    %2474 = vmatprep.subr.mxu0 %v2392
    %2475 = vmatpush1.msra.mxu0 %v2391
    %2476 = vmatprep.subr.mxu0 %v2388
    %2477 = vmatpush1.msra.mxu0 %v2387
    %2478 = vmatprep.subr.mxu0 %v2384
    %2479 = vmatpush1.msra.mxu0 %v2383
    %2480 = vmatprep.subr.mxu0 %v2380
    %2481 = vmatpush1.msra.mxu0 %v2379
    %2482 = vmatprep.subr.mxu0 %v2376
    %2483 = vmatpush1.msra.mxu0 %v2375
    %2484 = vmatprep.subr.mxu0 %v2372
    %2485 = vmatpush1.msra.mxu0 %v2371
    %2486 = vmatprep.subr.mxu0 %v2368
    %2487 = vmatpush1.msra.mxu0 %v2367
    %2488 = vmatprep.subr.mxu0 %v2364
    %2489 = vmatpush1.msra.mxu0 %v2363
    %2490 = vmatprep.subr.mxu0 %v2360
    %2491 = vmatpush1.msra.mxu0 %v2359
    %2492 = vmatprep.subr.mxu0 %v2356
    %2493 = vmatpush1.msra.mxu0 %v2355
    %2494 = vmatprep.subr.mxu0 %v2352
    %2495 = vmatpush1.msra.mxu0 %v2351
    %2496 = vmatprep.subr.mxu0 %v2348
    %2497 = vmatpush1.msra.mxu0 %v2347
    %2498 = vmatprep.subr.mxu0 %v2344
    %2499 = vmatpush1.msra.mxu0 %v2343
    %2500 = vmatprep.subr.mxu0 %v2340
    %2501 = vmatpush1.msra.mxu0 %v2339
    %2502 = vmatprep.subr.mxu0 %v2336
    %2503 = vmatpush1.msra.mxu0 %v2335
    %2504 = vmatprep.subr.mxu0 0.0
    %2505 = vmatpush2.msra.mxu0 0.0
    %2506 = vmatprep.subr.mxu0 0.0
    %2507 = vmatpush2.msra.mxu0 0.0
    %2508 = vmatprep.subr.mxu0 0.0
    %2509 = vmatpush2.msra.mxu0 0.0
    %2510 = vmatprep.subr.mxu0 0.0
    %2511 = vmatpush2.msra.mxu0 0.0
    %2512 = vmatprep.subr.mxu0 0.0
    %2513 = vmatpush2.msra.mxu0 0.0
    %2514 = vmatprep.subr.mxu0 0.0
    %2515 = vmatpush2.msra.mxu0 0.0
    %2516 = vmatprep.subr.mxu0 0.0
    %2517 = vmatpush2.msra.mxu0 0.0
    %2518 = vmatprep.subr.mxu0 0.0
    %2519 = vmatpush2.msra.mxu0 0.0
    %2520 = vmatprep.subr.mxu0 0.0
    %2521 = vmatpush2.msra.mxu0 0.0
    %2522 = vmatprep.subr.mxu0 0.0
    %2523 = vmatpush2.msra.mxu0 0.0
    %2524 = vmatprep.subr.mxu0 0.0
    %2525 = vmatpush2.msra.mxu0 0.0
    %2526 = vmatprep.subr.mxu0 0.0
    %2527 = vmatpush2.msra.mxu0 0.0
    %2528 = vmatprep.subr.mxu0 0.0
    %2529 = vmatpush2.msra.mxu0 0.0
    %2530 = vmatprep.subr.mxu0 0.0
    %2531 = vmatpush2.msra.mxu0 0.0
    %2532 = vmatprep.subr.mxu0 0.0
    %2533 = vmatpush2.msra.mxu0 0.0
    %2534 = vmatprep.subr.mxu0 0.0
    %2535 = vmatpush2.msra.mxu0 0.0
    %2536 = vmatprep.mubr.f32.mxu0 0.0
    %2537 = vmatmul.mubr.f32.gmra.mxu0 0.0
    %v2538 = vpop.f32.mrf.mxu0
    %v2539 = vadd.f32 0.0, %v2538
    %v2540 = vpop.f32.mrf.mxu0
    %v2541 = vadd.f32 0.0, %v2540
    %2542 = vdwg.mxu0
    %v2543 = vadd.f32 %v2397, %v2468
    %v2544 = vadd.f32 %v2398, %v2470
    %v2545 = vadd.f32 %v2399, %v2539
    %v2546 = vadd.f32 %v2400, %v2541
    %v2547 = vxor.u32 %v2543, 2147483648
    %v2548 = vmul.f32 %v2547, 1.442695
    %v2549 = vpow.pop %v2548
    %v2550 = vadd.f32 %v2549, 1.0
    %v2551 = vrcp.pop %v2550
    %v2552 = vmul.f32 1.0, %v2551
    %v2553 = vxor.u32 %v2544, 2147483648
    %v2554 = vmul.f32 %v2553, 1.442695
    %v2555 = vpow.pop %v2554
    %v2556 = vadd.f32 %v2555, 1.0
    %v2557 = vrcp.pop %v2556
    %v2558 = vmul.f32 1.0, %v2557
    %v2559 = vtanh.pop %v2545
    %v2560 = vxor.u32 %v2546, 2147483648
    %v2561 = vmul.f32 %v2560, 1.442695
    %v2562 = vpow.pop %v2561
    %v2563 = vadd.f32 %v2562, 1.0
    %v2564 = vrcp.pop %v2563
    %v2565 = vmul.f32 1.0, %v2564
    %v2566 = vmul.f32 %v2558, 0.0
    %v2567 = vmul.f32 %v2552, %v2559
    %v2568 = vadd.f32 %v2566, %v2567
    %v2569 = vtanh.pop %v2568
    %v2570 = vmul.f32 %v2565, %v2569
    %2571 = vst [vmem:[#allocation2] sm:$0xff] %v2570
    %v2572 = vld [vmem:[%s730] sm:$0xff]
    %v2573 = vld [vmem:[%s730 + $0x8] sm:$0xff]
    %v2574 = vld [vmem:[%s730 + $0x10] sm:$0xff]
    %v2575 = vld [vmem:[%s730 + $0x18] sm:$0xff]
    %2576 = vmatprep.subr.mxu0 %v2394
    %2577 = vmatpush1.msra.mxu0 %v2393
    %2578 = vmatprep.subr.mxu0 %v2390
    %2579 = vmatpush1.msra.mxu0 %v2389
    %2580 = vmatprep.subr.mxu0 %v2386
    %2581 = vmatpush1.msra.mxu0 %v2385
    %2582 = vmatprep.subr.mxu0 %v2382
    %2583 = vmatpush1.msra.mxu0 %v2381
    %2584 = vmatprep.subr.mxu0 %v2378
    %2585 = vmatpush1.msra.mxu0 %v2377
    %2586 = vmatprep.subr.mxu0 %v2374
    %2587 = vmatpush1.msra.mxu0 %v2373
    %2588 = vmatprep.subr.mxu0 %v2370
    %2589 = vmatpush1.msra.mxu0 %v2369
    %2590 = vmatprep.subr.mxu0 %v2366
    %2591 = vmatpush1.msra.mxu0 %v2365
    %2592 = vmatprep.subr.mxu0 %v2362
    %2593 = vmatpush1.msra.mxu0 %v2361
    %2594 = vmatprep.subr.mxu0 %v2358
    %2595 = vmatpush1.msra.mxu0 %v2357
    %2596 = vmatprep.subr.mxu0 %v2354
    %2597 = vmatpush1.msra.mxu0 %v2353
    %2598 = vmatprep.subr.mxu0 %v2350
    %2599 = vmatpush1.msra.mxu0 %v2349
    %2600 = vmatprep.subr.mxu0 %v2346
    %2601 = vmatpush1.msra.mxu0 %v2345
    %2602 = vmatprep.subr.mxu0 %v2342
    %2603 = vmatpush1.msra.mxu0 %v2341
    %2604 = vmatprep.subr.mxu0 %v2338
    %2605 = vmatpush1.msra.mxu0 %v2337
    %2606 = vmatprep.subr.mxu0 %v2334
    %2607 = vmatpush1.msra.mxu0 %v2333
    %2608 = vmatprep.subr.mxu0 0.0
    %2609 = vmatpush2.msra.mxu0 0.0
    %2610 = vmatprep.subr.mxu0 0.0
    %2611 = vmatpush2.msra.mxu0 0.0
    %2612 = vmatprep.subr.mxu0 0.0
    %2613 = vmatpush2.msra.mxu0 0.0
    %2614 = vmatprep.subr.mxu0 0.0
    %2615 = vmatpush2.msra.mxu0 0.0
    %2616 = vmatprep.subr.mxu0 0.0
    %2617 = vmatpush2.msra.mxu0 0.0
    %2618 = vmatprep.subr.mxu0 0.0
    %2619 = vmatpush2.msra.mxu0 0.0
    %2620 = vmatprep.subr.mxu0 0.0
    %2621 = vmatpush2.msra.mxu0 0.0
    %2622 = vmatprep.subr.mxu0 0.0
    %2623 = vmatpush2.msra.mxu0 0.0
    %2624 = vmatprep.subr.mxu0 0.0
    %2625 = vmatpush2.msra.mxu0 0.0
    %2626 = vmatprep.subr.mxu0 0.0
    %2627 = vmatpush2.msra.mxu0 0.0
    %2628 = vmatprep.subr.mxu0 0.0
    %2629 = vmatpush2.msra.mxu0 0.0
    %2630 = vmatprep.subr.mxu0 0.0
    %2631 = vmatpush2.msra.mxu0 0.0
    %2632 = vmatprep.subr.mxu0 0.0
    %2633 = vmatpush2.msra.mxu0 0.0
    %2634 = vmatprep.subr.mxu0 0.0
    %2635 = vmatpush2.msra.mxu0 0.0
    %2636 = vmatprep.subr.mxu0 0.0
    %2637 = vmatpush2.msra.mxu0 0.0
    %2638 = vmatprep.subr.mxu0 0.0
    %2639 = vmatpush2.msra.mxu0 0.0
    %2640 = vmatprep.mubr.f32.mxu0 0.0
    %2641 = vmatmul.mubr.f32.gmra.mxu0 %v2570
    %v2642 = vpop.f32.mrf.mxu0
    %v2643 = vadd.f32 0.0, %v2642
    %v2644 = vpop.f32.mrf.mxu0
    %v2645 = vadd.f32 0.0, %v2644
    %2646 = vdwg.mxu0
    %2647 = vmatprep.subr.mxu0 %v2396
    %2648 = vmatpush1.msra.mxu0 %v2395
    %2649 = vmatprep.subr.mxu0 %v2392
    %2650 = vmatpush1.msra.mxu0 %v2391
    %2651 = vmatprep.subr.mxu0 %v2388
    %2652 = vmatpush1.msra.mxu0 %v2387
    %2653 = vmatprep.subr.mxu0 %v2384
    %2654 = vmatpush1.msra.mxu0 %v2383
    %2655 = vmatprep.subr.mxu0 %v2380
    %2656 = vmatpush1.msra.mxu0 %v2379
    %2657 = vmatprep.subr.mxu0 %v2376
    %2658 = vmatpush1.msra.mxu0 %v2375
    %2659 = vmatprep.subr.mxu0 %v2372
    %2660 = vmatpush1.msra.mxu0 %v2371
    %2661 = vmatprep.subr.mxu0 %v2368
    %2662 = vmatpush1.msra.mxu0 %v2367
    %2663 = vmatprep.subr.mxu0 %v2364
    %2664 = vmatpush1.msra.mxu0 %v2363
    %2665 = vmatprep.subr.mxu0 %v2360
    %2666 = vmatpush1.msra.mxu0 %v2359
    %2667 = vmatprep.subr.mxu0 %v2356
    %2668 = vmatpush1.msra.mxu0 %v2355
    %2669 = vmatprep.subr.mxu0 %v2352
    %2670 = vmatpush1.msra.mxu0 %v2351
    %2671 = vmatprep.subr.mxu0 %v2348
    %2672 = vmatpush1.msra.mxu0 %v2347
    %2673 = vmatprep.subr.mxu0 %v2344
    %2674 = vmatpush1.msra.mxu0 %v2343
    %2675 = vmatprep.subr.mxu0 %v2340
    %2676 = vmatpush1.msra.mxu0 %v2339
    %2677 = vmatprep.subr.mxu0 %v2336
    %2678 = vmatpush1.msra.mxu0 %v2335
    %2679 = vmatprep.subr.mxu0 0.0
    %2680 = vmatpush2.msra.mxu0 0.0
    %2681 = vmatprep.subr.mxu0 0.0
    %2682 = vmatpush2.msra.mxu0 0.0
    %2683 = vmatprep.subr.mxu0 0.0
    %2684 = vmatpush2.msra.mxu0 0.0
    %2685 = vmatprep.subr.mxu0 0.0
    %2686 = vmatpush2.msra.mxu0 0.0
    %2687 = vmatprep.subr.mxu0 0.0
    %2688 = vmatpush2.msra.mxu0 0.0
    %2689 = vmatprep.subr.mxu0 0.0
    %2690 = vmatpush2.msra.mxu0 0.0
    %2691 = vmatprep.subr.mxu0 0.0
    %2692 = vmatpush2.msra.mxu0 0.0
    %2693 = vmatprep.subr.mxu0 0.0
    %2694 = vmatpush2.msra.mxu0 0.0
    %2695 = vmatprep.subr.mxu0 0.0
    %2696 = vmatpush2.msra.mxu0 0.0
    %2697 = vmatprep.subr.mxu0 0.0
    %2698 = vmatpush2.msra.mxu0 0.0
    %2699 = vmatprep.subr.mxu0 0.0
    %2700 = vmatpush2.msra.mxu0 0.0
    %2701 = vmatprep.subr.mxu0 0.0
    %2702 = vmatpush2.msra.mxu0 0.0
    %2703 = vmatprep.subr.mxu0 0.0
    %2704 = vmatpush2.msra.mxu0 0.0
    %2705 = vmatprep.subr.mxu0 0.0
    %2706 = vmatpush2.msra.mxu0 0.0
    %2707 = vmatprep.subr.mxu0 0.0
    %2708 = vmatpush2.msra.mxu0 0.0
    %2709 = vmatprep.subr.mxu0 0.0
    %2710 = vmatpush2.msra.mxu0 0.0
    %2711 = vmatprep.mubr.f32.mxu0 0.0
    %2712 = vmatmul.mubr.f32.gmra.mxu0 %v2570
    %v2713 = vpop.f32.mrf.mxu0
    %v2714 = vadd.f32 0.0, %v2713
    %v2715 = vpop.f32.mrf.mxu0
    %v2716 = vadd.f32 0.0, %v2715
    %2717 = vdwg.mxu0
    %v2718 = vadd.f32 %v2572, %v2643
    %v2719 = vadd.f32 %v2573, %v2645
    %v2720 = vadd.f32 %v2574, %v2714
    %v2721 = vadd.f32 %v2575, %v2716
    %v2722 = vxor.u32 %v2718, 2147483648
    %v2723 = vmul.f32 %v2722, 1.442695
    %v2724 = vpow.pop %v2723
    %v2725 = vadd.f32 %v2724, 1.0
    %v2726 = vrcp.pop %v2725
    %v2727 = vmul.f32 1.0, %v2726
    %v2728 = vxor.u32 %v2719, 2147483648
    %v2729 = vmul.f32 %v2728, 1.442695
    %v2730 = vpow.pop %v2729
    %v2731 = vadd.f32 %v2730, 1.0
    %v2732 = vrcp.pop %v2731
    %v2733 = vmul.f32 1.0, %v2732
    %v2734 = vtanh.pop %v2720
    %v2735 = vxor.u32 %v2721, 2147483648
    %v2736 = vmul.f32 %v2735, 1.442695
    %v2737 = vpow.pop %v2736
    %v2738 = vadd.f32 %v2737, 1.0
    %v2739 = vrcp.pop %v2738
    %v2740 = vmul.f32 1.0, %v2739
    %v2741 = vmul.f32 %v2733, %v2568
    %v2742 = vmul.f32 %v2727, %v2734
    %v2743 = vadd.f32 %v2741, %v2742
    %v2744 = vtanh.pop %v2743
    %v2745 = vmul.f32 %v2740, %v2744
    %2746 = vst [vmem:[%s905] sm:$0xff] %v2745
    %v2747 = vld [vmem:[%s909] sm:$0xff]
    %v2748 = vld [vmem:[%s909 + $0x8] sm:$0xff]
    %v2749 = vld [vmem:[%s909 + $0x10] sm:$0xff]
    %v2750 = vld [vmem:[%s909 + $0x18] sm:$0xff]
    %2751 = vmatprep.subr.mxu0 %v2394
    %2752 = vmatpush1.msra.mxu0 %v2393
    %2753 = vmatprep.subr.mxu0 %v2390
    %2754 = vmatpush1.msra.mxu0 %v2389
    %2755 = vmatprep.subr.mxu0 %v2386
    %2756 = vmatpush1.msra.mxu0 %v2385
    %2757 = vmatprep.subr.mxu0 %v2382
    %2758 = vmatpush1.msra.mxu0 %v2381
    %2759 = vmatprep.subr.mxu0 %v2378
    %2760 = vmatpush1.msra.mxu0 %v2377
    %2761 = vmatprep.subr.mxu0 %v2374
    %2762 = vmatpush1.msra.mxu0 %v2373
    %2763 = vmatprep.subr.mxu0 %v2370
    %2764 = vmatpush1.msra.mxu0 %v2369
    %2765 = vmatprep.subr.mxu0 %v2366
    %2766 = vmatpush1.msra.mxu0 %v2365
    %2767 = vmatprep.subr.mxu0 %v2362
    %2768 = vmatpush1.msra.mxu0 %v2361
    %2769 = vmatprep.subr.mxu0 %v2358
    %2770 = vmatpush1.msra.mxu0 %v2357
    %2771 = vmatprep.subr.mxu0 %v2354
    %2772 = vmatpush1.msra.mxu0 %v2353
    %2773 = vmatprep.subr.mxu0 %v2350
    %2774 = vmatpush1.msra.mxu0 %v2349
    %2775 = vmatprep.subr.mxu0 %v2346
    %2776 = vmatpush1.msra.mxu0 %v2345
    %2777 = vmatprep.subr.mxu0 %v2342
    %2778 = vmatpush1.msra.mxu0 %v2341
    %2779 = vmatprep.subr.mxu0 %v2338
    %2780 = vmatpush1.msra.mxu0 %v2337
    %2781 = vmatprep.subr.mxu0 %v2334
    %2782 = vmatpush1.msra.mxu0 %v2333
    %2783 = vmatprep.subr.mxu0 0.0
    %2784 = vmatpush2.msra.mxu0 0.0
    %2785 = vmatprep.subr.mxu0 0.0
    %2786 = vmatpush2.msra.mxu0 0.0
    %2787 = vmatprep.subr.mxu0 0.0
    %2788 = vmatpush2.msra.mxu0 0.0
    %2789 = vmatprep.subr.mxu0 0.0
    %2790 = vmatpush2.msra.mxu0 0.0
    %2791 = vmatprep.subr.mxu0 0.0
    %2792 = vmatpush2.msra.mxu0 0.0
    %2793 = vmatprep.subr.mxu0 0.0
    %2794 = vmatpush2.msra.mxu0 0.0
    %2795 = vmatprep.subr.mxu0 0.0
    %2796 = vmatpush2.msra.mxu0 0.0
    %2797 = vmatprep.subr.mxu0 0.0
    %2798 = vmatpush2.msra.mxu0 0.0
    %2799 = vmatprep.subr.mxu0 0.0
    %2800 = vmatpush2.msra.mxu0 0.0
    %2801 = vmatprep.subr.mxu0 0.0
    %2802 = vmatpush2.msra.mxu0 0.0
    %2803 = vmatprep.subr.mxu0 0.0
    %2804 = vmatpush2.msra.mxu0 0.0
    %2805 = vmatprep.subr.mxu0 0.0
    %2806 = vmatpush2.msra.mxu0 0.0
    %2807 = vmatprep.subr.mxu0 0.0
    %2808 = vmatpush2.msra.mxu0 0.0
    %2809 = vmatprep.subr.mxu0 0.0
    %2810 = vmatpush2.msra.mxu0 0.0
    %2811 = vmatprep.subr.mxu0 0.0
    %2812 = vmatpush2.msra.mxu0 0.0
    %2813 = vmatprep.subr.mxu0 0.0
    %2814 = vmatpush2.msra.mxu0 0.0
    %2815 = vmatprep.mubr.f32.mxu0 0.0
    %2816 = vmatmul.mubr.f32.gmra.mxu0 %v2745
    %v2817 = vpop.f32.mrf.mxu0
    %v2818 = vadd.f32 0.0, %v2817
    %v2819 = vpop.f32.mrf.mxu0
    %v2820 = vadd.f32 0.0, %v2819
    %2821 = vdwg.mxu0
    %2822 = vmatprep.subr.mxu0 %v2396
    %2823 = vmatpush1.msra.mxu0 %v2395
    %2824 = vmatprep.subr.mxu0 %v2392
    %2825 = vmatpush1.msra.mxu0 %v2391
    %2826 = vmatprep.subr.mxu0 %v2388
    %2827 = vmatpush1.msra.mxu0 %v2387
    %2828 = vmatprep.subr.mxu0 %v2384
    %2829 = vmatpush1.msra.mxu0 %v2383
    %2830 = vmatprep.subr.mxu0 %v2380
    %2831 = vmatpush1.msra.mxu0 %v2379
    %2832 = vmatprep.subr.mxu0 %v2376
    %2833 = vmatpush1.msra.mxu0 %v2375
    %2834 = vmatprep.subr.mxu0 %v2372
    %2835 = vmatpush1.msra.mxu0 %v2371
    %2836 = vmatprep.subr.mxu0 %v2368
    %2837 = vmatpush1.msra.mxu0 %v2367
    %2838 = vmatprep.subr.mxu0 %v2364
    %2839 = vmatpush1.msra.mxu0 %v2363
    %2840 = vmatprep.subr.mxu0 %v2360
    %2841 = vmatpush1.msra.mxu0 %v2359
    %2842 = vmatprep.subr.mxu0 %v2356
    %2843 = vmatpush1.msra.mxu0 %v2355
    %2844 = vmatprep.subr.mxu0 %v2352
    %2845 = vmatpush1.msra.mxu0 %v2351
    %2846 = vmatprep.subr.mxu0 %v2348
    %2847 = vmatpush1.msra.mxu0 %v2347
    %2848 = vmatprep.subr.mxu0 %v2344
    %2849 = vmatpush1.msra.mxu0 %v2343
    %2850 = vmatprep.subr.mxu0 %v2340
    %2851 = vmatpush1.msra.mxu0 %v2339
    %2852 = vmatprep.subr.mxu0 %v2336
    %2853 = vmatpush1.msra.mxu0 %v2335
    %2854 = vmatprep.subr.mxu0 0.0
    %2855 = vmatpush2.msra.mxu0 0.0
    %2856 = vmatprep.subr.mxu0 0.0
    %2857 = vmatpush2.msra.mxu0 0.0
    %2858 = vmatprep.subr.mxu0 0.0
    %2859 = vmatpush2.msra.mxu0 0.0
    %2860 = vmatprep.subr.mxu0 0.0
    %2861 = vmatpush2.msra.mxu0 0.0
    %2862 = vmatprep.subr.mxu0 0.0
    %2863 = vmatpush2.msra.mxu0 0.0
    %2864 = vmatprep.subr.mxu0 0.0
    %2865 = vmatpush2.msra.mxu0 0.0
    %2866 = vmatprep.subr.mxu0 0.0
    %2867 = vmatpush2.msra.mxu0 0.0
    %2868 = vmatprep.subr.mxu0 0.0
    %2869 = vmatpush2.msra.mxu0 0.0
    %2870 = vmatprep.subr.mxu0 0.0
    %2871 = vmatpush2.msra.mxu0 0.0
    %2872 = vmatprep.subr.mxu0 0.0
    %2873 = vmatpush2.msra.mxu0 0.0
    %2874 = vmatprep.subr.mxu0 0.0
    %2875 = vmatpush2.msra.mxu0 0.0
    %2876 = vmatprep.subr.mxu0 0.0
    %2877 = vmatpush2.msra.mxu0 0.0
    %2878 = vmatprep.subr.mxu0 0.0
    %2879 = vmatpush2.msra.mxu0 0.0
    %2880 = vmatprep.subr.mxu0 0.0
    %2881 = vmatpush2.msra.mxu0 0.0
    %2882 = vmatprep.subr.mxu0 0.0
    %2883 = vmatpush2.msra.mxu0 0.0
    %2884 = vmatprep.subr.mxu0 0.0
    %2885 = vmatpush2.msra.mxu0 0.0
    %2886 = vmatprep.mubr.f32.mxu0 0.0
    %2887 = vmatmul.mubr.f32.gmra.mxu0 %v2745
    %v2888 = vpop.f32.mrf.mxu0
    %v2889 = vadd.f32 0.0, %v2888
    %v2890 = vpop.f32.mrf.mxu0
    %v2891 = vadd.f32 0.0, %v2890
    %2892 = vdwg.mxu0
    %v2893 = vadd.f32 %v2747, %v2818
    %v2894 = vadd.f32 %v2748, %v2820
    %v2895 = vadd.f32 %v2749, %v2889
    %v2896 = vadd.f32 %v2750, %v2891
    %v2897 = vxor.u32 %v2893, 2147483648
    %v2898 = vmul.f32 %v2897, 1.442695
    %v2899 = vpow.pop %v2898
    %v2900 = vadd.f32 %v2899, 1.0
    %v2901 = vrcp.pop %v2900
    %v2902 = vmul.f32 1.0, %v2901
    %v2903 = vxor.u32 %v2894, 2147483648
    %v2904 = vmul.f32 %v2903, 1.442695
    %v2905 = vpow.pop %v2904
    %v2906 = vadd.f32 %v2905, 1.0
    %v2907 = vrcp.pop %v2906
    %v2908 = vmul.f32 1.0, %v2907
    %v2909 = vtanh.pop %v2895
    %v2910 = vxor.u32 %v2896, 2147483648
    %v2911 = vmul.f32 %v2910, 1.442695
    %v2912 = vpow.pop %v2911
    %v2913 = vadd.f32 %v2912, 1.0
    %v2914 = vrcp.pop %v2913
    %v2915 = vmul.f32 1.0, %v2914
    %v2916 = vmul.f32 %v2908, %v2743
    %v2917 = vmul.f32 %v2902, %v2909
    %v2918 = vadd.f32 %v2916, %v2917
    %v2919 = vtanh.pop %v2918
    %v2920 = vmul.f32 %v2915, %v2919
    %2921 = vst [vmem:[%s1084] sm:$0xff] %v2920
    %v2922 = vld [vmem:[%s1088] sm:$0xff]
    %v2923 = vld [vmem:[%s1088 + $0x8] sm:$0xff]
    %v2924 = vld [vmem:[%s1088 + $0x10] sm:$0xff]
    %v2925 = vld [vmem:[%s1088 + $0x18] sm:$0xff]
    %2926 = vmatprep.subr.mxu0 %v2394
    %2927 = vmatpush1.msra.mxu0 %v2393
    %2928 = vmatprep.subr.mxu0 %v2390
    %2929 = vmatpush1.msra.mxu0 %v2389
    %2930 = vmatprep.subr.mxu0 %v2386
    %2931 = vmatpush1.msra.mxu0 %v2385
    %2932 = vmatprep.subr.mxu0 %v2382
    %2933 = vmatpush1.msra.mxu0 %v2381
    %2934 = vmatprep.subr.mxu0 %v2378
    %2935 = vmatpush1.msra.mxu0 %v2377
    %2936 = vmatprep.subr.mxu0 %v2374
    %2937 = vmatpush1.msra.mxu0 %v2373
    %2938 = vmatprep.subr.mxu0 %v2370
    %2939 = vmatpush1.msra.mxu0 %v2369
    %2940 = vmatprep.subr.mxu0 %v2366
    %2941 = vmatpush1.msra.mxu0 %v2365
    %2942 = vmatprep.subr.mxu0 %v2362
    %2943 = vmatpush1.msra.mxu0 %v2361
    %2944 = vmatprep.subr.mxu0 %v2358
    %2945 = vmatpush1.msra.mxu0 %v2357
    %2946 = vmatprep.subr.mxu0 %v2354
    %2947 = vmatpush1.msra.mxu0 %v2353
    %2948 = vmatprep.subr.mxu0 %v2350
    %2949 = vmatpush1.msra.mxu0 %v2349
    %2950 = vmatprep.subr.mxu0 %v2346
    %2951 = vmatpush1.msra.mxu0 %v2345
    %2952 = vmatprep.subr.mxu0 %v2342
    %2953 = vmatpush1.msra.mxu0 %v2341
    %2954 = vmatprep.subr.mxu0 %v2338
    %2955 = vmatpush1.msra.mxu0 %v2337
    %2956 = vmatprep.subr.mxu0 %v2334
    %2957 = vmatpush1.msra.mxu0 %v2333
    %2958 = vmatprep.subr.mxu0 0.0
    %2959 = vmatpush2.msra.mxu0 0.0
    %2960 = vmatprep.subr.mxu0 0.0
    %2961 = vmatpush2.msra.mxu0 0.0
    %2962 = vmatprep.subr.mxu0 0.0
    %2963 = vmatpush2.msra.mxu0 0.0
    %2964 = vmatprep.subr.mxu0 0.0
    %2965 = vmatpush2.msra.mxu0 0.0
    %2966 = vmatprep.subr.mxu0 0.0
    %2967 = vmatpush2.msra.mxu0 0.0
    %2968 = vmatprep.subr.mxu0 0.0
    %2969 = vmatpush2.msra.mxu0 0.0
    %2970 = vmatprep.subr.mxu0 0.0
    %2971 = vmatpush2.msra.mxu0 0.0
    %2972 = vmatprep.subr.mxu0 0.0
    %2973 = vmatpush2.msra.mxu0 0.0
    %2974 = vmatprep.subr.mxu0 0.0
    %2975 = vmatpush2.msra.mxu0 0.0
    %2976 = vmatprep.subr.mxu0 0.0
    %2977 = vmatpush2.msra.mxu0 0.0
    %2978 = vmatprep.subr.mxu0 0.0
    %2979 = vmatpush2.msra.mxu0 0.0
    %2980 = vmatprep.subr.mxu0 0.0
    %2981 = vmatpush2.msra.mxu0 0.0
    %2982 = vmatprep.subr.mxu0 0.0
    %2983 = vmatpush2.msra.mxu0 0.0
    %2984 = vmatprep.subr.mxu0 0.0
    %2985 = vmatpush2.msra.mxu0 0.0
    %2986 = vmatprep.subr.mxu0 0.0
    %2987 = vmatpush2.msra.mxu0 0.0
    %2988 = vmatprep.subr.mxu0 0.0
    %2989 = vmatpush2.msra.mxu0 0.0
    %2990 = vmatprep.mubr.f32.mxu0 0.0
    %2991 = vmatmul.mubr.f32.gmra.mxu0 %v2920
    %v2992 = vpop.f32.mrf.mxu0
    %v2993 = vadd.f32 0.0, %v2992
    %v2994 = vpop.f32.mrf.mxu0
    %v2995 = vadd.f32 0.0, %v2994
    %2996 = vdwg.mxu0
    %2997 = vmatprep.subr.mxu0 %v2396
    %2998 = vmatpush1.msra.mxu0 %v2395
    %2999 = vmatprep.subr.mxu0 %v2392
    %3000 = vmatpush1.msra.mxu0 %v2391
    %3001 = vmatprep.subr.mxu0 %v2388
    %3002 = vmatpush1.msra.mxu0 %v2387
    %3003 = vmatprep.subr.mxu0 %v2384
    %3004 = vmatpush1.msra.mxu0 %v2383
    %3005 = vmatprep.subr.mxu0 %v2380
    %3006 = vmatpush1.msra.mxu0 %v2379
    %3007 = vmatprep.subr.mxu0 %v2376
    %3008 = vmatpush1.msra.mxu0 %v2375
    %3009 = vmatprep.subr.mxu0 %v2372
    %3010 = vmatpush1.msra.mxu0 %v2371
    %3011 = vmatprep.subr.mxu0 %v2368
    %3012 = vmatpush1.msra.mxu0 %v2367
    %3013 = vmatprep.subr.mxu0 %v2364
    %3014 = vmatpush1.msra.mxu0 %v2363
    %3015 = vmatprep.subr.mxu0 %v2360
    %3016 = vmatpush1.msra.mxu0 %v2359
    %3017 = vmatprep.subr.mxu0 %v2356
    %3018 = vmatpush1.msra.mxu0 %v2355
    %3019 = vmatprep.subr.mxu0 %v2352
    %3020 = vmatpush1.msra.mxu0 %v2351
    %3021 = vmatprep.subr.mxu0 %v2348
    %3022 = vmatpush1.msra.mxu0 %v2347
    %3023 = vmatprep.subr.mxu0 %v2344
    %3024 = vmatpush1.msra.mxu0 %v2343
    %3025 = vmatprep.subr.mxu0 %v2340
    %3026 = vmatpush1.msra.mxu0 %v2339
    %3027 = vmatprep.subr.mxu0 %v2336
    %3028 = vmatpush1.msra.mxu0 %v2335
    %3029 = vmatprep.subr.mxu0 0.0
    %3030 = vmatpush2.msra.mxu0 0.0
    %3031 = vmatprep.subr.mxu0 0.0
    %3032 = vmatpush2.msra.mxu0 0.0
    %3033 = vmatprep.subr.mxu0 0.0
    %3034 = vmatpush2.msra.mxu0 0.0
    %3035 = vmatprep.subr.mxu0 0.0
    %3036 = vmatpush2.msra.mxu0 0.0
    %3037 = vmatprep.subr.mxu0 0.0
    %3038 = vmatpush2.msra.mxu0 0.0
    %3039 = vmatprep.subr.mxu0 0.0
    %3040 = vmatpush2.msra.mxu0 0.0
    %3041 = vmatprep.subr.mxu0 0.0
    %3042 = vmatpush2.msra.mxu0 0.0
    %3043 = vmatprep.subr.mxu0 0.0
    %3044 = vmatpush2.msra.mxu0 0.0
    %3045 = vmatprep.subr.mxu0 0.0
    %3046 = vmatpush2.msra.mxu0 0.0
    %3047 = vmatprep.subr.mxu0 0.0
    %3048 = vmatpush2.msra.mxu0 0.0
    %3049 = vmatprep.subr.mxu0 0.0
    %3050 = vmatpush2.msra.mxu0 0.0
    %3051 = vmatprep.subr.mxu0 0.0
    %3052 = vmatpush2.msra.mxu0 0.0
    %3053 = vmatprep.subr.mxu0 0.0
    %3054 = vmatpush2.msra.mxu0 0.0
    %3055 = vmatprep.subr.mxu0 0.0
    %3056 = vmatpush2.msra.mxu0 0.0
    %3057 = vmatprep.subr.mxu0 0.0
    %3058 = vmatpush2.msra.mxu0 0.0
    %3059 = vmatprep.subr.mxu0 0.0
    %3060 = vmatpush2.msra.mxu0 0.0
    %3061 = vmatprep.mubr.f32.mxu0 0.0
    %3062 = vmatmul.mubr.f32.gmra.mxu0 %v2920
    %v3063 = vpop.f32.mrf.mxu0
    %v3064 = vadd.f32 0.0, %v3063
    %v3065 = vpop.f32.mrf.mxu0
    %v3066 = vadd.f32 0.0, %v3065
    %3067 = vdwg.mxu0
    %v3068 = vadd.f32 %v2922, %v2993
    %v3069 = vadd.f32 %v2923, %v2995
    %v3070 = vadd.f32 %v2924, %v3064
    %v3071 = vadd.f32 %v2925, %v3066
    %v3072 = vxor.u32 %v3068, 2147483648
    %v3073 = vmul.f32 %v3072, 1.442695
    %v3074 = vpow.pop %v3073
    %v3075 = vadd.f32 %v3074, 1.0
    %v3076 = vrcp.pop %v3075
    %v3077 = vmul.f32 1.0, %v3076
    %v3078 = vxor.u32 %v3069, 2147483648
    %v3079 = vmul.f32 %v3078, 1.442695
    %v3080 = vpow.pop %v3079
    %v3081 = vadd.f32 %v3080, 1.0
    %v3082 = vrcp.pop %v3081
    %v3083 = vmul.f32 1.0, %v3082
    %v3084 = vtanh.pop %v3070
    %v3085 = vxor.u32 %v3071, 2147483648
    %v3086 = vmul.f32 %v3085, 1.442695
    %v3087 = vpow.pop %v3086
    %v3088 = vadd.f32 %v3087, 1.0
    %v3089 = vrcp.pop %v3088
    %v3090 = vmul.f32 1.0, %v3089
    %v3091 = vmul.f32 %v3083, %v2918
    %v3092 = vmul.f32 %v3077, %v3084
    %v3093 = vadd.f32 %v3091, %v3092
    %v3094 = vtanh.pop %v3093
    %v3095 = vmul.f32 %v3090, %v3094
    %3096 = vst [vmem:[%s1263] sm:$0xff] %v3095
    %v3097 = vld [vmem:[%s1267] sm:$0xff]
    %v3098 = vld [vmem:[%s1267 + $0x8] sm:$0xff]
    %v3099 = vld [vmem:[%s1267 + $0x10] sm:$0xff]
    %v3100 = vld [vmem:[%s1267 + $0x18] sm:$0xff]
    %3101 = vmatprep.subr.mxu0 %v2394
    %3102 = vmatpush1.msra.mxu0 %v2393
    %3103 = vmatprep.subr.mxu0 %v2390
    %3104 = vmatpush1.msra.mxu0 %v2389
    %3105 = vmatprep.subr.mxu0 %v2386
    %3106 = vmatpush1.msra.mxu0 %v2385
    %3107 = vmatprep.subr.mxu0 %v2382
    %3108 = vmatpush1.msra.mxu0 %v2381
    %3109 = vmatprep.subr.mxu0 %v2378
    %3110 = vmatpush1.msra.mxu0 %v2377
    %3111 = vmatprep.subr.mxu0 %v2374
    %3112 = vmatpush1.msra.mxu0 %v2373
    %3113 = vmatprep.subr.mxu0 %v2370
    %3114 = vmatpush1.msra.mxu0 %v2369
    %3115 = vmatprep.subr.mxu0 %v2366
    %3116 = vmatpush1.msra.mxu0 %v2365
    %3117 = vmatprep.subr.mxu0 %v2362
    %3118 = vmatpush1.msra.mxu0 %v2361
    %3119 = vmatprep.subr.mxu0 %v2358
    %3120 = vmatpush1.msra.mxu0 %v2357
    %3121 = vmatprep.subr.mxu0 %v2354
    %3122 = vmatpush1.msra.mxu0 %v2353
    %3123 = vmatprep.subr.mxu0 %v2350
    %3124 = vmatpush1.msra.mxu0 %v2349
    %3125 = vmatprep.subr.mxu0 %v2346
    %3126 = vmatpush1.msra.mxu0 %v2345
    %3127 = vmatprep.subr.mxu0 %v2342
    %3128 = vmatpush1.msra.mxu0 %v2341
    %3129 = vmatprep.subr.mxu0 %v2338
    %3130 = vmatpush1.msra.mxu0 %v2337
    %3131 = vmatprep.subr.mxu0 %v2334
    %3132 = vmatpush1.msra.mxu0 %v2333
    %3133 = vmatprep.subr.mxu0 0.0
    %3134 = vmatpush2.msra.mxu0 0.0
    %3135 = vmatprep.subr.mxu0 0.0
    %3136 = vmatpush2.msra.mxu0 0.0
    %3137 = vmatprep.subr.mxu0 0.0
    %3138 = vmatpush2.msra.mxu0 0.0
    %3139 = vmatprep.subr.mxu0 0.0
    %3140 = vmatpush2.msra.mxu0 0.0
    %3141 = vmatprep.subr.mxu0 0.0
    %3142 = vmatpush2.msra.mxu0 0.0
    %3143 = vmatprep.subr.mxu0 0.0
    %3144 = vmatpush2.msra.mxu0 0.0
    %3145 = vmatprep.subr.mxu0 0.0
    %3146 = vmatpush2.msra.mxu0 0.0
    %3147 = vmatprep.subr.mxu0 0.0
    %3148 = vmatpush2.msra.mxu0 0.0
    %3149 = vmatprep.subr.mxu0 0.0
    %3150 = vmatpush2.msra.mxu0 0.0
    %3151 = vmatprep.subr.mxu0 0.0
    %3152 = vmatpush2.msra.mxu0 0.0
    %3153 = vmatprep.subr.mxu0 0.0
    %3154 = vmatpush2.msra.mxu0 0.0
    %3155 = vmatprep.subr.mxu0 0.0
    %3156 = vmatpush2.msra.mxu0 0.0
    %3157 = vmatprep.subr.mxu0 0.0
    %3158 = vmatpush2.msra.mxu0 0.0
    %3159 = vmatprep.subr.mxu0 0.0
    %3160 = vmatpush2.msra.mxu0 0.0
    %3161 = vmatprep.subr.mxu0 0.0
    %3162 = vmatpush2.msra.mxu0 0.0
    %3163 = vmatprep.subr.mxu0 0.0
    %3164 = vmatpush2.msra.mxu0 0.0
    %3165 = vmatprep.mubr.f32.mxu0 0.0
    %3166 = vmatmul.mubr.f32.gmra.mxu0 %v3095
    %v3167 = vpop.f32.mrf.mxu0
    %v3168 = vadd.f32 0.0, %v3167
    %v3169 = vpop.f32.mrf.mxu0
    %v3170 = vadd.f32 0.0, %v3169
    %3171 = vdwg.mxu0
    %3172 = vmatprep.subr.mxu0 %v2396
    %3173 = vmatpush1.msra.mxu0 %v2395
    %3174 = vmatprep.subr.mxu0 %v2392
    %3175 = vmatpush1.msra.mxu0 %v2391
    %3176 = vmatprep.subr.mxu0 %v2388
    %3177 = vmatpush1.msra.mxu0 %v2387
    %3178 = vmatprep.subr.mxu0 %v2384
    %3179 = vmatpush1.msra.mxu0 %v2383
    %3180 = vmatprep.subr.mxu0 %v2380
    %3181 = vmatpush1.msra.mxu0 %v2379
    %3182 = vmatprep.subr.mxu0 %v2376
    %3183 = vmatpush1.msra.mxu0 %v2375
    %3184 = vmatprep.subr.mxu0 %v2372
    %3185 = vmatpush1.msra.mxu0 %v2371
    %3186 = vmatprep.subr.mxu0 %v2368
    %3187 = vmatpush1.msra.mxu0 %v2367
    %3188 = vmatprep.subr.mxu0 %v2364
    %3189 = vmatpush1.msra.mxu0 %v2363
    %3190 = vmatprep.subr.mxu0 %v2360
    %3191 = vmatpush1.msra.mxu0 %v2359
    %3192 = vmatprep.subr.mxu0 %v2356
    %3193 = vmatpush1.msra.mxu0 %v2355
    %3194 = vmatprep.subr.mxu0 %v2352
    %3195 = vmatpush1.msra.mxu0 %v2351
    %3196 = vmatprep.subr.mxu0 %v2348
    %3197 = vmatpush1.msra.mxu0 %v2347
    %3198 = vmatprep.subr.mxu0 %v2344
    %3199 = vmatpush1.msra.mxu0 %v2343
    %3200 = vmatprep.subr.mxu0 %v2340
    %3201 = vmatpush1.msra.mxu0 %v2339
    %3202 = vmatprep.subr.mxu0 %v2336
    %3203 = vmatpush1.msra.mxu0 %v2335
    %3204 = vmatprep.subr.mxu0 0.0
    %3205 = vmatpush2.msra.mxu0 0.0
    %3206 = vmatprep.subr.mxu0 0.0
    %3207 = vmatpush2.msra.mxu0 0.0
    %3208 = vmatprep.subr.mxu0 0.0
    %3209 = vmatpush2.msra.mxu0 0.0
    %3210 = vmatprep.subr.mxu0 0.0
    %3211 = vmatpush2.msra.mxu0 0.0
    %3212 = vmatprep.subr.mxu0 0.0
    %3213 = vmatpush2.msra.mxu0 0.0
    %3214 = vmatprep.subr.mxu0 0.0
    %3215 = vmatpush2.msra.mxu0 0.0
    %3216 = vmatprep.subr.mxu0 0.0
    %3217 = vmatpush2.msra.mxu0 0.0
    %3218 = vmatprep.subr.mxu0 0.0
    %3219 = vmatpush2.msra.mxu0 0.0
    %3220 = vmatprep.subr.mxu0 0.0
    %3221 = vmatpush2.msra.mxu0 0.0
    %3222 = vmatprep.subr.mxu0 0.0
    %3223 = vmatpush2.msra.mxu0 0.0
    %3224 = vmatprep.subr.mxu0 0.0
    %3225 = vmatpush2.msra.mxu0 0.0
    %3226 = vmatprep.subr.mxu0 0.0
    %3227 = vmatpush2.msra.mxu0 0.0
    %3228 = vmatprep.subr.mxu0 0.0
    %3229 = vmatpush2.msra.mxu0 0.0
    %3230 = vmatprep.subr.mxu0 0.0
    %3231 = vmatpush2.msra.mxu0 0.0
    %3232 = vmatprep.subr.mxu0 0.0
    %3233 = vmatpush2.msra.mxu0 0.0
    %3234 = vmatprep.subr.mxu0 0.0
    %3235 = vmatpush2.msra.mxu0 0.0
    %3236 = vmatprep.mubr.f32.mxu0 0.0
    %3237 = vmatmul.mubr.f32.gmra.mxu0 %v3095
    %v3238 = vpop.f32.mrf.mxu0
    %v3239 = vadd.f32 0.0, %v3238
    %v3240 = vpop.f32.mrf.mxu0
    %v3241 = vadd.f32 0.0, %v3240
    %3242 = vdwg.mxu0
    %v3243 = vadd.f32 %v3097, %v3168
    %v3244 = vadd.f32 %v3098, %v3170
    %v3245 = vadd.f32 %v3099, %v3239
    %v3246 = vadd.f32 %v3100, %v3241
    %v3247 = vxor.u32 %v3243, 2147483648
    %v3248 = vmul.f32 %v3247, 1.442695
    %v3249 = vpow.pop %v3248
    %v3250 = vadd.f32 %v3249, 1.0
    %v3251 = vrcp.pop %v3250
    %v3252 = vmul.f32 1.0, %v3251
    %v3253 = vxor.u32 %v3244, 2147483648
    %v3254 = vmul.f32 %v3253, 1.442695
    %v3255 = vpow.pop %v3254
    %v3256 = vadd.f32 %v3255, 1.0
    %v3257 = vrcp.pop %v3256
    %v3258 = vmul.f32 1.0, %v3257
    %v3259 = vtanh.pop %v3245
    %v3260 = vxor.u32 %v3246, 2147483648
    %v3261 = vmul.f32 %v3260, 1.442695
    %v3262 = vpow.pop %v3261
    %v3263 = vadd.f32 %v3262, 1.0
    %v3264 = vrcp.pop %v3263
    %v3265 = vmul.f32 1.0, %v3264
    %v3266 = vmul.f32 %v3258, %v3093
    %v3267 = vmul.f32 %v3252, %v3259
    %v3268 = vadd.f32 %v3266, %v3267
    %v3269 = vtanh.pop %v3268
    %v3270 = vmul.f32 %v3265, %v3269
    %3271 = vst [vmem:[%s1442] sm:$0xff] %v3270
    %v3272 = vld [vmem:[%s1446] sm:$0xff]
    %v3273 = vld [vmem:[%s1446 + $0x8] sm:$0xff]
    %v3274 = vld [vmem:[%s1446 + $0x10] sm:$0xff]
    %v3275 = vld [vmem:[%s1446 + $0x18] sm:$0xff]
    %3276 = vmatprep.subr.mxu0 %v2394
    %3277 = vmatpush1.msra.mxu0 %v2393
    %3278 = vmatprep.subr.mxu0 %v2390
    %3279 = vmatpush1.msra.mxu0 %v2389
    %3280 = vmatprep.subr.mxu0 %v2386
    %3281 = vmatpush1.msra.mxu0 %v2385
    %3282 = vmatprep.subr.mxu0 %v2382
    %3283 = vmatpush1.msra.mxu0 %v2381
    %3284 = vmatprep.subr.mxu0 %v2378
    %3285 = vmatpush1.msra.mxu0 %v2377
    %3286 = vmatprep.subr.mxu0 %v2374
    %3287 = vmatpush1.msra.mxu0 %v2373
    %3288 = vmatprep.subr.mxu0 %v2370
    %3289 = vmatpush1.msra.mxu0 %v2369
    %3290 = vmatprep.subr.mxu0 %v2366
    %3291 = vmatpush1.msra.mxu0 %v2365
    %3292 = vmatprep.subr.mxu0 %v2362
    %3293 = vmatpush1.msra.mxu0 %v2361
    %3294 = vmatprep.subr.mxu0 %v2358
    %3295 = vmatpush1.msra.mxu0 %v2357
    %3296 = vmatprep.subr.mxu0 %v2354
    %3297 = vmatpush1.msra.mxu0 %v2353
    %3298 = vmatprep.subr.mxu0 %v2350
    %3299 = vmatpush1.msra.mxu0 %v2349
    %3300 = vmatprep.subr.mxu0 %v2346
    %3301 = vmatpush1.msra.mxu0 %v2345
    %3302 = vmatprep.subr.mxu0 %v2342
    %3303 = vmatpush1.msra.mxu0 %v2341
    %3304 = vmatprep.subr.mxu0 %v2338
    %3305 = vmatpush1.msra.mxu0 %v2337
    %3306 = vmatprep.subr.mxu0 %v2334
    %3307 = vmatpush1.msra.mxu0 %v2333
    %3308 = vmatprep.subr.mxu0 0.0
    %3309 = vmatpush2.msra.mxu0 0.0
    %3310 = vmatprep.subr.mxu0 0.0
    %3311 = vmatpush2.msra.mxu0 0.0
    %3312 = vmatprep.subr.mxu0 0.0
    %3313 = vmatpush2.msra.mxu0 0.0
    %3314 = vmatprep.subr.mxu0 0.0
    %3315 = vmatpush2.msra.mxu0 0.0
    %3316 = vmatprep.subr.mxu0 0.0
    %3317 = vmatpush2.msra.mxu0 0.0
    %3318 = vmatprep.subr.mxu0 0.0
    %3319 = vmatpush2.msra.mxu0 0.0
    %3320 = vmatprep.subr.mxu0 0.0
    %3321 = vmatpush2.msra.mxu0 0.0
    %3322 = vmatprep.subr.mxu0 0.0
    %3323 = vmatpush2.msra.mxu0 0.0
    %3324 = vmatprep.subr.mxu0 0.0
    %3325 = vmatpush2.msra.mxu0 0.0
    %3326 = vmatprep.subr.mxu0 0.0
    %3327 = vmatpush2.msra.mxu0 0.0
    %3328 = vmatprep.subr.mxu0 0.0
    %3329 = vmatpush2.msra.mxu0 0.0
    %3330 = vmatprep.subr.mxu0 0.0
    %3331 = vmatpush2.msra.mxu0 0.0
    %3332 = vmatprep.subr.mxu0 0.0
    %3333 = vmatpush2.msra.mxu0 0.0
    %3334 = vmatprep.subr.mxu0 0.0
    %3335 = vmatpush2.msra.mxu0 0.0
    %3336 = vmatprep.subr.mxu0 0.0
    %3337 = vmatpush2.msra.mxu0 0.0
    %3338 = vmatprep.subr.mxu0 0.0
    %3339 = vmatpush2.msra.mxu0 0.0
    %3340 = vmatprep.mubr.f32.mxu0 0.0
    %3341 = vmatmul.mubr.f32.gmra.mxu0 %v3270
    %v3342 = vpop.f32.mrf.mxu0
    %v3343 = vadd.f32 0.0, %v3342
    %v3344 = vpop.f32.mrf.mxu0
    %v3345 = vadd.f32 0.0, %v3344
    %3346 = vdwg.mxu0
    %3347 = vmatprep.subr.mxu0 %v2396
    %3348 = vmatpush1.msra.mxu0 %v2395
    %3349 = vmatprep.subr.mxu0 %v2392
    %3350 = vmatpush1.msra.mxu0 %v2391
    %3351 = vmatprep.subr.mxu0 %v2388
    %3352 = vmatpush1.msra.mxu0 %v2387
    %3353 = vmatprep.subr.mxu0 %v2384
    %3354 = vmatpush1.msra.mxu0 %v2383
    %3355 = vmatprep.subr.mxu0 %v2380
    %3356 = vmatpush1.msra.mxu0 %v2379
    %3357 = vmatprep.subr.mxu0 %v2376
    %3358 = vmatpush1.msra.mxu0 %v2375
    %3359 = vmatprep.subr.mxu0 %v2372
    %3360 = vmatpush1.msra.mxu0 %v2371
    %3361 = vmatprep.subr.mxu0 %v2368
    %3362 = vmatpush1.msra.mxu0 %v2367
    %3363 = vmatprep.subr.mxu0 %v2364
    %3364 = vmatpush1.msra.mxu0 %v2363
    %3365 = vmatprep.subr.mxu0 %v2360
    %3366 = vmatpush1.msra.mxu0 %v2359
    %3367 = vmatprep.subr.mxu0 %v2356
    %3368 = vmatpush1.msra.mxu0 %v2355
    %3369 = vmatprep.subr.mxu0 %v2352
    %3370 = vmatpush1.msra.mxu0 %v2351
    %3371 = vmatprep.subr.mxu0 %v2348
    %3372 = vmatpush1.msra.mxu0 %v2347
    %3373 = vmatprep.subr.mxu0 %v2344
    %3374 = vmatpush1.msra.mxu0 %v2343
    %3375 = vmatprep.subr.mxu0 %v2340
    %3376 = vmatpush1.msra.mxu0 %v2339
    %3377 = vmatprep.subr.mxu0 %v2336
    %3378 = vmatpush1.msra.mxu0 %v2335
    %3379 = vmatprep.subr.mxu0 0.0
    %3380 = vmatpush2.msra.mxu0 0.0
    %3381 = vmatprep.subr.mxu0 0.0
    %3382 = vmatpush2.msra.mxu0 0.0
    %3383 = vmatprep.subr.mxu0 0.0
    %3384 = vmatpush2.msra.mxu0 0.0
    %3385 = vmatprep.subr.mxu0 0.0
    %3386 = vmatpush2.msra.mxu0 0.0
    %3387 = vmatprep.subr.mxu0 0.0
    %3388 = vmatpush2.msra.mxu0 0.0
    %3389 = vmatprep.subr.mxu0 0.0
    %3390 = vmatpush2.msra.mxu0 0.0
    %3391 = vmatprep.subr.mxu0 0.0
    %3392 = vmatpush2.msra.mxu0 0.0
    %3393 = vmatprep.subr.mxu0 0.0
    %3394 = vmatpush2.msra.mxu0 0.0
    %3395 = vmatprep.subr.mxu0 0.0
    %3396 = vmatpush2.msra.mxu0 0.0
    %3397 = vmatprep.subr.mxu0 0.0
    %3398 = vmatpush2.msra.mxu0 0.0
    %3399 = vmatprep.subr.mxu0 0.0
    %3400 = vmatpush2.msra.mxu0 0.0
    %3401 = vmatprep.subr.mxu0 0.0
    %3402 = vmatpush2.msra.mxu0 0.0
    %3403 = vmatprep.subr.mxu0 0.0
    %3404 = vmatpush2.msra.mxu0 0.0
    %3405 = vmatprep.subr.mxu0 0.0
    %3406 = vmatpush2.msra.mxu0 0.0
    %3407 = vmatprep.subr.mxu0 0.0
    %3408 = vmatpush2.msra.mxu0 0.0
    %3409 = vmatprep.subr.mxu0 0.0
    %3410 = vmatpush2.msra.mxu0 0.0
    %3411 = vmatprep.mubr.f32.mxu0 0.0
    %3412 = vmatmul.mubr.f32.gmra.mxu0 %v3270
    %v3413 = vpop.f32.mrf.mxu0
    %v3414 = vadd.f32 0.0, %v3413
    %v3415 = vpop.f32.mrf.mxu0
    %v3416 = vadd.f32 0.0, %v3415
    %3417 = vdwg.mxu0
    %v3418 = vadd.f32 %v3272, %v3343
    %v3419 = vadd.f32 %v3273, %v3345
    %v3420 = vadd.f32 %v3274, %v3414
    %v3421 = vadd.f32 %v3275, %v3416
    %v3422 = vxor.u32 %v3418, 2147483648
    %v3423 = vmul.f32 %v3422, 1.442695
    %v3424 = vpow.pop %v3423
    %v3425 = vadd.f32 %v3424, 1.0
    %v3426 = vrcp.pop %v3425
    %v3427 = vmul.f32 1.0, %v3426
    %v3428 = vxor.u32 %v3419, 2147483648
    %v3429 = vmul.f32 %v3428, 1.442695
    %v3430 = vpow.pop %v3429
    %v3431 = vadd.f32 %v3430, 1.0
    %v3432 = vrcp.pop %v3431
    %v3433 = vmul.f32 1.0, %v3432
    %v3434 = vtanh.pop %v3420
    %v3435 = vxor.u32 %v3421, 2147483648
    %v3436 = vmul.f32 %v3435, 1.442695
    %v3437 = vpow.pop %v3436
    %v3438 = vadd.f32 %v3437, 1.0
    %v3439 = vrcp.pop %v3438
    %v3440 = vmul.f32 1.0, %v3439
    %v3441 = vmul.f32 %v3433, %v3268
    %v3442 = vmul.f32 %v3427, %v3434
    %v3443 = vadd.f32 %v3441, %v3442
    %v3444 = vtanh.pop %v3443
    %v3445 = vmul.f32 %v3440, %v3444
    %3446 = vst [vmem:[%s1621] sm:$0xff] %v3445
    %v3447 = vld [vmem:[%s1625] sm:$0xff]
    %v3448 = vld [vmem:[%s1625 + $0x8] sm:$0xff]
    %v3449 = vld [vmem:[%s1625 + $0x10] sm:$0xff]
    %v3450 = vld [vmem:[%s1625 + $0x18] sm:$0xff]
    %3451 = vmatprep.subr.mxu0 %v2394
    %3452 = vmatpush1.msra.mxu0 %v2393
    %3453 = vmatprep.subr.mxu0 %v2390
    %3454 = vmatpush1.msra.mxu0 %v2389
    %3455 = vmatprep.subr.mxu0 %v2386
    %3456 = vmatpush1.msra.mxu0 %v2385
    %3457 = vmatprep.subr.mxu0 %v2382
    %3458 = vmatpush1.msra.mxu0 %v2381
    %3459 = vmatprep.subr.mxu0 %v2378
    %3460 = vmatpush1.msra.mxu0 %v2377
    %3461 = vmatprep.subr.mxu0 %v2374
    %3462 = vmatpush1.msra.mxu0 %v2373
    %3463 = vmatprep.subr.mxu0 %v2370
    %3464 = vmatpush1.msra.mxu0 %v2369
    %3465 = vmatprep.subr.mxu0 %v2366
    %3466 = vmatpush1.msra.mxu0 %v2365
    %3467 = vmatprep.subr.mxu0 %v2362
    %3468 = vmatpush1.msra.mxu0 %v2361
    %3469 = vmatprep.subr.mxu0 %v2358
    %3470 = vmatpush1.msra.mxu0 %v2357
    %3471 = vmatprep.subr.mxu0 %v2354
    %3472 = vmatpush1.msra.mxu0 %v2353
    %3473 = vmatprep.subr.mxu0 %v2350
    %3474 = vmatpush1.msra.mxu0 %v2349
    %3475 = vmatprep.subr.mxu0 %v2346
    %3476 = vmatpush1.msra.mxu0 %v2345
    %3477 = vmatprep.subr.mxu0 %v2342
    %3478 = vmatpush1.msra.mxu0 %v2341
    %3479 = vmatprep.subr.mxu0 %v2338
    %3480 = vmatpush1.msra.mxu0 %v2337
    %3481 = vmatprep.subr.mxu0 %v2334
    %3482 = vmatpush1.msra.mxu0 %v2333
    %3483 = vmatprep.subr.mxu0 0.0
    %3484 = vmatpush2.msra.mxu0 0.0
    %3485 = vmatprep.subr.mxu0 0.0
    %3486 = vmatpush2.msra.mxu0 0.0
    %3487 = vmatprep.subr.mxu0 0.0
    %3488 = vmatpush2.msra.mxu0 0.0
    %3489 = vmatprep.subr.mxu0 0.0
    %3490 = vmatpush2.msra.mxu0 0.0
    %3491 = vmatprep.subr.mxu0 0.0
    %3492 = vmatpush2.msra.mxu0 0.0
    %3493 = vmatprep.subr.mxu0 0.0
    %3494 = vmatpush2.msra.mxu0 0.0
    %3495 = vmatprep.subr.mxu0 0.0
    %3496 = vmatpush2.msra.mxu0 0.0
    %3497 = vmatprep.subr.mxu0 0.0
    %3498 = vmatpush2.msra.mxu0 0.0
    %3499 = vmatprep.subr.mxu0 0.0
    %3500 = vmatpush2.msra.mxu0 0.0
    %3501 = vmatprep.subr.mxu0 0.0
    %3502 = vmatpush2.msra.mxu0 0.0
    %3503 = vmatprep.subr.mxu0 0.0
    %3504 = vmatpush2.msra.mxu0 0.0
    %3505 = vmatprep.subr.mxu0 0.0
    %3506 = vmatpush2.msra.mxu0 0.0
    %3507 = vmatprep.subr.mxu0 0.0
    %3508 = vmatpush2.msra.mxu0 0.0
    %3509 = vmatprep.subr.mxu0 0.0
    %3510 = vmatpush2.msra.mxu0 0.0
    %3511 = vmatprep.subr.mxu0 0.0
    %3512 = vmatpush2.msra.mxu0 0.0
    %3513 = vmatprep.subr.mxu0 0.0
    %3514 = vmatpush2.msra.mxu0 0.0
    %3515 = vmatprep.mubr.f32.mxu0 0.0
    %3516 = vmatmul.mubr.f32.gmra.mxu0 %v3445
    %v3517 = vpop.f32.mrf.mxu0
    %v3518 = vadd.f32 0.0, %v3517
    %v3519 = vpop.f32.mrf.mxu0
    %v3520 = vadd.f32 0.0, %v3519
    %3521 = vdwg.mxu0
    %3522 = vmatprep.subr.mxu0 %v2396
    %3523 = vmatpush1.msra.mxu0 %v2395
    %3524 = vmatprep.subr.mxu0 %v2392
    %3525 = vmatpush1.msra.mxu0 %v2391
    %3526 = vmatprep.subr.mxu0 %v2388
    %3527 = vmatpush1.msra.mxu0 %v2387
    %3528 = vmatprep.subr.mxu0 %v2384
    %3529 = vmatpush1.msra.mxu0 %v2383
    %3530 = vmatprep.subr.mxu0 %v2380
    %3531 = vmatpush1.msra.mxu0 %v2379
    %3532 = vmatprep.subr.mxu0 %v2376
    %3533 = vmatpush1.msra.mxu0 %v2375
    %3534 = vmatprep.subr.mxu0 %v2372
    %3535 = vmatpush1.msra.mxu0 %v2371
    %3536 = vmatprep.subr.mxu0 %v2368
    %3537 = vmatpush1.msra.mxu0 %v2367
    %3538 = vmatprep.subr.mxu0 %v2364
    %3539 = vmatpush1.msra.mxu0 %v2363
    %3540 = vmatprep.subr.mxu0 %v2360
    %3541 = vmatpush1.msra.mxu0 %v2359
    %3542 = vmatprep.subr.mxu0 %v2356
    %3543 = vmatpush1.msra.mxu0 %v2355
    %3544 = vmatprep.subr.mxu0 %v2352
    %3545 = vmatpush1.msra.mxu0 %v2351
    %3546 = vmatprep.subr.mxu0 %v2348
    %3547 = vmatpush1.msra.mxu0 %v2347
    %3548 = vmatprep.subr.mxu0 %v2344
    %3549 = vmatpush1.msra.mxu0 %v2343
    %3550 = vmatprep.subr.mxu0 %v2340
    %3551 = vmatpush1.msra.mxu0 %v2339
    %3552 = vmatprep.subr.mxu0 %v2336
    %3553 = vmatpush1.msra.mxu0 %v2335
    %3554 = vmatprep.subr.mxu0 0.0
    %3555 = vmatpush2.msra.mxu0 0.0
    %3556 = vmatprep.subr.mxu0 0.0
    %3557 = vmatpush2.msra.mxu0 0.0
    %3558 = vmatprep.subr.mxu0 0.0
    %3559 = vmatpush2.msra.mxu0 0.0
    %3560 = vmatprep.subr.mxu0 0.0
    %3561 = vmatpush2.msra.mxu0 0.0
    %3562 = vmatprep.subr.mxu0 0.0
    %3563 = vmatpush2.msra.mxu0 0.0
    %3564 = vmatprep.subr.mxu0 0.0
    %3565 = vmatpush2.msra.mxu0 0.0
    %3566 = vmatprep.subr.mxu0 0.0
    %3567 = vmatpush2.msra.mxu0 0.0
    %3568 = vmatprep.subr.mxu0 0.0
    %3569 = vmatpush2.msra.mxu0 0.0
    %3570 = vmatprep.subr.mxu0 0.0
    %3571 = vmatpush2.msra.mxu0 0.0
    %3572 = vmatprep.subr.mxu0 0.0
    %3573 = vmatpush2.msra.mxu0 0.0
    %3574 = vmatprep.subr.mxu0 0.0
    %3575 = vmatpush2.msra.mxu0 0.0
    %3576 = vmatprep.subr.mxu0 0.0
    %3577 = vmatpush2.msra.mxu0 0.0
    %3578 = vmatprep.subr.mxu0 0.0
    %3579 = vmatpush2.msra.mxu0 0.0
    %3580 = vmatprep.subr.mxu0 0.0
    %3581 = vmatpush2.msra.mxu0 0.0
    %3582 = vmatprep.subr.mxu0 0.0
    %3583 = vmatpush2.msra.mxu0 0.0
    %3584 = vmatprep.subr.mxu0 0.0
    %3585 = vmatpush2.msra.mxu0 0.0
    %3586 = vmatprep.mubr.f32.mxu0 0.0
    %3587 = vmatmul.mubr.f32.gmra.mxu0 %v3445
    %v3588 = vpop.f32.mrf.mxu0
    %v3589 = vadd.f32 0.0, %v3588
    %v3590 = vpop.f32.mrf.mxu0
    %v3591 = vadd.f32 0.0, %v3590
    %3592 = vdwg.mxu0
    %v3593 = vadd.f32 %v3447, %v3518
    %v3594 = vadd.f32 %v3448, %v3520
    %v3595 = vadd.f32 %v3449, %v3589
    %v3596 = vadd.f32 %v3450, %v3591
    %v3597 = vxor.u32 %v3593, 2147483648
    %v3598 = vmul.f32 %v3597, 1.442695
    %v3599 = vpow.pop %v3598
    %v3600 = vadd.f32 %v3599, 1.0
    %v3601 = vrcp.pop %v3600
    %v3602 = vmul.f32 1.0, %v3601
    %v3603 = vxor.u32 %v3594, 2147483648
    %v3604 = vmul.f32 %v3603, 1.442695
    %v3605 = vpow.pop %v3604
    %v3606 = vadd.f32 %v3605, 1.0
    %v3607 = vrcp.pop %v3606
    %v3608 = vmul.f32 1.0, %v3607
    %v3609 = vtanh.pop %v3595
    %v3610 = vxor.u32 %v3596, 2147483648
    %v3611 = vmul.f32 %v3610, 1.442695
    %v3612 = vpow.pop %v3611
    %v3613 = vadd.f32 %v3612, 1.0
    %v3614 = vrcp.pop %v3613
    %v3615 = vmul.f32 1.0, %v3614
    %v3616 = vmul.f32 %v3608, %v3443
    %v3617 = vmul.f32 %v3602, %v3609
    %v3618 = vadd.f32 %v3616, %v3617
    %v3619 = vtanh.pop %v3618
    %v3620 = vmul.f32 %v3615, %v3619
    %3621 = vst [vmem:[%s1800] sm:$0xff] %v3620
    %v3622 = vld [vmem:[%s1804] sm:$0xff]
    %v3623 = vld [vmem:[%s1804 + $0x8] sm:$0xff]
    %v3624 = vld [vmem:[%s1804 + $0x10] sm:$0xff]
    %v3625 = vld [vmem:[%s1804 + $0x18] sm:$0xff]
    %3626 = vmatprep.subr.mxu0 %v2394
    %3627 = vmatpush1.msra.mxu0 %v2393
    %3628 = vmatprep.subr.mxu0 %v2390
    %3629 = vmatpush1.msra.mxu0 %v2389
    %3630 = vmatprep.subr.mxu0 %v2386
    %3631 = vmatpush1.msra.mxu0 %v2385
    %3632 = vmatprep.subr.mxu0 %v2382
    %3633 = vmatpush1.msra.mxu0 %v2381
    %3634 = vmatprep.subr.mxu0 %v2378
    %3635 = vmatpush1.msra.mxu0 %v2377
    %3636 = vmatprep.subr.mxu0 %v2374
    %3637 = vmatpush1.msra.mxu0 %v2373
    %3638 = vmatprep.subr.mxu0 %v2370
    %3639 = vmatpush1.msra.mxu0 %v2369
    %3640 = vmatprep.subr.mxu0 %v2366
    %3641 = vmatpush1.msra.mxu0 %v2365
    %3642 = vmatprep.subr.mxu0 %v2362
    %3643 = vmatpush1.msra.mxu0 %v2361
    %3644 = vmatprep.subr.mxu0 %v2358
    %3645 = vmatpush1.msra.mxu0 %v2357
    %3646 = vmatprep.subr.mxu0 %v2354
    %3647 = vmatpush1.msra.mxu0 %v2353
    %3648 = vmatprep.subr.mxu0 %v2350
    %3649 = vmatpush1.msra.mxu0 %v2349
    %3650 = vmatprep.subr.mxu0 %v2346
    %3651 = vmatpush1.msra.mxu0 %v2345
    %3652 = vmatprep.subr.mxu0 %v2342
    %3653 = vmatpush1.msra.mxu0 %v2341
    %3654 = vmatprep.subr.mxu0 %v2338
    %3655 = vmatpush1.msra.mxu0 %v2337
    %3656 = vmatprep.subr.mxu0 %v2334
    %3657 = vmatpush1.msra.mxu0 %v2333
    %3658 = vmatprep.subr.mxu0 0.0
    %3659 = vmatpush2.msra.mxu0 0.0
    %3660 = vmatprep.subr.mxu0 0.0
    %3661 = vmatpush2.msra.mxu0 0.0
    %3662 = vmatprep.subr.mxu0 0.0
    %3663 = vmatpush2.msra.mxu0 0.0
    %3664 = vmatprep.subr.mxu0 0.0
    %3665 = vmatpush2.msra.mxu0 0.0
    %3666 = vmatprep.subr.mxu0 0.0
    %3667 = vmatpush2.msra.mxu0 0.0
    %3668 = vmatprep.subr.mxu0 0.0
    %3669 = vmatpush2.msra.mxu0 0.0
    %3670 = vmatprep.subr.mxu0 0.0
    %3671 = vmatpush2.msra.mxu0 0.0
    %3672 = vmatprep.subr.mxu0 0.0
    %3673 = vmatpush2.msra.mxu0 0.0
    %3674 = vmatprep.subr.mxu0 0.0
    %3675 = vmatpush2.msra.mxu0 0.0
    %3676 = vmatprep.subr.mxu0 0.0
    %3677 = vmatpush2.msra.mxu0 0.0
    %3678 = vmatprep.subr.mxu0 0.0
    %3679 = vmatpush2.msra.mxu0 0.0
    %3680 = vmatprep.subr.mxu0 0.0
    %3681 = vmatpush2.msra.mxu0 0.0
    %3682 = vmatprep.subr.mxu0 0.0
    %3683 = vmatpush2.msra.mxu0 0.0
    %3684 = vmatprep.subr.mxu0 0.0
    %3685 = vmatpush2.msra.mxu0 0.0
    %3686 = vmatprep.subr.mxu0 0.0
    %3687 = vmatpush2.msra.mxu0 0.0
    %3688 = vmatprep.subr.mxu0 0.0
    %3689 = vmatpush2.msra.mxu0 0.0
    %3690 = vmatprep.mubr.f32.mxu0 0.0
    %3691 = vmatmul.mubr.f32.gmra.mxu0 %v3620
    %v3692 = vpop.f32.mrf.mxu0
    %v3693 = vadd.f32 0.0, %v3692
    %v3694 = vpop.f32.mrf.mxu0
    %v3695 = vadd.f32 0.0, %v3694
    %3696 = vdwg.mxu0
    %3697 = vmatprep.subr.mxu0 %v2396
    %3698 = vmatpush1.msra.mxu0 %v2395
    %3699 = vmatprep.subr.mxu0 %v2392
    %3700 = vmatpush1.msra.mxu0 %v2391
    %3701 = vmatprep.subr.mxu0 %v2388
    %3702 = vmatpush1.msra.mxu0 %v2387
    %3703 = vmatprep.subr.mxu0 %v2384
    %3704 = vmatpush1.msra.mxu0 %v2383
    %3705 = vmatprep.subr.mxu0 %v2380
    %3706 = vmatpush1.msra.mxu0 %v2379
    %3707 = vmatprep.subr.mxu0 %v2376
    %3708 = vmatpush1.msra.mxu0 %v2375
    %3709 = vmatprep.subr.mxu0 %v2372
    %3710 = vmatpush1.msra.mxu0 %v2371
    %3711 = vmatprep.subr.mxu0 %v2368
    %3712 = vmatpush1.msra.mxu0 %v2367
    %3713 = vmatprep.subr.mxu0 %v2364
    %3714 = vmatpush1.msra.mxu0 %v2363
    %3715 = vmatprep.subr.mxu0 %v2360
    %3716 = vmatpush1.msra.mxu0 %v2359
    %3717 = vmatprep.subr.mxu0 %v2356
    %3718 = vmatpush1.msra.mxu0 %v2355
    %3719 = vmatprep.subr.mxu0 %v2352
    %3720 = vmatpush1.msra.mxu0 %v2351
    %3721 = vmatprep.subr.mxu0 %v2348
    %3722 = vmatpush1.msra.mxu0 %v2347
    %3723 = vmatprep.subr.mxu0 %v2344
    %3724 = vmatpush1.msra.mxu0 %v2343
    %3725 = vmatprep.subr.mxu0 %v2340
    %3726 = vmatpush1.msra.mxu0 %v2339
    %3727 = vmatprep.subr.mxu0 %v2336
    %3728 = vmatpush1.msra.mxu0 %v2335
    %3729 = vmatprep.subr.mxu0 0.0
    %3730 = vmatpush2.msra.mxu0 0.0
    %3731 = vmatprep.subr.mxu0 0.0
    %3732 = vmatpush2.msra.mxu0 0.0
    %3733 = vmatprep.subr.mxu0 0.0
    %3734 = vmatpush2.msra.mxu0 0.0
    %3735 = vmatprep.subr.mxu0 0.0
    %3736 = vmatpush2.msra.mxu0 0.0
    %3737 = vmatprep.subr.mxu0 0.0
    %3738 = vmatpush2.msra.mxu0 0.0
    %3739 = vmatprep.subr.mxu0 0.0
    %3740 = vmatpush2.msra.mxu0 0.0
    %3741 = vmatprep.subr.mxu0 0.0
    %3742 = vmatpush2.msra.mxu0 0.0
    %3743 = vmatprep.subr.mxu0 0.0
    %3744 = vmatpush2.msra.mxu0 0.0
    %3745 = vmatprep.subr.mxu0 0.0
    %3746 = vmatpush2.msra.mxu0 0.0
    %3747 = vmatprep.subr.mxu0 0.0
    %3748 = vmatpush2.msra.mxu0 0.0
    %3749 = vmatprep.subr.mxu0 0.0
    %3750 = vmatpush2.msra.mxu0 0.0
    %3751 = vmatprep.subr.mxu0 0.0
    %3752 = vmatpush2.msra.mxu0 0.0
    %3753 = vmatprep.subr.mxu0 0.0
    %3754 = vmatpush2.msra.mxu0 0.0
    %3755 = vmatprep.subr.mxu0 0.0
    %3756 = vmatpush2.msra.mxu0 0.0
    %3757 = vmatprep.subr.mxu0 0.0
    %3758 = vmatpush2.msra.mxu0 0.0
    %3759 = vmatprep.subr.mxu0 0.0
    %3760 = vmatpush2.msra.mxu0 0.0
    %3761 = vmatprep.mubr.f32.mxu0 0.0
    %3762 = vmatmul.mubr.f32.gmra.mxu0 %v3620
    %v3763 = vpop.f32.mrf.mxu0
    %v3764 = vadd.f32 0.0, %v3763
    %v3765 = vpop.f32.mrf.mxu0
    %v3766 = vadd.f32 0.0, %v3765
    %3767 = vdwg.mxu0
    %v3768 = vadd.f32 %v3622, %v3693
    %v3769 = vadd.f32 %v3623, %v3695
    %v3770 = vadd.f32 %v3624, %v3764
    %v3771 = vadd.f32 %v3625, %v3766
    %v3772 = vxor.u32 %v3768, 2147483648
    %v3773 = vmul.f32 %v3772, 1.442695
    %v3774 = vpow.pop %v3773
    %v3775 = vadd.f32 %v3774, 1.0
    %v3776 = vrcp.pop %v3775
    %v3777 = vmul.f32 1.0, %v3776
    %v3778 = vxor.u32 %v3769, 2147483648
    %v3779 = vmul.f32 %v3778, 1.442695
    %v3780 = vpow.pop %v3779
    %v3781 = vadd.f32 %v3780, 1.0
    %v3782 = vrcp.pop %v3781
    %v3783 = vmul.f32 1.0, %v3782
    %v3784 = vtanh.pop %v3770
    %v3785 = vxor.u32 %v3771, 2147483648
    %v3786 = vmul.f32 %v3785, 1.442695
    %v3787 = vpow.pop %v3786
    %v3788 = vadd.f32 %v3787, 1.0
    %v3789 = vrcp.pop %v3788
    %v3790 = vmul.f32 1.0, %v3789
    %v3791 = vmul.f32 %v3783, %v3618
    %v3792 = vmul.f32 %v3777, %v3784
    %v3793 = vadd.f32 %v3791, %v3792
    %v3794 = vtanh.pop %v3793
    %v3795 = vmul.f32 %v3790, %v3794
    %3796 = vst [vmem:[%s1979] sm:$0xff] %v3795
    %v3797 = vld [vmem:[#allocation2] sm:$0xff]
    %v3798 = vld [vmem:[#allocation2 + $0x8] sm:$0xff]
    %v3799 = vld [vmem:[#allocation2 + $0x10] sm:$0xff]
    %v3800 = vld [vmem:[#allocation2 + $0x18] sm:$0xff]
    %v3801 = vld [vmem:[#allocation2 + $0x20] sm:$0xff]
    %v3802 = vld [vmem:[#allocation2 + $0x28] sm:$0xff]
    %v3803 = vld [vmem:[#allocation2 + $0x30] sm:$0xff]
    %v3804 = vld [vmem:[#allocation2 + $0x38] sm:$0xff]
    %v3805 = vld [vmem:[#allocation13] sm:$0xff]
    %v3806 = vld [vmem:[#allocation13 + $0x8] sm:$0xff]
    %v3807 = vld [vmem:[#allocation13 + $0x10] sm:$0xff]
    %v3808 = vld [vmem:[#allocation13 + $0x18] sm:$0xff]
    %v3809 = vld [vmem:[#allocation13 + $0x20] sm:$0xff]
    %v3810 = vld [vmem:[#allocation13 + $0x28] sm:$0xff]
    %v3811 = vld [vmem:[#allocation13 + $0x30] sm:$0xff]
    %v3812 = vld [vmem:[#allocation13 + $0x38] sm:$0xff]
    %v3813 = vld [vmem:[#allocation13 + $0x40] sm:$0xff]
    %v3814 = vld [vmem:[#allocation13 + $0x48] sm:$0xff]
    %v3815 = vld [vmem:[#allocation13 + $0x50] sm:$0xff]
    %v3816 = vld [vmem:[#allocation13 + $0x58] sm:$0xff]
    %v3817 = vld [vmem:[#allocation13 + $0x60] sm:$0xff]
    %v3818 = vld [vmem:[#allocation13 + $0x68] sm:$0xff]
    %v3819 = vld [vmem:[#allocation13 + $0x70] sm:$0xff]
    %v3820 = vld [vmem:[#allocation13 + $0x78] sm:$0xff]
    %v3821 = vld [vmem:[%s8] sm:$0x1]
    %v3823 = vlaneseq
    %v3824 = vshrl.u32 %v3823, 7
    %v3825 = vsub.s32 0, %v3824
    %v3826 = vrot.slane %v3821, %v3825
    %3828 = vmatprep.subr.mxu0 0.0
    %3829 = vmatpush1.msra.mxu0 %v3820
    %3830 = vmatprep.subr.mxu0 0.0
    %3831 = vmatpush1.msra.mxu0 %v3819
    %3832 = vmatprep.subr.mxu0 0.0
    %3833 = vmatpush1.msra.mxu0 %v3818
    %3834 = vmatprep.subr.mxu0 0.0
    %3835 = vmatpush1.msra.mxu0 %v3817
    %3836 = vmatprep.subr.mxu0 0.0
    %3837 = vmatpush1.msra.mxu0 %v3816
    %3838 = vmatprep.subr.mxu0 0.0
    %3839 = vmatpush1.msra.mxu0 %v3815
    %3840 = vmatprep.subr.mxu0 0.0
    %3841 = vmatpush1.msra.mxu0 %v3814
    %3842 = vmatprep.subr.mxu0 0.0
    %3843 = vmatpush1.msra.mxu0 %v3813
    %3844 = vmatprep.subr.mxu0 0.0
    %3845 = vmatpush1.msra.mxu0 %v3812
    %3846 = vmatprep.subr.mxu0 0.0
    %3847 = vmatpush1.msra.mxu0 %v3811
    %3848 = vmatprep.subr.mxu0 0.0
    %3849 = vmatpush1.msra.mxu0 %v3810
    %3850 = vmatprep.subr.mxu0 0.0
    %3851 = vmatpush1.msra.mxu0 %v3809
    %3852 = vmatprep.subr.mxu0 0.0
    %3853 = vmatpush1.msra.mxu0 %v3808
    %3854 = vmatprep.subr.mxu0 0.0
    %3855 = vmatpush1.msra.mxu0 %v3807
    %3856 = vmatprep.subr.mxu0 0.0
    %3857 = vmatpush1.msra.mxu0 %v3806
    %3858 = vmatprep.subr.mxu0 0.0
    %3859 = vmatpush1.msra.mxu0 %v3805
    %3860 = vmatprep.subr.mxu0 0.0
    %3861 = vmatpush2.msra.mxu0 0.0
    %3862 = vmatprep.subr.mxu0 0.0
    %3863 = vmatpush2.msra.mxu0 0.0
    %3864 = vmatprep.subr.mxu0 0.0
    %3865 = vmatpush2.msra.mxu0 0.0
    %3866 = vmatprep.subr.mxu0 0.0
    %3867 = vmatpush2.msra.mxu0 0.0
    %3868 = vmatprep.subr.mxu0 0.0
    %3869 = vmatpush2.msra.mxu0 0.0
    %3870 = vmatprep.subr.mxu0 0.0
    %3871 = vmatpush2.msra.mxu0 0.0
    %3872 = vmatprep.subr.mxu0 0.0
    %3873 = vmatpush2.msra.mxu0 0.0
    %3874 = vmatprep.subr.mxu0 0.0
    %3875 = vmatpush2.msra.mxu0 0.0
    %3876 = vmatprep.subr.mxu0 0.0
    %3877 = vmatpush2.msra.mxu0 0.0
    %3878 = vmatprep.subr.mxu0 0.0
    %3879 = vmatpush2.msra.mxu0 0.0
    %3880 = vmatprep.subr.mxu0 0.0
    %3881 = vmatpush2.msra.mxu0 0.0
    %3882 = vmatprep.subr.mxu0 0.0
    %3883 = vmatpush2.msra.mxu0 0.0
    %3884 = vmatprep.subr.mxu0 0.0
    %3885 = vmatpush2.msra.mxu0 0.0
    %3886 = vmatprep.subr.mxu0 0.0
    %3887 = vmatpush2.msra.mxu0 0.0
    %3888 = vmatprep.subr.mxu0 0.0
    %3889 = vmatpush2.msra.mxu0 0.0
    %3890 = vmatprep.subr.mxu0 0.0
    %3891 = vmatpush2.msra.mxu0 0.0
    %3892 = vmatprep.mubr.f32.mxu0 0.0
    %3893 = vmatmul.mubr.f32.gmra.mxu0 %v3797
    %v3894 = vpop.f32.mrf.mxu0
    %v3895 = vadd.f32 %v3826, %v3894
    %v3896 = vpop.f32.mrf.mxu0
    %3897 = vmatprep.mubr.f32.mxu0 0.0
    %3898 = vmatmul.mubr.f32.gmra.mxu0 %v3798
    %v3899 = vpop.f32.mrf.mxu0
    %v3900 = vadd.f32 %v3826, %v3899
    %v3901 = vpop.f32.mrf.mxu0
    %3902 = vmatprep.mubr.f32.mxu0 0.0
    %3903 = vmatmul.mubr.f32.gmra.mxu0 %v3799
    %v3904 = vpop.f32.mrf.mxu0
    %v3905 = vadd.f32 %v3826, %v3904
    %v3906 = vpop.f32.mrf.mxu0
    %3907 = vmatprep.mubr.f32.mxu0 0.0
    %3908 = vmatmul.mubr.f32.gmra.mxu0 %v3800
    %v3909 = vpop.f32.mrf.mxu0
    %v3910 = vadd.f32 %v3826, %v3909
    %v3911 = vpop.f32.mrf.mxu0
    %3912 = vmatprep.mubr.f32.mxu0 0.0
    %3913 = vmatmul.mubr.f32.gmra.mxu0 %v3801
    %v3914 = vpop.f32.mrf.mxu0
    %v3915 = vadd.f32 %v3826, %v3914
    %v3916 = vpop.f32.mrf.mxu0
    %3917 = vmatprep.mubr.f32.mxu0 0.0
    %3918 = vmatmul.mubr.f32.gmra.mxu0 %v3802
    %v3919 = vpop.f32.mrf.mxu0
    %v3920 = vadd.f32 %v3826, %v3919
    %v3921 = vpop.f32.mrf.mxu0
    %3922 = vmatprep.mubr.f32.mxu0 0.0
    %3923 = vmatmul.mubr.f32.gmra.mxu0 %v3803
    %v3924 = vpop.f32.mrf.mxu0
    %v3925 = vadd.f32 %v3826, %v3924
    %v3926 = vpop.f32.mrf.mxu0
    %3927 = vmatprep.mubr.f32.mxu0 0.0
    %3928 = vmatmul.mubr.f32.gmra.mxu0 %v3804
    %v3929 = vpop.f32.mrf.mxu0
    %v3930 = vadd.f32 %v3826, %v3929
    %v3931 = vpop.f32.mrf.mxu0
    %3932 = vdwg.mxu0
    %v3933 = vtanh.pop %v3895
    %v3934 = vtanh.pop %v3900
    %v3935 = vtanh.pop %v3905
    %v3936 = vtanh.pop %v3910
    %v3937 = vtanh.pop %v3915
    %v3938 = vtanh.pop %v3920
    %v3939 = vtanh.pop %v3925
    %v3940 = vtanh.pop %v3930
    %v3941 = vld [vmem:[#allocation15] sm:$0xff]
    %v3942 = vld [vmem:[#allocation15 + $0x8] sm:$0xff]
    %v3943 = vld [vmem:[#allocation15 + $0x10] sm:$0xff]
    %v3944 = vld [vmem:[#allocation15 + $0x18] sm:$0xff]
    %v3945 = vld [vmem:[#allocation15 + $0x20] sm:$0xff]
    %v3946 = vld [vmem:[#allocation15 + $0x28] sm:$0xff]
    %v3947 = vld [vmem:[#allocation15 + $0x30] sm:$0xff]
    %v3948 = vld [vmem:[#allocation15 + $0x38] sm:$0xff]
    %v3949 = vld [vmem:[#allocation15 + $0x40] sm:$0xff]
    %v3950 = vld [vmem:[#allocation15 + $0x48] sm:$0xff]
    %v3951 = vld [vmem:[#allocation15 + $0x50] sm:$0xff]
    %v3952 = vld [vmem:[#allocation15 + $0x58] sm:$0xff]
    %v3953 = vld [vmem:[#allocation15 + $0x60] sm:$0xff]
    %v3954 = vld [vmem:[#allocation15 + $0x68] sm:$0xff]
    %v3955 = vld [vmem:[#allocation15 + $0x70] sm:$0xff]
    %v3956 = vld [vmem:[#allocation15 + $0x78] sm:$0xff]
    %v3957 = vld [vmem:[%s10] sm:$0x1]
    %v3959 = vlaneseq
    %v3960 = vshrl.u32 %v3959, 7
    %v3961 = vsub.s32 0, %v3960
    %v3962 = vrot.slane %v3957, %v3961
    %3964 = vmatprep.subr.mxu0 0.0
    %3965 = vmatpush1.msra.mxu0 %v3956
    %3966 = vmatprep.subr.mxu0 0.0
    %3967 = vmatpush1.msra.mxu0 %v3955
    %3968 = vmatprep.subr.mxu0 0.0
    %3969 = vmatpush1.msra.mxu0 %v3954
    %3970 = vmatprep.subr.mxu0 0.0
    %3971 = vmatpush1.msra.mxu0 %v3953
    %3972 = vmatprep.subr.mxu0 0.0
    %3973 = vmatpush1.msra.mxu0 %v3952
    %3974 = vmatprep.subr.mxu0 0.0
    %3975 = vmatpush1.msra.mxu0 %v3951
    %3976 = vmatprep.subr.mxu0 0.0
    %3977 = vmatpush1.msra.mxu0 %v3950
    %3978 = vmatprep.subr.mxu0 0.0
    %3979 = vmatpush1.msra.mxu0 %v3949
    %3980 = vmatprep.subr.mxu0 0.0
    %3981 = vmatpush1.msra.mxu0 %v3948
    %3982 = vmatprep.subr.mxu0 0.0
    %3983 = vmatpush1.msra.mxu0 %v3947
    %3984 = vmatprep.subr.mxu0 0.0
    %3985 = vmatpush1.msra.mxu0 %v3946
    %3986 = vmatprep.subr.mxu0 0.0
    %3987 = vmatpush1.msra.mxu0 %v3945
    %3988 = vmatprep.subr.mxu0 0.0
    %3989 = vmatpush1.msra.mxu0 %v3944
    %3990 = vmatprep.subr.mxu0 0.0
    %3991 = vmatpush1.msra.mxu0 %v3943
    %3992 = vmatprep.subr.mxu0 0.0
    %3993 = vmatpush1.msra.mxu0 %v3942
    %3994 = vmatprep.subr.mxu0 0.0
    %3995 = vmatpush1.msra.mxu0 %v3941
    %3996 = vmatprep.subr.mxu0 0.0
    %3997 = vmatpush2.msra.mxu0 0.0
    %3998 = vmatprep.subr.mxu0 0.0
    %3999 = vmatpush2.msra.mxu0 0.0
    %4000 = vmatprep.subr.mxu0 0.0
    %4001 = vmatpush2.msra.mxu0 0.0
    %4002 = vmatprep.subr.mxu0 0.0
    %4003 = vmatpush2.msra.mxu0 0.0
    %4004 = vmatprep.subr.mxu0 0.0
    %4005 = vmatpush2.msra.mxu0 0.0
    %4006 = vmatprep.subr.mxu0 0.0
    %4007 = vmatpush2.msra.mxu0 0.0
    %4008 = vmatprep.subr.mxu0 0.0
    %4009 = vmatpush2.msra.mxu0 0.0
    %4010 = vmatprep.subr.mxu0 0.0
    %4011 = vmatpush2.msra.mxu0 0.0
    %4012 = vmatprep.subr.mxu0 0.0
    %4013 = vmatpush2.msra.mxu0 0.0
    %4014 = vmatprep.subr.mxu0 0.0
    %4015 = vmatpush2.msra.mxu0 0.0
    %4016 = vmatprep.subr.mxu0 0.0
    %4017 = vmatpush2.msra.mxu0 0.0
    %4018 = vmatprep.subr.mxu0 0.0
    %4019 = vmatpush2.msra.mxu0 0.0
    %4020 = vmatprep.subr.mxu0 0.0
    %4021 = vmatpush2.msra.mxu0 0.0
    %4022 = vmatprep.subr.mxu0 0.0
    %4023 = vmatpush2.msra.mxu0 0.0
    %4024 = vmatprep.subr.mxu0 0.0
    %4025 = vmatpush2.msra.mxu0 0.0
    %4026 = vmatprep.subr.mxu0 0.0
    %4027 = vmatpush2.msra.mxu0 0.0
    %4028 = vmatprep.mubr.f32.mxu0 0.0
    %4029 = vmatmul.mubr.f32.gmra.mxu0 %v3933
    %v4030 = vpop.f32.mrf.mxu0
    %v4031 = vadd.f32 %v3962, %v4030
    %v4032 = vpop.f32.mrf.mxu0
    %4033 = vmatprep.mubr.f32.mxu0 0.0
    %4034 = vmatmul.mubr.f32.gmra.mxu0 %v3934
    %v4035 = vpop.f32.mrf.mxu0
    %v4036 = vadd.f32 %v3962, %v4035
    %v4037 = vpop.f32.mrf.mxu0
    %4038 = vmatprep.mubr.f32.mxu0 0.0
    %4039 = vmatmul.mubr.f32.gmra.mxu0 %v3935
    %v4040 = vpop.f32.mrf.mxu0
    %v4041 = vadd.f32 %v3962, %v4040
    %v4042 = vpop.f32.mrf.mxu0
    %4043 = vmatprep.mubr.f32.mxu0 0.0
    %4044 = vmatmul.mubr.f32.gmra.mxu0 %v3936
    %v4045 = vpop.f32.mrf.mxu0
    %v4046 = vadd.f32 %v3962, %v4045
    %v4047 = vpop.f32.mrf.mxu0
    %4048 = vmatprep.mubr.f32.mxu0 0.0
    %4049 = vmatmul.mubr.f32.gmra.mxu0 %v3937
    %v4050 = vpop.f32.mrf.mxu0
    %v4051 = vadd.f32 %v3962, %v4050
    %v4052 = vpop.f32.mrf.mxu0
    %4053 = vmatprep.mubr.f32.mxu0 0.0
    %4054 = vmatmul.mubr.f32.gmra.mxu0 %v3938
    %v4055 = vpop.f32.mrf.mxu0
    %v4056 = vadd.f32 %v3962, %v4055
    %v4057 = vpop.f32.mrf.mxu0
    %4058 = vmatprep.mubr.f32.mxu0 0.0
    %4059 = vmatmul.mubr.f32.gmra.mxu0 %v3939
    %v4060 = vpop.f32.mrf.mxu0
    %v4061 = vadd.f32 %v3962, %v4060
    %v4062 = vpop.f32.mrf.mxu0
    %4063 = vmatprep.mubr.f32.mxu0 0.0
    %4064 = vmatmul.mubr.f32.gmra.mxu0 %v3940
    %v4065 = vpop.f32.mrf.mxu0
    %v4066 = vadd.f32 %v3962, %v4065
    %v4067 = vpop.f32.mrf.mxu0
    %4068 = vdwg.mxu0
    %4069 = vst [vmem:[#allocation16] sm:$0xff] %v4031
    %4070 = vst [vmem:[#allocation16 + $0x8] sm:$0xff] %v4036
    %4071 = vst [vmem:[#allocation16 + $0x10] sm:$0xff] %v4041
    %4072 = vst [vmem:[#allocation16 + $0x18] sm:$0xff] %v4046
    %4073 = vst [vmem:[#allocation16 + $0x20] sm:$0xff] %v4051
    %4074 = vst [vmem:[#allocation16 + $0x28] sm:$0xff] %v4056
    %4075 = vst [vmem:[#allocation16 + $0x30] sm:$0xff] %v4061
    %4076 = vst [vmem:[#allocation16 + $0x38] sm:$0xff] %v4066
    // Predicated region
    $region74: #{tpu_custom_call.1} parent=1 // pred_check
      _
    $region75: #{tpu_custom_call.1} parent=1 // pred_check_branch
      %4078 = sbr.rel (0) target = $region77
    $region76: #{tpu_custom_call.1} parent=1 // pred_region
      %s4080 = ssub.s32 1024, 1024
      %4081 = vsyncadd [#allocation6], %s4080
      %s4082 = sshll.u32 [#allocation16], 4
      %s4083 = int_to_ptr.vmem [resolvable:$true] %s4082
      %4088 = dma.vmem_to_hbm [thread:$0]  %s4083, 1024, %s11, [#allocation6], 128, 128, 8
    $region77: #{tpu_custom_call.1} parent=1 // pred_fallthru
      _
    // Predicated region
    $region78: #{tpu_custom_call.1} parent=1 // pred_check
      _
    $region79: #{tpu_custom_call.1} parent=1 // pred_check_branch
      %4090 = sbr.rel (0) target = $region81
    $region80: #{tpu_custom_call.1} parent=1 // pred_region
      %4091 = dma.done [#allocation6], 1024
    $region81: #{tpu_custom_call.1} parent=1 // pred_fallthru
      _
    %4092 = vsyncpa [#allocation5], 1
    %4093 = vsyncpa [#allocation8], 1
    %4094 = vsyncpa [#allocation11], 1
    %4095 = vsyncpa [#allocation14], 1
    %4096 = vsyncpa [#allocation6], 1

</llo_original>
